<compile_context>
chip_gen: v7x
topology: tpu7x:2x2x1
jax: 0.10.0
libtpu: 0.0.40
codegen_flags: <defaults>
</compile_context>

<pallas_src>
import functools
import math

import jax
import jax.numpy as jnp
from jax import lax
from jax.experimental import pallas as pl
from jax.experimental.pallas import tpu as pltpu

HIDDEN = 128          # fixed by MultiHeadCrossAttentionAdaptive(hidden_size=128)
NUM_HEADS = 4
HEAD_DIM = HIDDEN // NUM_HEADS
D_FF = 256
NUM_LAYERS = 2
EPS = 1e-5            # nn.LayerNorm default


# ----------------------------------------------------------------------------
# Kernel
# ----------------------------------------------------------------------------
def _layer_norm(x, gamma, beta):
    mean = jnp.mean(x, axis=-1, keepdims=True)
    var = jnp.mean(jnp.square(x - mean), axis=-1, keepdims=True)
    return (x - mean) * lax.rsqrt(var + EPS) * gamma + beta


def mhca_kernel(x_ref, y_ref,
                wq_ref, bq_ref, wkv_ref, bkv_ref, wo_ref, bo_ref,
                ln1g_ref, ln1b_ref,
                wff1_ref, bff1_ref, wff2_ref, bff2_ref,
                ln2g_ref, ln2b_ref,
                o_ref, attn_buf, *, num_layers, num_heads):
    """One batch element of MultiHeadCrossAttentionAdaptive.forward(x, y).

    x_ref: (Sq, D) query-side stream (residual stream, updated per layer)
    y_ref: (Sk, D) key/value-side stream (constant across layers)
    attn_buf: (Sq, D) bf16 VMEM scratch collecting the per-head outputs.
    Weights are layer-stacked on the leading axis, pre-transposed to
    (in_features, out_features) on the host; 1/sqrt(head_dim) is folded into Wq/bq.
    """
    D = HIDDEN
    hd = D // num_heads

    # Residual stream in f32; MXU operands in bf16 (f32 accumulation).
    x = x_ref[...].astype(jnp.float32)          # (Sq, D)
    y_bf = y_ref[...].astype(jnp.bfloat16)      # (Sk, D), cast once

    # a @ b.T without materializing a transpose.
    dims_nt = (((1,), (1,)), ((), ()))

    for l in range(num_layers):                  # static unroll over the 2 layers
        # ---- projections (Q from x; K,V fused from y). Weight loads sink to use.
        q = jnp.dot(x.astype(jnp.bfloat16), wq_ref[l],
                    preferred_element_type=jnp.float32) + bq_ref[l]       # (Sq, D)
        kv = jnp.dot(y_bf, wkv_ref[l],
                     preferred_element_type=jnp.float32) + bkv_ref[l]     # (Sk, 2D)
        q_bf = q.astype(jnp.bfloat16)
        kv_bf = kv.astype(jnp.bfloat16)          # single cast; slice heads below

        # ---- attention: per-head softmax(QK^T)V into lane slices of attn_buf ---
        # (scale 1/sqrt(hd) already folded into Wq/bq on the host)
        for h in range(num_heads):               # static unroll over the 4 heads
            sl = slice(h * hd, (h + 1) * hd)
            s = lax.dot_general(q_bf[:, sl], kv_bf[:, sl], dims_nt,
                                preferred_element_type=jnp.float32)       # (Sq, Sk)
            s = s - jnp.max(s, axis=-1, keepdims=True)                    # stable f32
            p = jnp.exp(s)
            p = p * pl.reciprocal(jnp.sum(p, axis=-1, keepdims=True), approx=True)
            oh = jnp.dot(p.astype(jnp.bfloat16),
                         kv_bf[:, D + h * hd:D + (h + 1) * hd],
                         preferred_element_type=jnp.float32)              # (Sq, hd)
            attn_buf[:, sl] = oh.astype(jnp.bfloat16)

        # ---- single K=128 output projection (head concat done via scratch) ----
        attn = jnp.dot(attn_buf[...], wo_ref[l],
                       preferred_element_type=jnp.float32) + bo_ref[l]    # (Sq, D)

        # ---- add & norm 1 ------------------------------------------------------
        h1 = _layer_norm(x + attn, ln1g_ref[l], ln1b_ref[l])              # f32

        # ---- FFN (dropout is identity) -----------------------------------------
        f = jnp.dot(h1.astype(jnp.bfloat16), wff1_ref[l],
                    preferred_element_type=jnp.float32) + bff1_ref[l]
        f = jnp.maximum(f, 0.0)                                           # ReLU
        f = jnp.dot(f.astype(jnp.bfloat16), wff2_ref[l],
                    preferred_element_type=jnp.float32) + bff2_ref[l]

        # ---- add & norm 2 ------------------------------------------------------
        x = _layer_norm(h1 + f, ln2g_ref[l], ln2b_ref[l])

    o_ref[...] = x.astype(o_ref.dtype)


# ----------------------------------------------------------------------------
# Wrapper
# ----------------------------------------------------------------------------
def mhca_forward(x, y, params):
    """x: (B, Sq, D), y: (B, Sk, D); params: 14 layer-stacked arrays (init_params)."""
    B, Sq, D = x.shape
    Sk = y.shape[1]
    args = (x, y) + tuple(params)

    # Batch grid: x/y/out indexed by the batch id; weights constant (VMEM-resident
    # across grid steps). All weight arrays are 3-D (layer-stacked).
    x_spec = pl.BlockSpec((None, Sq, D), lambda b: (b, 0, 0))
    y_spec = pl.BlockSpec((None, Sk, D), lambda b: (b, 0, 0))
    w_specs = [pl.BlockSpec(p.shape, lambda b: (0, 0, 0)) for p in params]

    kernel = functools.partial(mhca_kernel, num_layers=NUM_LAYERS,
                               num_heads=NUM_HEADS)
    out = pl.pallas_call(
        kernel,
        out_shape=jax.ShapeDtypeStruct((B, Sq, D), x.dtype),
        grid_spec=pltpu.PrefetchScalarGridSpec(
            num_scalar_prefetch=0,
            grid=(B,),
            in_specs=[x_spec, y_spec] + w_specs,
            out_specs=pl.BlockSpec((None, Sq, D), lambda b: (b, 0, 0)),
            scratch_shapes=[pltpu.VMEM((Sq, HIDDEN), jnp.bfloat16)],
        ),
        compiler_params=pltpu.CompilerParams(dimension_semantics=("parallel",)),
    )(*args)
    return out


# ----------------------------------------------------------------------------
# Deterministic parameter init (synthetic, shapes from the PyTorch __init__),
# with host-side pre-transposition / stacking / scale folding into kernel layout.
# ----------------------------------------------------------------------------
def init_params(key):
    wq_l, bq_l, wkv_l, bkv_l, wo_l, bo_l = [], [], [], [], [], []
    ln1g_l, ln1b_l, ln2g_l, ln2b_l = [], [], [], []
    wff1_l, bff1_l, wff2_l, bff2_l = [], [], [], []
    scale = 1.0 / math.sqrt(HEAD_DIM)   # folded into Wq / bq

    for k in jax.random.split(key, NUM_LAYERS):
        ks = jax.random.split(k, 8)
        n = lambda kk, shape: 0.05 * jax.random.normal(kk, shape, jnp.float32)

        # PyTorch-native layouts:
        in_proj_w = n(ks[0], (3 * HIDDEN, HIDDEN))     # nn.MultiheadAttention.in_proj_weight
        in_proj_b = n(ks[1], (3 * HIDDEN,))            # in_proj_bias
        out_proj_w = n(ks[2], (HIDDEN, HIDDEN))        # out_proj.weight
        out_proj_b = n(ks[3], (HIDDEN,))               # out_proj.bias
        w1 = n(ks[4], (D_FF, HIDDEN))                  # FFN.w_1.weight
        b1 = n(ks[5], (D_FF,))                         # FFN.w_1.bias
        w2 = n(ks[6], (HIDDEN, D_FF))                  # FFN.w_2.weight
        b2 = n(ks[7], (HIDDEN,))                       # FFN.w_2.bias

        # Host-side pre-transposition to (in, out); fuse K and V; fold softmax scale.
        wq_l.append(in_proj_w[:HIDDEN].T * scale)
        bq_l.append((in_proj_b[:HIDDEN] * scale)[None, :])
        wkv_l.append(jnp.concatenate([in_proj_w[HIDDEN:2 * HIDDEN].T,
                                      in_proj_w[2 * HIDDEN:].T], axis=1))
        bkv_l.append(in_proj_b[HIDDEN:][None, :])
        wo_l.append(out_proj_w.T)
        bo_l.append(out_proj_b[None, :])
        ln1g_l.append(jnp.ones((1, HIDDEN), jnp.float32))
        ln1b_l.append(jnp.zeros((1, HIDDEN), jnp.float32))
        wff1_l.append(w1.T)
        bff1_l.append(b1[None, :])
        wff2_l.append(w2.T)
        bff2_l.append(b2[None, :])
        ln2g_l.append(jnp.ones((1, HIDDEN), jnp.float32))
        ln2b_l.append(jnp.zeros((1, HIDDEN), jnp.float32))

    stack_bf16 = lambda xs: jnp.stack(xs).astype(jnp.bfloat16)   # MXU operands
    stack_f32 = lambda xs: jnp.stack(xs)                         # biases / LN params

    return (stack_bf16(wq_l), stack_f32(bq_l),
            stack_bf16(wkv_l), stack_f32(bkv_l),
            stack_bf16(wo_l), stack_f32(bo_l),
            stack_f32(ln1g_l), stack_f32(ln1b_l),
            stack_bf16(wff1_l), stack_f32(bff1_l),
            stack_bf16(wff2_l), stack_f32(bff2_l),
            stack_f32(ln2g_l), stack_f32(ln2b_l))


# ----------------------------------------------------------------------------
if __name__ == "__main__":
    key = jax.random.PRNGKey(0)
    kp, kx, ky = jax.random.split(key, 3)

    B, S = 2, 8
    params = init_params(kp)
    x = jax.random.normal(kx, (B, S, HIDDEN), jnp.float32)   # query-side stream
    y = jax.random.normal(ky, (B, S, HIDDEN), jnp.float32)   # key/value-side stream

    out = mhca_forward(x, y, params)
    out = jax.block_until_ready(out)
    assert out.shape == (B, S, HIDDEN)
    assert bool(jnp.all(jnp.isfinite(out)))
    print("KERNEL_OK")
</pallas_src>

<mosaic_0001>
module attributes {stable_mosaic.version = 11 : i64} {
  func.func @mhca_kernel(%arg0: i32, %arg1: memref<1x8x128xf32, #tpu.memory_space<vmem>>, %arg2: memref<1x8x128xf32, #tpu.memory_space<vmem>>, %arg3: memref<2x128x128xbf16, #tpu.memory_space<vmem>>, %arg4: memref<2x1x128xf32, #tpu.memory_space<vmem>>, %arg5: memref<2x128x256xbf16, #tpu.memory_space<vmem>>, %arg6: memref<2x1x256xf32, #tpu.memory_space<vmem>>, %arg7: memref<2x128x128xbf16, #tpu.memory_space<vmem>>, %arg8: memref<2x1x128xf32, #tpu.memory_space<vmem>>, %arg9: memref<2x1x128xf32, #tpu.memory_space<vmem>>, %arg10: memref<2x1x128xf32, #tpu.memory_space<vmem>>, %arg11: memref<2x128x256xbf16, #tpu.memory_space<vmem>>, %arg12: memref<2x1x256xf32, #tpu.memory_space<vmem>>, %arg13: memref<2x256x128xbf16, #tpu.memory_space<vmem>>, %arg14: memref<2x1x128xf32, #tpu.memory_space<vmem>>, %arg15: memref<2x1x128xf32, #tpu.memory_space<vmem>>, %arg16: memref<2x1x128xf32, #tpu.memory_space<vmem>>, %arg17: memref<1x8x128xf32, #tpu.memory_space<vmem>>, %arg18: memref<8x128xbf16, #tpu.memory_space<vmem>>) attributes {dimension_semantics = [#tpu.dimension_semantics<parallel>], iteration_bounds = array<i64: 2>, scalar_prefetch = 0 : i64, scratch_operands = 1 : i64, tpu.core_type = #tpu.core_type<tc>, window_params = [{transform_indices = @transform_0, window_bounds = array<i64: 1, 8, 128>}, {transform_indices = @transform_1, window_bounds = array<i64: 1, 8, 128>}, {pipeline_mode = #tpu.pipeline_mode<synchronous>, transform_indices = @transform_2, window_bounds = array<i64: 2, 128, 128>}, {pipeline_mode = #tpu.pipeline_mode<synchronous>, transform_indices = @transform_3, window_bounds = array<i64: 2, 1, 128>}, {pipeline_mode = #tpu.pipeline_mode<synchronous>, transform_indices = @transform_4, window_bounds = array<i64: 2, 128, 256>}, {pipeline_mode = #tpu.pipeline_mode<synchronous>, transform_indices = @transform_5, window_bounds = array<i64: 2, 1, 256>}, {pipeline_mode = #tpu.pipeline_mode<synchronous>, transform_indices = @transform_6, window_bounds = array<i64: 2, 128, 128>}, {pipeline_mode = #tpu.pipeline_mode<synchronous>, transform_indices = @transform_7, window_bounds = array<i64: 2, 1, 128>}, {pipeline_mode = #tpu.pipeline_mode<synchronous>, transform_indices = @transform_8, window_bounds = array<i64: 2, 1, 128>}, {pipeline_mode = #tpu.pipeline_mode<synchronous>, transform_indices = @transform_9, window_bounds = array<i64: 2, 1, 128>}, {pipeline_mode = #tpu.pipeline_mode<synchronous>, transform_indices = @transform_10, window_bounds = array<i64: 2, 128, 256>}, {pipeline_mode = #tpu.pipeline_mode<synchronous>, transform_indices = @transform_11, window_bounds = array<i64: 2, 1, 256>}, {pipeline_mode = #tpu.pipeline_mode<synchronous>, transform_indices = @transform_12, window_bounds = array<i64: 2, 256, 128>}, {pipeline_mode = #tpu.pipeline_mode<synchronous>, transform_indices = @transform_13, window_bounds = array<i64: 2, 1, 128>}, {pipeline_mode = #tpu.pipeline_mode<synchronous>, transform_indices = @transform_14, window_bounds = array<i64: 2, 1, 128>}, {pipeline_mode = #tpu.pipeline_mode<synchronous>, transform_indices = @transform_15, window_bounds = array<i64: 2, 1, 128>}, {transform_indices = @transform_16, window_bounds = array<i64: 1, 8, 128>}]} {
    %c0 = arith.constant 0 : index
    %c0_0 = arith.constant 0 : index
    %c0_1 = arith.constant 0 : index
    %0 = vector.load %arg1[%c0, %c0_0, %c0_1] : memref<1x8x128xf32, #tpu.memory_space<vmem>>, vector<1x8x128xf32>
    %1 = vector.shape_cast %0 : vector<1x8x128xf32> to vector<8x128xf32>
    %c0_2 = arith.constant 0 : index
    %c0_3 = arith.constant 0 : index
    %c0_4 = arith.constant 0 : index
    %2 = vector.load %arg2[%c0_2, %c0_3, %c0_4] : memref<1x8x128xf32, #tpu.memory_space<vmem>>, vector<1x8x128xf32>
    %3 = vector.shape_cast %2 : vector<1x8x128xf32> to vector<8x128xf32>
    %4 = arith.truncf %3 : vector<8x128xf32> to vector<8x128xbf16>
    %5 = arith.truncf %1 : vector<8x128xf32> to vector<8x128xbf16>
    %c0_5 = arith.constant 0 : index
    %c0_6 = arith.constant 0 : index
    %c0_7 = arith.constant 0 : index
    %6 = vector.load %arg3[%c0_5, %c0_6, %c0_7] : memref<2x128x128xbf16, #tpu.memory_space<vmem>>, vector<1x128x128xbf16>
    %7 = vector.shape_cast %6 : vector<1x128x128xbf16> to vector<128x128xbf16>
    %cst = arith.constant dense<0.000000e+00> : vector<8x128xf32>
    %8 = tpu.matmul %5, %7, %cst {dimension_numbers = #tpu.dot_dimension_numbers<[1], [0], [0], [1], [0, 0, 1, 1], [], []>} : vector<8x128xbf16>, vector<128x128xbf16>, vector<8x128xf32> -> vector<8x128xf32>
    %c0_8 = arith.constant 0 : index
    %c0_9 = arith.constant 0 : index
    %c0_10 = arith.constant 0 : index
    %9 = vector.load %arg4[%c0_8, %c0_9, %c0_10] : memref<2x1x128xf32, #tpu.memory_space<vmem>>, vector<1x1x128xf32>
    %10 = vector.shape_cast %9 : vector<1x1x128xf32> to vector<1x128xf32>
    %11 = vector.broadcast %10 : vector<1x128xf32> to vector<8x128xf32>
    %12 = arith.addf %8, %11 : vector<8x128xf32>
    %c0_11 = arith.constant 0 : index
    %c0_12 = arith.constant 0 : index
    %c0_13 = arith.constant 0 : index
    %13 = vector.load %arg5[%c0_11, %c0_12, %c0_13] : memref<2x128x256xbf16, #tpu.memory_space<vmem>>, vector<1x128x256xbf16>
    %14 = vector.shape_cast %13 : vector<1x128x256xbf16> to vector<128x256xbf16>
    %cst_14 = arith.constant dense<0.000000e+00> : vector<8x256xf32>
    %15 = tpu.matmul %4, %14, %cst_14 {dimension_numbers = #tpu.dot_dimension_numbers<[1], [0], [0], [1], [0, 0, 1, 1], [], []>} : vector<8x128xbf16>, vector<128x256xbf16>, vector<8x256xf32> -> vector<8x256xf32>
    %c0_15 = arith.constant 0 : index
    %c0_16 = arith.constant 0 : index
    %c0_17 = arith.constant 0 : index
    %16 = vector.load %arg6[%c0_15, %c0_16, %c0_17] : memref<2x1x256xf32, #tpu.memory_space<vmem>>, vector<1x1x256xf32>
    %17 = vector.shape_cast %16 : vector<1x1x256xf32> to vector<1x256xf32>
    %18 = vector.broadcast %17 : vector<1x256xf32> to vector<8x256xf32>
    %19 = arith.addf %15, %18 : vector<8x256xf32>
    %20 = arith.truncf %12 : vector<8x128xf32> to vector<8x128xbf16>
    %21 = arith.truncf %19 : vector<8x256xf32> to vector<8x256xbf16>
    %22 = vector.extract_strided_slice %20 {offsets = [0, 0], sizes = [8, 32], strides = [1, 1]} : vector<8x128xbf16> to vector<8x32xbf16>
    %23 = vector.extract_strided_slice %21 {offsets = [0, 0], sizes = [8, 32], strides = [1, 1]} : vector<8x256xbf16> to vector<8x32xbf16>
    %cst_18 = arith.constant dense<0.000000e+00> : vector<8x8xf32>
    %24 = tpu.matmul %22, %23, %cst_18 {dimension_numbers = #tpu.dot_dimension_numbers<[1], [1], [0], [0], [0, 0, 1, 0], [], []>} : vector<8x32xbf16>, vector<8x32xbf16>, vector<8x8xf32> -> vector<8x8xf32>
    %cst_19 = arith.constant dense<0xFF800000> : vector<8xf32>
    %25 = vector.multi_reduction <maximumf>, %24, %cst_19 [1] : vector<8x8xf32> to vector<8xf32>
    %26 = vector.shape_cast %25 : vector<8xf32> to vector<8x1xf32>
    %27 = vector.broadcast %26 : vector<8x1xf32> to vector<8x8xf32>
    %28 = arith.subf %24, %27 : vector<8x8xf32>
    %29 = math.exp %28 : vector<8x8xf32>
    %cst_20 = arith.constant dense<0.000000e+00> : vector<8xf32>
    %30 = vector.multi_reduction <add>, %29, %cst_20 [1] : vector<8x8xf32> to vector<8xf32>
    %31 = vector.shape_cast %30 : vector<8xf32> to vector<8x1xf32>
    %32 = tpu.reciprocal %31 {approx = true} : vector<8x1xf32> -> vector<8x1xf32>
    %33 = vector.broadcast %32 : vector<8x1xf32> to vector<8x8xf32>
    %34 = arith.mulf %29, %33 : vector<8x8xf32>
    %35 = arith.truncf %34 : vector<8x8xf32> to vector<8x8xbf16>
    %36 = vector.extract_strided_slice %21 {offsets = [0, 128], sizes = [8, 32], strides = [1, 1]} : vector<8x256xbf16> to vector<8x32xbf16>
    %cst_21 = arith.constant dense<0.000000e+00> : vector<8x32xf32>
    %37 = tpu.matmul %35, %36, %cst_21 {dimension_numbers = #tpu.dot_dimension_numbers<[1], [0], [0], [1], [0, 0, 1, 1], [], []>} : vector<8x8xbf16>, vector<8x32xbf16>, vector<8x32xf32> -> vector<8x32xf32>
    %38 = arith.truncf %37 : vector<8x32xf32> to vector<8x32xbf16>
    %c0_22 = arith.constant 0 : index
    %c0_23 = arith.constant 0 : index
    %39 = vector.load %arg18[%c0_22, %c0_23] : memref<8x128xbf16, #tpu.memory_space<vmem>>, vector<8x32xbf16>
    tpu.vector_store %arg18[%c0_22, %c0_23], %38 {strides = array<i32>} : memref<8x128xbf16, #tpu.memory_space<vmem>>, vector<8x32xbf16>,
    %40 = vector.extract_strided_slice %20 {offsets = [0, 32], sizes = [8, 32], strides = [1, 1]} : vector<8x128xbf16> to vector<8x32xbf16>
    %41 = vector.extract_strided_slice %21 {offsets = [0, 32], sizes = [8, 32], strides = [1, 1]} : vector<8x256xbf16> to vector<8x32xbf16>
    %cst_24 = arith.constant dense<0.000000e+00> : vector<8x8xf32>
    %42 = tpu.matmul %40, %41, %cst_24 {dimension_numbers = #tpu.dot_dimension_numbers<[1], [1], [0], [0], [0, 0, 1, 0], [], []>} : vector<8x32xbf16>, vector<8x32xbf16>, vector<8x8xf32> -> vector<8x8xf32>
    %cst_25 = arith.constant dense<0xFF800000> : vector<8xf32>
    %43 = vector.multi_reduction <maximumf>, %42, %cst_25 [1] : vector<8x8xf32> to vector<8xf32>
    %44 = vector.shape_cast %43 : vector<8xf32> to vector<8x1xf32>
    %45 = vector.broadcast %44 : vector<8x1xf32> to vector<8x8xf32>
    %46 = arith.subf %42, %45 : vector<8x8xf32>
    %47 = math.exp %46 : vector<8x8xf32>
    %cst_26 = arith.constant dense<0.000000e+00> : vector<8xf32>
    %48 = vector.multi_reduction <add>, %47, %cst_26 [1] : vector<8x8xf32> to vector<8xf32>
    %49 = vector.shape_cast %48 : vector<8xf32> to vector<8x1xf32>
    %50 = tpu.reciprocal %49 {approx = true} : vector<8x1xf32> -> vector<8x1xf32>
    %51 = vector.broadcast %50 : vector<8x1xf32> to vector<8x8xf32>
    %52 = arith.mulf %47, %51 : vector<8x8xf32>
    %53 = arith.truncf %52 : vector<8x8xf32> to vector<8x8xbf16>
    %54 = vector.extract_strided_slice %21 {offsets = [0, 160], sizes = [8, 32], strides = [1, 1]} : vector<8x256xbf16> to vector<8x32xbf16>
    %cst_27 = arith.constant dense<0.000000e+00> : vector<8x32xf32>
    %55 = tpu.matmul %53, %54, %cst_27 {dimension_numbers = #tpu.dot_dimension_numbers<[1], [0], [0], [1], [0, 0, 1, 1], [], []>} : vector<8x8xbf16>, vector<8x32xbf16>, vector<8x32xf32> -> vector<8x32xf32>
    %56 = arith.truncf %55 : vector<8x32xf32> to vector<8x32xbf16>
    %c0_28 = arith.constant 0 : index
    %c32 = arith.constant 32 : index
    %57 = vector.load %arg18[%c0_28, %c32] : memref<8x128xbf16, #tpu.memory_space<vmem>>, vector<8x32xbf16>
    tpu.vector_store %arg18[%c0_28, %c32], %56 {strides = array<i32>} : memref<8x128xbf16, #tpu.memory_space<vmem>>, vector<8x32xbf16>,
    %58 = vector.extract_strided_slice %20 {offsets = [0, 64], sizes = [8, 32], strides = [1, 1]} : vector<8x128xbf16> to vector<8x32xbf16>
    %59 = vector.extract_strided_slice %21 {offsets = [0, 64], sizes = [8, 32], strides = [1, 1]} : vector<8x256xbf16> to vector<8x32xbf16>
    %cst_29 = arith.constant dense<0.000000e+00> : vector<8x8xf32>
    %60 = tpu.matmul %58, %59, %cst_29 {dimension_numbers = #tpu.dot_dimension_numbers<[1], [1], [0], [0], [0, 0, 1, 0], [], []>} : vector<8x32xbf16>, vector<8x32xbf16>, vector<8x8xf32> -> vector<8x8xf32>
    %cst_30 = arith.constant dense<0xFF800000> : vector<8xf32>
    %61 = vector.multi_reduction <maximumf>, %60, %cst_30 [1] : vector<8x8xf32> to vector<8xf32>
    %62 = vector.shape_cast %61 : vector<8xf32> to vector<8x1xf32>
    %63 = vector.broadcast %62 : vector<8x1xf32> to vector<8x8xf32>
    %64 = arith.subf %60, %63 : vector<8x8xf32>
    %65 = math.exp %64 : vector<8x8xf32>
    %cst_31 = arith.constant dense<0.000000e+00> : vector<8xf32>
    %66 = vector.multi_reduction <add>, %65, %cst_31 [1] : vector<8x8xf32> to vector<8xf32>
    %67 = vector.shape_cast %66 : vector<8xf32> to vector<8x1xf32>
    %68 = tpu.reciprocal %67 {approx = true} : vector<8x1xf32> -> vector<8x1xf32>
    %69 = vector.broadcast %68 : vector<8x1xf32> to vector<8x8xf32>
    %70 = arith.mulf %65, %69 : vector<8x8xf32>
    %71 = arith.truncf %70 : vector<8x8xf32> to vector<8x8xbf16>
    %72 = vector.extract_strided_slice %21 {offsets = [0, 192], sizes = [8, 32], strides = [1, 1]} : vector<8x256xbf16> to vector<8x32xbf16>
    %cst_32 = arith.constant dense<0.000000e+00> : vector<8x32xf32>
    %73 = tpu.matmul %71, %72, %cst_32 {dimension_numbers = #tpu.dot_dimension_numbers<[1], [0], [0], [1], [0, 0, 1, 1], [], []>} : vector<8x8xbf16>, vector<8x32xbf16>, vector<8x32xf32> -> vector<8x32xf32>
    %74 = arith.truncf %73 : vector<8x32xf32> to vector<8x32xbf16>
    %c0_33 = arith.constant 0 : index
    %c64 = arith.constant 64 : index
    %75 = vector.load %arg18[%c0_33, %c64] : memref<8x128xbf16, #tpu.memory_space<vmem>>, vector<8x32xbf16>
    tpu.vector_store %arg18[%c0_33, %c64], %74 {strides = array<i32>} : memref<8x128xbf16, #tpu.memory_space<vmem>>, vector<8x32xbf16>,
    %76 = vector.extract_strided_slice %20 {offsets = [0, 96], sizes = [8, 32], strides = [1, 1]} : vector<8x128xbf16> to vector<8x32xbf16>
    %77 = vector.extract_strided_slice %21 {offsets = [0, 96], sizes = [8, 32], strides = [1, 1]} : vector<8x256xbf16> to vector<8x32xbf16>
    %cst_34 = arith.constant dense<0.000000e+00> : vector<8x8xf32>
    %78 = tpu.matmul %76, %77, %cst_34 {dimension_numbers = #tpu.dot_dimension_numbers<[1], [1], [0], [0], [0, 0, 1, 0], [], []>} : vector<8x32xbf16>, vector<8x32xbf16>, vector<8x8xf32> -> vector<8x8xf32>
    %cst_35 = arith.constant dense<0xFF800000> : vector<8xf32>
    %79 = vector.multi_reduction <maximumf>, %78, %cst_35 [1] : vector<8x8xf32> to vector<8xf32>
    %80 = vector.shape_cast %79 : vector<8xf32> to vector<8x1xf32>
    %81 = vector.broadcast %80 : vector<8x1xf32> to vector<8x8xf32>
    %82 = arith.subf %78, %81 : vector<8x8xf32>
    %83 = math.exp %82 : vector<8x8xf32>
    %cst_36 = arith.constant dense<0.000000e+00> : vector<8xf32>
    %84 = vector.multi_reduction <add>, %83, %cst_36 [1] : vector<8x8xf32> to vector<8xf32>
    %85 = vector.shape_cast %84 : vector<8xf32> to vector<8x1xf32>
    %86 = tpu.reciprocal %85 {approx = true} : vector<8x1xf32> -> vector<8x1xf32>
    %87 = vector.broadcast %86 : vector<8x1xf32> to vector<8x8xf32>
    %88 = arith.mulf %83, %87 : vector<8x8xf32>
    %89 = arith.truncf %88 : vector<8x8xf32> to vector<8x8xbf16>
    %90 = vector.extract_strided_slice %21 {offsets = [0, 224], sizes = [8, 32], strides = [1, 1]} : vector<8x256xbf16> to vector<8x32xbf16>
    %cst_37 = arith.constant dense<0.000000e+00> : vector<8x32xf32>
    %91 = tpu.matmul %89, %90, %cst_37 {dimension_numbers = #tpu.dot_dimension_numbers<[1], [0], [0], [1], [0, 0, 1, 1], [], []>} : vector<8x8xbf16>, vector<8x32xbf16>, vector<8x32xf32> -> vector<8x32xf32>
    %92 = arith.truncf %91 : vector<8x32xf32> to vector<8x32xbf16>
    %c0_38 = arith.constant 0 : index
    %c96 = arith.constant 96 : index
    %93 = vector.load %arg18[%c0_38, %c96] : memref<8x128xbf16, #tpu.memory_space<vmem>>, vector<8x32xbf16>
    tpu.vector_store %arg18[%c0_38, %c96], %92 {strides = array<i32>} : memref<8x128xbf16, #tpu.memory_space<vmem>>, vector<8x32xbf16>,
    %c0_39 = arith.constant 0 : index
    %c0_40 = arith.constant 0 : index
    %94 = vector.load %arg18[%c0_39, %c0_40] : memref<8x128xbf16, #tpu.memory_space<vmem>>, vector<8x128xbf16>
    %c0_41 = arith.constant 0 : index
    %c0_42 = arith.constant 0 : index
    %c0_43 = arith.constant 0 : index
    %95 = vector.load %arg7[%c0_41, %c0_42, %c0_43] : memref<2x128x128xbf16, #tpu.memory_space<vmem>>, vector<1x128x128xbf16>
    %96 = vector.shape_cast %95 : vector<1x128x128xbf16> to vector<128x128xbf16>
    %cst_44 = arith.constant dense<0.000000e+00> : vector<8x128xf32>
    %97 = tpu.matmul %94, %96, %cst_44 {dimension_numbers = #tpu.dot_dimension_numbers<[1], [0], [0], [1], [0, 0, 1, 1], [], []>} : vector<8x128xbf16>, vector<128x128xbf16>, vector<8x128xf32> -> vector<8x128xf32>
    %c0_45 = arith.constant 0 : index
    %c0_46 = arith.constant 0 : index
    %c0_47 = arith.constant 0 : index
    %98 = vector.load %arg8[%c0_45, %c0_46, %c0_47] : memref<2x1x128xf32, #tpu.memory_space<vmem>>, vector<1x1x128xf32>
    %99 = vector.shape_cast %98 : vector<1x1x128xf32> to vector<1x128xf32>
    %100 = vector.broadcast %99 : vector<1x128xf32> to vector<8x128xf32>
    %101 = arith.addf %97, %100 : vector<8x128xf32>
    %102 = arith.addf %1, %101 : vector<8x128xf32>
    %c0_48 = arith.constant 0 : index
    %c0_49 = arith.constant 0 : index
    %c0_50 = arith.constant 0 : index
    %103 = vector.load %arg9[%c0_48, %c0_49, %c0_50] : memref<2x1x128xf32, #tpu.memory_space<vmem>>, vector<1x1x128xf32>
    %104 = vector.shape_cast %103 : vector<1x1x128xf32> to vector<1x128xf32>
    %c0_51 = arith.constant 0 : index
    %c0_52 = arith.constant 0 : index
    %c0_53 = arith.constant 0 : index
    %105 = vector.load %arg10[%c0_51, %c0_52, %c0_53] : memref<2x1x128xf32, #tpu.memory_space<vmem>>, vector<1x1x128xf32>
    %106 = vector.shape_cast %105 : vector<1x1x128xf32> to vector<1x128xf32>
    %cst_54 = arith.constant dense<0.000000e+00> : vector<8xf32>
    %107 = vector.multi_reduction <add>, %102, %cst_54 [1] : vector<8x128xf32> to vector<8xf32>
    %108 = vector.shape_cast %107 : vector<8xf32> to vector<8x1xf32>
    %cst_55 = arith.constant 1.280000e+02 : f32
    %109 = vector.broadcast %cst_55 : f32 to vector<8x1xf32>
    %110 = arith.divf %108, %109 : vector<8x1xf32>
    %111 = vector.broadcast %110 : vector<8x1xf32> to vector<8x128xf32>
    %112 = arith.subf %102, %111 : vector<8x128xf32>
    %113 = arith.mulf %112, %112 : vector<8x128xf32>
    %cst_56 = arith.constant dense<0.000000e+00> : vector<8xf32>
    %114 = vector.multi_reduction <add>, %113, %cst_56 [1] : vector<8x128xf32> to vector<8xf32>
    %115 = vector.shape_cast %114 : vector<8xf32> to vector<8x1xf32>
    %cst_57 = arith.constant 1.280000e+02 : f32
    %116 = vector.broadcast %cst_57 : f32 to vector<8x1xf32>
    %117 = arith.divf %115, %116 : vector<8x1xf32>
    %118 = vector.broadcast %110 : vector<8x1xf32> to vector<8x128xf32>
    %119 = arith.subf %102, %118 : vector<8x128xf32>
    %cst_58 = arith.constant 9.99999974E-6 : f32
    %120 = vector.broadcast %cst_58 : f32 to vector<8x1xf32>
    %121 = arith.addf %117, %120 : vector<8x1xf32>
    %122 = math.rsqrt %121 : vector<8x1xf32>
    %123 = vector.broadcast %122 : vector<8x1xf32> to vector<8x128xf32>
    %124 = arith.mulf %119, %123 : vector<8x128xf32>
    %125 = vector.broadcast %104 : vector<1x128xf32> to vector<8x128xf32>
    %126 = arith.mulf %124, %125 : vector<8x128xf32>
    %127 = vector.broadcast %106 : vector<1x128xf32> to vector<8x128xf32>
    %128 = arith.addf %126, %127 : vector<8x128xf32>
    %129 = arith.truncf %128 : vector<8x128xf32> to vector<8x128xbf16>
    %c0_59 = arith.constant 0 : index
    %c0_60 = arith.constant 0 : index
    %c0_61 = arith.constant 0 : index
    %130 = vector.load %arg11[%c0_59, %c0_60, %c0_61] : memref<2x128x256xbf16, #tpu.memory_space<vmem>>, vector<1x128x256xbf16>
    %131 = vector.shape_cast %130 : vector<1x128x256xbf16> to vector<128x256xbf16>
    %cst_62 = arith.constant dense<0.000000e+00> : vector<8x256xf32>
    %132 = tpu.matmul %129, %131, %cst_62 {dimension_numbers = #tpu.dot_dimension_numbers<[1], [0], [0], [1], [0, 0, 1, 1], [], []>} : vector<8x128xbf16>, vector<128x256xbf16>, vector<8x256xf32> -> vector<8x256xf32>
    %c0_63 = arith.constant 0 : index
    %c0_64 = arith.constant 0 : index
    %c0_65 = arith.constant 0 : index
    %133 = vector.load %arg12[%c0_63, %c0_64, %c0_65] : memref<2x1x256xf32, #tpu.memory_space<vmem>>, vector<1x1x256xf32>
    %134 = vector.shape_cast %133 : vector<1x1x256xf32> to vector<1x256xf32>
    %135 = vector.broadcast %134 : vector<1x256xf32> to vector<8x256xf32>
    %136 = arith.addf %132, %135 : vector<8x256xf32>
    %cst_66 = arith.constant 0.000000e+00 : f32
    %137 = vector.broadcast %cst_66 : f32 to vector<8x256xf32>
    %138 = arith.maximumf %136, %137 : vector<8x256xf32>
    %139 = arith.truncf %138 : vector<8x256xf32> to vector<8x256xbf16>
    %c0_67 = arith.constant 0 : index
    %c0_68 = arith.constant 0 : index
    %c0_69 = arith.constant 0 : index
    %140 = vector.load %arg13[%c0_67, %c0_68, %c0_69] : memref<2x256x128xbf16, #tpu.memory_space<vmem>>, vector<1x256x128xbf16>
    %141 = vector.shape_cast %140 : vector<1x256x128xbf16> to vector<256x128xbf16>
    %cst_70 = arith.constant dense<0.000000e+00> : vector<8x128xf32>
    %142 = tpu.matmul %139, %141, %cst_70 {dimension_numbers = #tpu.dot_dimension_numbers<[1], [0], [0], [1], [0, 0, 1, 1], [], []>} : vector<8x256xbf16>, vector<256x128xbf16>, vector<8x128xf32> -> vector<8x128xf32>
    %c0_71 = arith.constant 0 : index
    %c0_72 = arith.constant 0 : index
    %c0_73 = arith.constant 0 : index
    %143 = vector.load %arg14[%c0_71, %c0_72, %c0_73] : memref<2x1x128xf32, #tpu.memory_space<vmem>>, vector<1x1x128xf32>
    %144 = vector.shape_cast %143 : vector<1x1x128xf32> to vector<1x128xf32>
    %145 = vector.broadcast %144 : vector<1x128xf32> to vector<8x128xf32>
    %146 = arith.addf %142, %145 : vector<8x128xf32>
    %147 = arith.addf %128, %146 : vector<8x128xf32>
    %c0_74 = arith.constant 0 : index
    %c0_75 = arith.constant 0 : index
    %c0_76 = arith.constant 0 : index
    %148 = vector.load %arg15[%c0_74, %c0_75, %c0_76] : memref<2x1x128xf32, #tpu.memory_space<vmem>>, vector<1x1x128xf32>
    %149 = vector.shape_cast %148 : vector<1x1x128xf32> to vector<1x128xf32>
    %c0_77 = arith.constant 0 : index
    %c0_78 = arith.constant 0 : index
    %c0_79 = arith.constant 0 : index
    %150 = vector.load %arg16[%c0_77, %c0_78, %c0_79] : memref<2x1x128xf32, #tpu.memory_space<vmem>>, vector<1x1x128xf32>
    %151 = vector.shape_cast %150 : vector<1x1x128xf32> to vector<1x128xf32>
    %cst_80 = arith.constant dense<0.000000e+00> : vector<8xf32>
    %152 = vector.multi_reduction <add>, %147, %cst_80 [1] : vector<8x128xf32> to vector<8xf32>
    %153 = vector.shape_cast %152 : vector<8xf32> to vector<8x1xf32>
    %cst_81 = arith.constant 1.280000e+02 : f32
    %154 = vector.broadcast %cst_81 : f32 to vector<8x1xf32>
    %155 = arith.divf %153, %154 : vector<8x1xf32>
    %156 = vector.broadcast %155 : vector<8x1xf32> to vector<8x128xf32>
    %157 = arith.subf %147, %156 : vector<8x128xf32>
    %158 = arith.mulf %157, %157 : vector<8x128xf32>
    %cst_82 = arith.constant dense<0.000000e+00> : vector<8xf32>
    %159 = vector.multi_reduction <add>, %158, %cst_82 [1] : vector<8x128xf32> to vector<8xf32>
    %160 = vector.shape_cast %159 : vector<8xf32> to vector<8x1xf32>
    %cst_83 = arith.constant 1.280000e+02 : f32
    %161 = vector.broadcast %cst_83 : f32 to vector<8x1xf32>
    %162 = arith.divf %160, %161 : vector<8x1xf32>
    %163 = vector.broadcast %155 : vector<8x1xf32> to vector<8x128xf32>
    %164 = arith.subf %147, %163 : vector<8x128xf32>
    %cst_84 = arith.constant 9.99999974E-6 : f32
    %165 = vector.broadcast %cst_84 : f32 to vector<8x1xf32>
    %166 = arith.addf %162, %165 : vector<8x1xf32>
    %167 = math.rsqrt %166 : vector<8x1xf32>
    %168 = vector.broadcast %167 : vector<8x1xf32> to vector<8x128xf32>
    %169 = arith.mulf %164, %168 : vector<8x128xf32>
    %170 = vector.broadcast %149 : vector<1x128xf32> to vector<8x128xf32>
    %171 = arith.mulf %169, %170 : vector<8x128xf32>
    %172 = vector.broadcast %151 : vector<1x128xf32> to vector<8x128xf32>
    %173 = arith.addf %171, %172 : vector<8x128xf32>
    %174 = arith.truncf %173 : vector<8x128xf32> to vector<8x128xbf16>
    %c1 = arith.constant 1 : index
    %c0_85 = arith.constant 0 : index
    %c0_86 = arith.constant 0 : index
    %175 = vector.load %arg3[%c1, %c0_85, %c0_86] : memref<2x128x128xbf16, #tpu.memory_space<vmem>>, vector<1x128x128xbf16>
    %176 = vector.shape_cast %175 : vector<1x128x128xbf16> to vector<128x128xbf16>
    %cst_87 = arith.constant dense<0.000000e+00> : vector<8x128xf32>
    %177 = tpu.matmul %174, %176, %cst_87 {dimension_numbers = #tpu.dot_dimension_numbers<[1], [0], [0], [1], [0, 0, 1, 1], [], []>} : vector<8x128xbf16>, vector<128x128xbf16>, vector<8x128xf32> -> vector<8x128xf32>
    %c1_88 = arith.constant 1 : index
    %c0_89 = arith.constant 0 : index
    %c0_90 = arith.constant 0 : index
    %178 = vector.load %arg4[%c1_88, %c0_89, %c0_90] : memref<2x1x128xf32, #tpu.memory_space<vmem>>, vector<1x1x128xf32>
    %179 = vector.shape_cast %178 : vector<1x1x128xf32> to vector<1x128xf32>
    %180 = vector.broadcast %179 : vector<1x128xf32> to vector<8x128xf32>
    %181 = arith.addf %177, %180 : vector<8x128xf32>
    %c1_91 = arith.constant 1 : index
    %c0_92 = arith.constant 0 : index
    %c0_93 = arith.constant 0 : index
    %182 = vector.load %arg5[%c1_91, %c0_92, %c0_93] : memref<2x128x256xbf16, #tpu.memory_space<vmem>>, vector<1x128x256xbf16>
    %183 = vector.shape_cast %182 : vector<1x128x256xbf16> to vector<128x256xbf16>
    %cst_94 = arith.constant dense<0.000000e+00> : vector<8x256xf32>
    %184 = tpu.matmul %4, %183, %cst_94 {dimension_numbers = #tpu.dot_dimension_numbers<[1], [0], [0], [1], [0, 0, 1, 1], [], []>} : vector<8x128xbf16>, vector<128x256xbf16>, vector<8x256xf32> -> vector<8x256xf32>
    %c1_95 = arith.constant 1 : index
    %c0_96 = arith.constant 0 : index
    %c0_97 = arith.constant 0 : index
    %185 = vector.load %arg6[%c1_95, %c0_96, %c0_97] : memref<2x1x256xf32, #tpu.memory_space<vmem>>, vector<1x1x256xf32>
    %186 = vector.shape_cast %185 : vector<1x1x256xf32> to vector<1x256xf32>
    %187 = vector.broadcast %186 : vector<1x256xf32> to vector<8x256xf32>
    %188 = arith.addf %184, %187 : vector<8x256xf32>
    %189 = arith.truncf %181 : vector<8x128xf32> to vector<8x128xbf16>
    %190 = arith.truncf %188 : vector<8x256xf32> to vector<8x256xbf16>
    %191 = vector.extract_strided_slice %189 {offsets = [0, 0], sizes = [8, 32], strides = [1, 1]} : vector<8x128xbf16> to vector<8x32xbf16>
    %192 = vector.extract_strided_slice %190 {offsets = [0, 0], sizes = [8, 32], strides = [1, 1]} : vector<8x256xbf16> to vector<8x32xbf16>
    %cst_98 = arith.constant dense<0.000000e+00> : vector<8x8xf32>
    %193 = tpu.matmul %191, %192, %cst_98 {dimension_numbers = #tpu.dot_dimension_numbers<[1], [1], [0], [0], [0, 0, 1, 0], [], []>} : vector<8x32xbf16>, vector<8x32xbf16>, vector<8x8xf32> -> vector<8x8xf32>
    %cst_99 = arith.constant dense<0xFF800000> : vector<8xf32>
    %194 = vector.multi_reduction <maximumf>, %193, %cst_99 [1] : vector<8x8xf32> to vector<8xf32>
    %195 = vector.shape_cast %194 : vector<8xf32> to vector<8x1xf32>
    %196 = vector.broadcast %195 : vector<8x1xf32> to vector<8x8xf32>
    %197 = arith.subf %193, %196 : vector<8x8xf32>
    %198 = math.exp %197 : vector<8x8xf32>
    %cst_100 = arith.constant dense<0.000000e+00> : vector<8xf32>
    %199 = vector.multi_reduction <add>, %198, %cst_100 [1] : vector<8x8xf32> to vector<8xf32>
    %200 = vector.shape_cast %199 : vector<8xf32> to vector<8x1xf32>
    %201 = tpu.reciprocal %200 {approx = true} : vector<8x1xf32> -> vector<8x1xf32>
    %202 = vector.broadcast %201 : vector<8x1xf32> to vector<8x8xf32>
    %203 = arith.mulf %198, %202 : vector<8x8xf32>
    %204 = arith.truncf %203 : vector<8x8xf32> to vector<8x8xbf16>
    %205 = vector.extract_strided_slice %190 {offsets = [0, 128], sizes = [8, 32], strides = [1, 1]} : vector<8x256xbf16> to vector<8x32xbf16>
    %cst_101 = arith.constant dense<0.000000e+00> : vector<8x32xf32>
    %206 = tpu.matmul %204, %205, %cst_101 {dimension_numbers = #tpu.dot_dimension_numbers<[1], [0], [0], [1], [0, 0, 1, 1], [], []>} : vector<8x8xbf16>, vector<8x32xbf16>, vector<8x32xf32> -> vector<8x32xf32>
    %207 = arith.truncf %206 : vector<8x32xf32> to vector<8x32xbf16>
    %c0_102 = arith.constant 0 : index
    %c0_103 = arith.constant 0 : index
    %208 = vector.load %arg18[%c0_102, %c0_103] : memref<8x128xbf16, #tpu.memory_space<vmem>>, vector<8x32xbf16>
    tpu.vector_store %arg18[%c0_102, %c0_103], %207 {strides = array<i32>} : memref<8x128xbf16, #tpu.memory_space<vmem>>, vector<8x32xbf16>,
    %209 = vector.extract_strided_slice %189 {offsets = [0, 32], sizes = [8, 32], strides = [1, 1]} : vector<8x128xbf16> to vector<8x32xbf16>
    %210 = vector.extract_strided_slice %190 {offsets = [0, 32], sizes = [8, 32], strides = [1, 1]} : vector<8x256xbf16> to vector<8x32xbf16>
    %cst_104 = arith.constant dense<0.000000e+00> : vector<8x8xf32>
    %211 = tpu.matmul %209, %210, %cst_104 {dimension_numbers = #tpu.dot_dimension_numbers<[1], [1], [0], [0], [0, 0, 1, 0], [], []>} : vector<8x32xbf16>, vector<8x32xbf16>, vector<8x8xf32> -> vector<8x8xf32>
    %cst_105 = arith.constant dense<0xFF800000> : vector<8xf32>
    %212 = vector.multi_reduction <maximumf>, %211, %cst_105 [1] : vector<8x8xf32> to vector<8xf32>
    %213 = vector.shape_cast %212 : vector<8xf32> to vector<8x1xf32>
    %214 = vector.broadcast %213 : vector<8x1xf32> to vector<8x8xf32>
    %215 = arith.subf %211, %214 : vector<8x8xf32>
    %216 = math.exp %215 : vector<8x8xf32>
    %cst_106 = arith.constant dense<0.000000e+00> : vector<8xf32>
    %217 = vector.multi_reduction <add>, %216, %cst_106 [1] : vector<8x8xf32> to vector<8xf32>
    %218 = vector.shape_cast %217 : vector<8xf32> to vector<8x1xf32>
    %219 = tpu.reciprocal %218 {approx = true} : vector<8x1xf32> -> vector<8x1xf32>
    %220 = vector.broadcast %219 : vector<8x1xf32> to vector<8x8xf32>
    %221 = arith.mulf %216, %220 : vector<8x8xf32>
    %222 = arith.truncf %221 : vector<8x8xf32> to vector<8x8xbf16>
    %223 = vector.extract_strided_slice %190 {offsets = [0, 160], sizes = [8, 32], strides = [1, 1]} : vector<8x256xbf16> to vector<8x32xbf16>
    %cst_107 = arith.constant dense<0.000000e+00> : vector<8x32xf32>
    %224 = tpu.matmul %222, %223, %cst_107 {dimension_numbers = #tpu.dot_dimension_numbers<[1], [0], [0], [1], [0, 0, 1, 1], [], []>} : vector<8x8xbf16>, vector<8x32xbf16>, vector<8x32xf32> -> vector<8x32xf32>
    %225 = arith.truncf %224 : vector<8x32xf32> to vector<8x32xbf16>
    %c0_108 = arith.constant 0 : index
    %c32_109 = arith.constant 32 : index
    %226 = vector.load %arg18[%c0_108, %c32_109] : memref<8x128xbf16, #tpu.memory_space<vmem>>, vector<8x32xbf16>
    tpu.vector_store %arg18[%c0_108, %c32_109], %225 {strides = array<i32>} : memref<8x128xbf16, #tpu.memory_space<vmem>>, vector<8x32xbf16>,
    %227 = vector.extract_strided_slice %189 {offsets = [0, 64], sizes = [8, 32], strides = [1, 1]} : vector<8x128xbf16> to vector<8x32xbf16>
    %228 = vector.extract_strided_slice %190 {offsets = [0, 64], sizes = [8, 32], strides = [1, 1]} : vector<8x256xbf16> to vector<8x32xbf16>
    %cst_110 = arith.constant dense<0.000000e+00> : vector<8x8xf32>
    %229 = tpu.matmul %227, %228, %cst_110 {dimension_numbers = #tpu.dot_dimension_numbers<[1], [1], [0], [0], [0, 0, 1, 0], [], []>} : vector<8x32xbf16>, vector<8x32xbf16>, vector<8x8xf32> -> vector<8x8xf32>
    %cst_111 = arith.constant dense<0xFF800000> : vector<8xf32>
    %230 = vector.multi_reduction <maximumf>, %229, %cst_111 [1] : vector<8x8xf32> to vector<8xf32>
    %231 = vector.shape_cast %230 : vector<8xf32> to vector<8x1xf32>
    %232 = vector.broadcast %231 : vector<8x1xf32> to vector<8x8xf32>
    %233 = arith.subf %229, %232 : vector<8x8xf32>
    %234 = math.exp %233 : vector<8x8xf32>
    %cst_112 = arith.constant dense<0.000000e+00> : vector<8xf32>
    %235 = vector.multi_reduction <add>, %234, %cst_112 [1] : vector<8x8xf32> to vector<8xf32>
    %236 = vector.shape_cast %235 : vector<8xf32> to vector<8x1xf32>
    %237 = tpu.reciprocal %236 {approx = true} : vector<8x1xf32> -> vector<8x1xf32>
    %238 = vector.broadcast %237 : vector<8x1xf32> to vector<8x8xf32>
    %239 = arith.mulf %234, %238 : vector<8x8xf32>
    %240 = arith.truncf %239 : vector<8x8xf32> to vector<8x8xbf16>
    %241 = vector.extract_strided_slice %190 {offsets = [0, 192], sizes = [8, 32], strides = [1, 1]} : vector<8x256xbf16> to vector<8x32xbf16>
    %cst_113 = arith.constant dense<0.000000e+00> : vector<8x32xf32>
    %242 = tpu.matmul %240, %241, %cst_113 {dimension_numbers = #tpu.dot_dimension_numbers<[1], [0], [0], [1], [0, 0, 1, 1], [], []>} : vector<8x8xbf16>, vector<8x32xbf16>, vector<8x32xf32> -> vector<8x32xf32>
    %243 = arith.truncf %242 : vector<8x32xf32> to vector<8x32xbf16>
    %c0_114 = arith.constant 0 : index
    %c64_115 = arith.constant 64 : index
    %244 = vector.load %arg18[%c0_114, %c64_115] : memref<8x128xbf16, #tpu.memory_space<vmem>>, vector<8x32xbf16>
    tpu.vector_store %arg18[%c0_114, %c64_115], %243 {strides = array<i32>} : memref<8x128xbf16, #tpu.memory_space<vmem>>, vector<8x32xbf16>,
    %245 = vector.extract_strided_slice %189 {offsets = [0, 96], sizes = [8, 32], strides = [1, 1]} : vector<8x128xbf16> to vector<8x32xbf16>
    %246 = vector.extract_strided_slice %190 {offsets = [0, 96], sizes = [8, 32], strides = [1, 1]} : vector<8x256xbf16> to vector<8x32xbf16>
    %cst_116 = arith.constant dense<0.000000e+00> : vector<8x8xf32>
    %247 = tpu.matmul %245, %246, %cst_116 {dimension_numbers = #tpu.dot_dimension_numbers<[1], [1], [0], [0], [0, 0, 1, 0], [], []>} : vector<8x32xbf16>, vector<8x32xbf16>, vector<8x8xf32> -> vector<8x8xf32>
    %cst_117 = arith.constant dense<0xFF800000> : vector<8xf32>
    %248 = vector.multi_reduction <maximumf>, %247, %cst_117 [1] : vector<8x8xf32> to vector<8xf32>
    %249 = vector.shape_cast %248 : vector<8xf32> to vector<8x1xf32>
    %250 = vector.broadcast %249 : vector<8x1xf32> to vector<8x8xf32>
    %251 = arith.subf %247, %250 : vector<8x8xf32>
    %252 = math.exp %251 : vector<8x8xf32>
    %cst_118 = arith.constant dense<0.000000e+00> : vector<8xf32>
    %253 = vector.multi_reduction <add>, %252, %cst_118 [1] : vector<8x8xf32> to vector<8xf32>
    %254 = vector.shape_cast %253 : vector<8xf32> to vector<8x1xf32>
    %255 = tpu.reciprocal %254 {approx = true} : vector<8x1xf32> -> vector<8x1xf32>
    %256 = vector.broadcast %255 : vector<8x1xf32> to vector<8x8xf32>
    %257 = arith.mulf %252, %256 : vector<8x8xf32>
    %258 = arith.truncf %257 : vector<8x8xf32> to vector<8x8xbf16>
    %259 = vector.extract_strided_slice %190 {offsets = [0, 224], sizes = [8, 32], strides = [1, 1]} : vector<8x256xbf16> to vector<8x32xbf16>
    %cst_119 = arith.constant dense<0.000000e+00> : vector<8x32xf32>
    %260 = tpu.matmul %258, %259, %cst_119 {dimension_numbers = #tpu.dot_dimension_numbers<[1], [0], [0], [1], [0, 0, 1, 1], [], []>} : vector<8x8xbf16>, vector<8x32xbf16>, vector<8x32xf32> -> vector<8x32xf32>
    %261 = arith.truncf %260 : vector<8x32xf32> to vector<8x32xbf16>
    %c0_120 = arith.constant 0 : index
    %c96_121 = arith.constant 96 : index
    %262 = vector.load %arg18[%c0_120, %c96_121] : memref<8x128xbf16, #tpu.memory_space<vmem>>, vector<8x32xbf16>
    tpu.vector_store %arg18[%c0_120, %c96_121], %261 {strides = array<i32>} : memref<8x128xbf16, #tpu.memory_space<vmem>>, vector<8x32xbf16>,
    %c0_122 = arith.constant 0 : index
    %c0_123 = arith.constant 0 : index
    %263 = vector.load %arg18[%c0_122, %c0_123] : memref<8x128xbf16, #tpu.memory_space<vmem>>, vector<8x128xbf16>
    %c1_124 = arith.constant 1 : index
    %c0_125 = arith.constant 0 : index
    %c0_126 = arith.constant 0 : index
    %264 = vector.load %arg7[%c1_124, %c0_125, %c0_126] : memref<2x128x128xbf16, #tpu.memory_space<vmem>>, vector<1x128x128xbf16>
    %265 = vector.shape_cast %264 : vector<1x128x128xbf16> to vector<128x128xbf16>
    %cst_127 = arith.constant dense<0.000000e+00> : vector<8x128xf32>
    %266 = tpu.matmul %263, %265, %cst_127 {dimension_numbers = #tpu.dot_dimension_numbers<[1], [0], [0], [1], [0, 0, 1, 1], [], []>} : vector<8x128xbf16>, vector<128x128xbf16>, vector<8x128xf32> -> vector<8x128xf32>
    %c1_128 = arith.constant 1 : index
    %c0_129 = arith.constant 0 : index
    %c0_130 = arith.constant 0 : index
    %267 = vector.load %arg8[%c1_128, %c0_129, %c0_130] : memref<2x1x128xf32, #tpu.memory_space<vmem>>, vector<1x1x128xf32>
    %268 = vector.shape_cast %267 : vector<1x1x128xf32> to vector<1x128xf32>
    %269 = vector.broadcast %268 : vector<1x128xf32> to vector<8x128xf32>
    %270 = arith.addf %266, %269 : vector<8x128xf32>
    %271 = arith.addf %173, %270 : vector<8x128xf32>
    %c1_131 = arith.constant 1 : index
    %c0_132 = arith.constant 0 : index
    %c0_133 = arith.constant 0 : index
    %272 = vector.load %arg9[%c1_131, %c0_132, %c0_133] : memref<2x1x128xf32, #tpu.memory_space<vmem>>, vector<1x1x128xf32>
    %273 = vector.shape_cast %272 : vector<1x1x128xf32> to vector<1x128xf32>
    %c1_134 = arith.constant 1 : index
    %c0_135 = arith.constant 0 : index
    %c0_136 = arith.constant 0 : index
    %274 = vector.load %arg10[%c1_134, %c0_135, %c0_136] : memref<2x1x128xf32, #tpu.memory_space<vmem>>, vector<1x1x128xf32>
    %275 = vector.shape_cast %274 : vector<1x1x128xf32> to vector<1x128xf32>
    %cst_137 = arith.constant dense<0.000000e+00> : vector<8xf32>
    %276 = vector.multi_reduction <add>, %271, %cst_137 [1] : vector<8x128xf32> to vector<8xf32>
    %277 = vector.shape_cast %276 : vector<8xf32> to vector<8x1xf32>
    %cst_138 = arith.constant 1.280000e+02 : f32
    %278 = vector.broadcast %cst_138 : f32 to vector<8x1xf32>
    %279 = arith.divf %277, %278 : vector<8x1xf32>
    %280 = vector.broadcast %279 : vector<8x1xf32> to vector<8x128xf32>
    %281 = arith.subf %271, %280 : vector<8x128xf32>
    %282 = arith.mulf %281, %281 : vector<8x128xf32>
    %cst_139 = arith.constant dense<0.000000e+00> : vector<8xf32>
    %283 = vector.multi_reduction <add>, %282, %cst_139 [1] : vector<8x128xf32> to vector<8xf32>
    %284 = vector.shape_cast %283 : vector<8xf32> to vector<8x1xf32>
    %cst_140 = arith.constant 1.280000e+02 : f32
    %285 = vector.broadcast %cst_140 : f32 to vector<8x1xf32>
    %286 = arith.divf %284, %285 : vector<8x1xf32>
    %287 = vector.broadcast %279 : vector<8x1xf32> to vector<8x128xf32>
    %288 = arith.subf %271, %287 : vector<8x128xf32>
    %cst_141 = arith.constant 9.99999974E-6 : f32
    %289 = vector.broadcast %cst_141 : f32 to vector<8x1xf32>
    %290 = arith.addf %286, %289 : vector<8x1xf32>
    %291 = math.rsqrt %290 : vector<8x1xf32>
    %292 = vector.broadcast %291 : vector<8x1xf32> to vector<8x128xf32>
    %293 = arith.mulf %288, %292 : vector<8x128xf32>
    %294 = vector.broadcast %273 : vector<1x128xf32> to vector<8x128xf32>
    %295 = arith.mulf %293, %294 : vector<8x128xf32>
    %296 = vector.broadcast %275 : vector<1x128xf32> to vector<8x128xf32>
    %297 = arith.addf %295, %296 : vector<8x128xf32>
    %298 = arith.truncf %297 : vector<8x128xf32> to vector<8x128xbf16>
    %c1_142 = arith.constant 1 : index
    %c0_143 = arith.constant 0 : index
    %c0_144 = arith.constant 0 : index
    %299 = vector.load %arg11[%c1_142, %c0_143, %c0_144] : memref<2x128x256xbf16, #tpu.memory_space<vmem>>, vector<1x128x256xbf16>
    %300 = vector.shape_cast %299 : vector<1x128x256xbf16> to vector<128x256xbf16>
    %cst_145 = arith.constant dense<0.000000e+00> : vector<8x256xf32>
    %301 = tpu.matmul %298, %300, %cst_145 {dimension_numbers = #tpu.dot_dimension_numbers<[1], [0], [0], [1], [0, 0, 1, 1], [], []>} : vector<8x128xbf16>, vector<128x256xbf16>, vector<8x256xf32> -> vector<8x256xf32>
    %c1_146 = arith.constant 1 : index
    %c0_147 = arith.constant 0 : index
    %c0_148 = arith.constant 0 : index
    %302 = vector.load %arg12[%c1_146, %c0_147, %c0_148] : memref<2x1x256xf32, #tpu.memory_space<vmem>>, vector<1x1x256xf32>
    %303 = vector.shape_cast %302 : vector<1x1x256xf32> to vector<1x256xf32>
    %304 = vector.broadcast %303 : vector<1x256xf32> to vector<8x256xf32>
    %305 = arith.addf %301, %304 : vector<8x256xf32>
    %cst_149 = arith.constant 0.000000e+00 : f32
    %306 = vector.broadcast %cst_149 : f32 to vector<8x256xf32>
    %307 = arith.maximumf %305, %306 : vector<8x256xf32>
    %308 = arith.truncf %307 : vector<8x256xf32> to vector<8x256xbf16>
    %c1_150 = arith.constant 1 : index
    %c0_151 = arith.constant 0 : index
    %c0_152 = arith.constant 0 : index
    %309 = vector.load %arg13[%c1_150, %c0_151, %c0_152] : memref<2x256x128xbf16, #tpu.memory_space<vmem>>, vector<1x256x128xbf16>
    %310 = vector.shape_cast %309 : vector<1x256x128xbf16> to vector<256x128xbf16>
    %cst_153 = arith.constant dense<0.000000e+00> : vector<8x128xf32>
    %311 = tpu.matmul %308, %310, %cst_153 {dimension_numbers = #tpu.dot_dimension_numbers<[1], [0], [0], [1], [0, 0, 1, 1], [], []>} : vector<8x256xbf16>, vector<256x128xbf16>, vector<8x128xf32> -> vector<8x128xf32>
    %c1_154 = arith.constant 1 : index
    %c0_155 = arith.constant 0 : index
    %c0_156 = arith.constant 0 : index
    %312 = vector.load %arg14[%c1_154, %c0_155, %c0_156] : memref<2x1x128xf32, #tpu.memory_space<vmem>>, vector<1x1x128xf32>
    %313 = vector.shape_cast %312 : vector<1x1x128xf32> to vector<1x128xf32>
    %314 = vector.broadcast %313 : vector<1x128xf32> to vector<8x128xf32>
    %315 = arith.addf %311, %314 : vector<8x128xf32>
    %316 = arith.addf %297, %315 : vector<8x128xf32>
    %c1_157 = arith.constant 1 : index
    %c0_158 = arith.constant 0 : index
    %c0_159 = arith.constant 0 : index
    %317 = vector.load %arg15[%c1_157, %c0_158, %c0_159] : memref<2x1x128xf32, #tpu.memory_space<vmem>>, vector<1x1x128xf32>
    %318 = vector.shape_cast %317 : vector<1x1x128xf32> to vector<1x128xf32>
    %c1_160 = arith.constant 1 : index
    %c0_161 = arith.constant 0 : index
    %c0_162 = arith.constant 0 : index
    %319 = vector.load %arg16[%c1_160, %c0_161, %c0_162] : memref<2x1x128xf32, #tpu.memory_space<vmem>>, vector<1x1x128xf32>
    %320 = vector.shape_cast %319 : vector<1x1x128xf32> to vector<1x128xf32>
    %cst_163 = arith.constant dense<0.000000e+00> : vector<8xf32>
    %321 = vector.multi_reduction <add>, %316, %cst_163 [1] : vector<8x128xf32> to vector<8xf32>
    %322 = vector.shape_cast %321 : vector<8xf32> to vector<8x1xf32>
    %cst_164 = arith.constant 1.280000e+02 : f32
    %323 = vector.broadcast %cst_164 : f32 to vector<8x1xf32>
    %324 = arith.divf %322, %323 : vector<8x1xf32>
    %325 = vector.broadcast %324 : vector<8x1xf32> to vector<8x128xf32>
    %326 = arith.subf %316, %325 : vector<8x128xf32>
    %327 = arith.mulf %326, %326 : vector<8x128xf32>
    %cst_165 = arith.constant dense<0.000000e+00> : vector<8xf32>
    %328 = vector.multi_reduction <add>, %327, %cst_165 [1] : vector<8x128xf32> to vector<8xf32>
    %329 = vector.shape_cast %328 : vector<8xf32> to vector<8x1xf32>
    %cst_166 = arith.constant 1.280000e+02 : f32
    %330 = vector.broadcast %cst_166 : f32 to vector<8x1xf32>
    %331 = arith.divf %329, %330 : vector<8x1xf32>
    %332 = vector.broadcast %324 : vector<8x1xf32> to vector<8x128xf32>
    %333 = arith.subf %316, %332 : vector<8x128xf32>
    %cst_167 = arith.constant 9.99999974E-6 : f32
    %334 = vector.broadcast %cst_167 : f32 to vector<8x1xf32>
    %335 = arith.addf %331, %334 : vector<8x1xf32>
    %336 = math.rsqrt %335 : vector<8x1xf32>
    %337 = vector.broadcast %336 : vector<8x1xf32> to vector<8x128xf32>
    %338 = arith.mulf %333, %337 : vector<8x128xf32>
    %339 = vector.broadcast %318 : vector<1x128xf32> to vector<8x128xf32>
    %340 = arith.mulf %338, %339 : vector<8x128xf32>
    %341 = vector.broadcast %320 : vector<1x128xf32> to vector<8x128xf32>
    %342 = arith.addf %340, %341 : vector<8x128xf32>
    %c0_168 = arith.constant 0 : index
    %c0_169 = arith.constant 0 : index
    %c0_170 = arith.constant 0 : index
    %343 = vector.load %arg17[%c0_168, %c0_169, %c0_170] : memref<1x8x128xf32, #tpu.memory_space<vmem>>, vector<1x8x128xf32>
    %344 = vector.shape_cast %343 : vector<1x8x128xf32> to vector<8x128xf32>
    %345 = vector.shape_cast %342 : vector<8x128xf32> to vector<1x8x128xf32>
    tpu.vector_store %arg17[%c0_168, %c0_169, %c0_170], %345 {strides = array<i32>} : memref<1x8x128xf32, #tpu.memory_space<vmem>>, vector<1x8x128xf32>,
    return
  }
  func.func @transform_0(%arg0: i32) -> (i32, i32, i32) {
    %c0_i32 = arith.constant 0 : i32
    %c0_i32_0 = arith.constant 0 : i32
    %c0_i32_1 = arith.constant 0 : i32
    return %arg0, %c0_i32, %c0_i32_0 : i32, i32, i32
  }
  func.func @transform_1(%arg0: i32) -> (i32, i32, i32) {
    %c0_i32 = arith.constant 0 : i32
    %c0_i32_0 = arith.constant 0 : i32
    %c0_i32_1 = arith.constant 0 : i32
    return %arg0, %c0_i32, %c0_i32_0 : i32, i32, i32
  }
  func.func @transform_2(%arg0: i32) -> (i32, i32, i32) {
    %c0_i32 = arith.constant 0 : i32
    %c0_i32_0 = arith.constant 0 : i32
    %c0_i32_1 = arith.constant 0 : i32
    %c0_i32_2 = arith.constant 0 : i32
    return %c0_i32, %c0_i32_0, %c0_i32_1 : i32, i32, i32
  }
  func.func @transform_3(%arg0: i32) -> (i32, i32, i32) {
    %c0_i32 = arith.constant 0 : i32
    %c0_i32_0 = arith.constant 0 : i32
    %c0_i32_1 = arith.constant 0 : i32
    %c0_i32_2 = arith.constant 0 : i32
    return %c0_i32, %c0_i32_0, %c0_i32_1 : i32, i32, i32
  }
  func.func @transform_4(%arg0: i32) -> (i32, i32, i32) {
    %c0_i32 = arith.constant 0 : i32
    %c0_i32_0 = arith.constant 0 : i32
    %c0_i32_1 = arith.constant 0 : i32
    %c0_i32_2 = arith.constant 0 : i32
    return %c0_i32, %c0_i32_0, %c0_i32_1 : i32, i32, i32
  }
  func.func @transform_5(%arg0: i32) -> (i32, i32, i32) {
    %c0_i32 = arith.constant 0 : i32
    %c0_i32_0 = arith.constant 0 : i32
    %c0_i32_1 = arith.constant 0 : i32
    %c0_i32_2 = arith.constant 0 : i32
    return %c0_i32, %c0_i32_0, %c0_i32_1 : i32, i32, i32
  }
  func.func @transform_6(%arg0: i32) -> (i32, i32, i32) {
    %c0_i32 = arith.constant 0 : i32
    %c0_i32_0 = arith.constant 0 : i32
    %c0_i32_1 = arith.constant 0 : i32
    %c0_i32_2 = arith.constant 0 : i32
    return %c0_i32, %c0_i32_0, %c0_i32_1 : i32, i32, i32
  }
  func.func @transform_7(%arg0: i32) -> (i32, i32, i32) {
    %c0_i32 = arith.constant 0 : i32
    %c0_i32_0 = arith.constant 0 : i32
    %c0_i32_1 = arith.constant 0 : i32
    %c0_i32_2 = arith.constant 0 : i32
    return %c0_i32, %c0_i32_0, %c0_i32_1 : i32, i32, i32
  }
  func.func @transform_8(%arg0: i32) -> (i32, i32, i32) {
    %c0_i32 = arith.constant 0 : i32
    %c0_i32_0 = arith.constant 0 : i32
    %c0_i32_1 = arith.constant 0 : i32
    %c0_i32_2 = arith.constant 0 : i32
    return %c0_i32, %c0_i32_0, %c0_i32_1 : i32, i32, i32
  }
  func.func @transform_9(%arg0: i32) -> (i32, i32, i32) {
    %c0_i32 = arith.constant 0 : i32
    %c0_i32_0 = arith.constant 0 : i32
    %c0_i32_1 = arith.constant 0 : i32
    %c0_i32_2 = arith.constant 0 : i32
    return %c0_i32, %c0_i32_0, %c0_i32_1 : i32, i32, i32
  }
  func.func @transform_10(%arg0: i32) -> (i32, i32, i32) {
    %c0_i32 = arith.constant 0 : i32
    %c0_i32_0 = arith.constant 0 : i32
    %c0_i32_1 = arith.constant 0 : i32
    %c0_i32_2 = arith.constant 0 : i32
    return %c0_i32, %c0_i32_0, %c0_i32_1 : i32, i32, i32
  }
  func.func @transform_11(%arg0: i32) -> (i32, i32, i32) {
    %c0_i32 = arith.constant 0 : i32
    %c0_i32_0 = arith.constant 0 : i32
    %c0_i32_1 = arith.constant 0 : i32
    %c0_i32_2 = arith.constant 0 : i32
    return %c0_i32, %c0_i32_0, %c0_i32_1 : i32, i32, i32
  }
  func.func @transform_12(%arg0: i32) -> (i32, i32, i32) {
    %c0_i32 = arith.constant 0 : i32
    %c0_i32_0 = arith.constant 0 : i32
    %c0_i32_1 = arith.constant 0 : i32
    %c0_i32_2 = arith.constant 0 : i32
    return %c0_i32, %c0_i32_0, %c0_i32_1 : i32, i32, i32
  }
  func.func @transform_13(%arg0: i32) -> (i32, i32, i32) {
    %c0_i32 = arith.constant 0 : i32
    %c0_i32_0 = arith.constant 0 : i32
    %c0_i32_1 = arith.constant 0 : i32
    %c0_i32_2 = arith.constant 0 : i32
    return %c0_i32, %c0_i32_0, %c0_i32_1 : i32, i32, i32
  }
  func.func @transform_14(%arg0: i32) -> (i32, i32, i32) {
    %c0_i32 = arith.constant 0 : i32
    %c0_i32_0 = arith.constant 0 : i32
    %c0_i32_1 = arith.constant 0 : i32
    %c0_i32_2 = arith.constant 0 : i32
    return %c0_i32, %c0_i32_0, %c0_i32_1 : i32, i32, i32
  }
  func.func @transform_15(%arg0: i32) -> (i32, i32, i32) {
    %c0_i32 = arith.constant 0 : i32
    %c0_i32_0 = arith.constant 0 : i32
    %c0_i32_1 = arith.constant 0 : i32
    %c0_i32_2 = arith.constant 0 : i32
    return %c0_i32, %c0_i32_0, %c0_i32_1 : i32, i32, i32
  }
  func.func @transform_16(%arg0: i32) -> (i32, i32, i32) {
    %c0_i32 = arith.constant 0 : i32
    %c0_i32_0 = arith.constant 0 : i32
    %c0_i32_1 = arith.constant 0 : i32
    return %arg0, %c0_i32, %c0_i32_0 : i32, i32, i32
  }
}

</mosaic_0001>

<llo_original>
// kernel: tpu_custom_call.1
$region0: #{tpu_custom_call.1}
  #allocation0 [shape = 'u32[]', space=smem, size = 0x4, offset = 0x4, fixed_abs, tag = 'smem constant byte address 0x4 - core index']
  #allocation1 [shape = 'u32[144,128]{1,0:T(1,128)}', space=vmem, size = 0x12000, scoped, tag = 'internal scratch']
  #allocation2 [shape = 'bf16[8,128]{1,0:T(8,128)(2,1)}', space=vmem, size = 0x800, scoped, tag = 'scratch operand']
  %s0 = inlined_call_operand.hbm [shape: f32[2,8,128], index: 0, kind: input, shape index: {}]
  %s1 = inlined_call_operand.hbm [shape: f32[2,8,128], index: 1, kind: input, shape index: {}]
  %s2 = inlined_call_operand.hbm [shape: bf16[2,128,128], index: 2, kind: input, shape index: {}]
  %s3 = inlined_call_operand.vmem [shape: f32[2,1,128], index: 3, kind: input, shape index: {}]
  %s4 = inlined_call_operand.hbm [shape: bf16[2,128,256], index: 4, kind: input, shape index: {}]
  %s5 = inlined_call_operand.vmem [shape: f32[2,1,256], index: 5, kind: input, shape index: {}]
  %s6 = inlined_call_operand.hbm [shape: bf16[2,128,128], index: 6, kind: input, shape index: {}]
  %s7 = inlined_call_operand.vmem [shape: f32[2,1,128], index: 7, kind: input, shape index: {}]
  %s8 = inlined_call_operand.vmem [shape: f32[2,1,128], index: 8, kind: input, shape index: {}]
  %s9 = inlined_call_operand.vmem [shape: f32[2,1,128], index: 9, kind: input, shape index: {}]
  %s10 = inlined_call_operand.hbm [shape: bf16[2,128,256], index: 10, kind: input, shape index: {}]
  %s11 = inlined_call_operand.vmem [shape: f32[2,1,256], index: 11, kind: input, shape index: {}]
  %s12 = inlined_call_operand.hbm [shape: bf16[2,256,128], index: 12, kind: input, shape index: {}]
  %s13 = inlined_call_operand.vmem [shape: f32[2,1,128], index: 13, kind: input, shape index: {}]
  %s14 = inlined_call_operand.vmem [shape: f32[2,1,128], index: 14, kind: input, shape index: {}]
  %s15 = inlined_call_operand.vmem [shape: f32[2,1,128], index: 15, kind: input, shape index: {}]
  %s16 = inlined_call_operand.hbm [shape: f32[2,8,128], index: 16, kind: output, shape index: {}]
  %s17 = sld [smem:[#allocation0]]
  $region125: #{tpu_custom_call.1} parent=0
    _
  %s19 = ssub.s32 1, %s17
  %s20 = scalar_select 0, %s19, %s17
  $region1: #{tpu_custom_call.1} parent=0
    #allocation3 [shape = 'u8[8192]{0}', space=vmem, size = 0x2000, scoped, tag = 'input window, operand 0']
    #allocation4 [shape = 's32[2]{0}', space=sflag, size = 0x8, scoped, tag = 'scoped memory for tpu_custom_call.1']
    #allocation5 [shape = 's32[2]{0}', space=sflag, size = 0x8, scoped, tag = 'scoped memory for tpu_custom_call.1']
    #allocation6 [shape = 'u8[8192]{0}', space=vmem, size = 0x2000, scoped, tag = 'input window, operand 1']
    #allocation7 [shape = 's32[2]{0}', space=sflag, size = 0x8, scoped, tag = 'scoped memory for tpu_custom_call.1']
    #allocation8 [shape = 'u8[65536]{0}', space=vmem, size = 0x10000, scoped, tag = 'input window, operand 2, single buffered']
    #allocation9 [shape = 'u8[131072]{0}', space=vmem, size = 0x20000, scoped, tag = 'input window, operand 4, single buffered']
    #allocation10 [shape = 's32[1]{0}', space=sflag, size = 0x4, scoped, tag = 'scoped memory for tpu_custom_call.1']
    #allocation11 [shape = 'u8[65536]{0}', space=vmem, size = 0x10000, scoped, tag = 'input window, operand 6, single buffered']
    #allocation12 [shape = 'u8[131072]{0}', space=vmem, size = 0x20000, scoped, tag = 'input window, operand 10, single buffered']
    #allocation13 [shape = 's32[1]{0}', space=sflag, size = 0x4, scoped, tag = 'scoped memory for tpu_custom_call.1']
    #allocation14 [shape = 'u8[131072]{0}', space=vmem, size = 0x20000, scoped, tag = 'input window, operand 12, single buffered']
    #allocation15 [shape = 'u8[8192]{0}', space=vmem, size = 0x2000, scoped, tag = 'output window, operand 0']
    %21 = vsyncpa [#allocation4], 0
    %s22 = scalar_lea.sflag [#allocation4], 1
    %23 = vsyncpa %s22, 0
    %24 = vsyncpa [#allocation7], 0
    %s25 = scalar_lea.sflag [#allocation7], 1
    %26 = vsyncpa %s25, 0
    %27 = vsyncpa [#allocation10], 0
    %28 = vsyncpa [#allocation13], 0
    %29 = vsyncpa [#allocation5], 0
    %s30 = scalar_lea.sflag [#allocation5], 1
    %31 = vsyncpa %s30, 0
    loop: start=0, step=1, limit=4
    $region2: #{tpu_custom_call.1} parent=1 // loop_pre_header
      _
    $region3: #{tpu_custom_call.1} parent=1 // loop_header
      %s33 = sphi 0, %s37
      %p34 = scmp.ge.s32.totalorder %s33, 4
      %s43 = sphi 0, %s45
      %s46 = sphi 0, %s43
      %s47 = sphi 0, %s46
      %s63 = sphi 0, %s47
      %s69 = sphi 0, %s71
      %s72 = sphi 0, %s69
      %s73 = sphi 0, %s72
      %s89 = sphi 0, %s73
      %s93 = sphi 0, %s93
      %s95 = sphi 0, %s93
      %s96 = sphi 0, %s95
      %s110 = sphi 0, %s96
      %s114 = sphi 0, %s114
      %s116 = sphi 0, %s114
      %s117 = sphi 0, %s116
      %s131 = sphi 0, %s117
      %s135 = sphi 0, %s135
      %s137 = sphi 0, %s135
      %s138 = sphi 0, %s137
      %s152 = sphi 0, %s138
      %s156 = sphi 0, %s156
      %s158 = sphi 0, %s156
      %s159 = sphi 0, %s158
      %s173 = sphi 0, %s159
      %s177 = sphi 0, %s177
      %s179 = sphi 0, %s177
      %s180 = sphi 0, %s179
      %s194 = sphi 0, %s180
      %s198 = sphi 0, %s198
      %s200 = sphi 0, %s198
      %s201 = sphi 0, %s200
      %s215 = sphi 0, %s201
      %s219 = sphi 0, %s219
      %s221 = sphi 0, %s219
      %s222 = sphi 0, %s221
      %s236 = sphi 0, %s222
      %s240 = sphi 0, %s240
      %s242 = sphi 0, %s240
      %s243 = sphi 0, %s242
      %s257 = sphi 0, %s243
      %s261 = sphi 0, %s261
      %s263 = sphi 0, %s261
      %s264 = sphi 0, %s263
      %s278 = sphi 0, %s264
      %s282 = sphi 0, %s282
      %s284 = sphi 0, %s282
      %s285 = sphi 0, %s284
      %s299 = sphi 0, %s285
      %s303 = sphi 0, %s303
      %s305 = sphi 0, %s303
      %s306 = sphi 0, %s305
      %s320 = sphi 0, %s306
      %s324 = sphi 0, %s324
      %s326 = sphi 0, %s324
      %s327 = sphi 0, %s326
      %s341 = sphi 0, %s327
      %s345 = sphi 0, %s345
      %s347 = sphi 0, %s345
      %s348 = sphi 0, %s347
      %s362 = sphi 0, %s348
      %s366 = sphi 0, %s366
      %s368 = sphi 0, %s366
      %s369 = sphi 0, %s368
      %s383 = sphi 0, %s369
      %s389 = sphi 0, %s391
      %s392 = sphi 0, %s389
      %s393 = sphi 0, %s392
      %s409 = sphi 0, %s393
    $region4: #{tpu_custom_call.1} parent=1 // loop_header_branch
      %36 = sbr.rel (%p34) target = $region8
    $region5: #{tpu_custom_call.1} parent=1 // loop_body
      %s38 = ssub.s32 %s33, 1
      %s39 = ssub.s32 %s33, 2
      %s40 = sadd.s32 %s33, 1
      %s41 = ssub.s32 %s33, %s40
      %p42 = scmp.eq.s32.totalorder %s41, 0
      %s44 = sadd.s32 %s43, 1
      %s45 = scalar_select %p42, %s43, %s44
      %p48 = pneg %p42
      %p49 = scmp.eq.s32.totalorder %s33, 1
      %p50 = por %p48, %p49
      %p51 = scmp.ne.s32.totalorder %s43, %s46
      %p52 = scmp.eq.s32.totalorder %s33, 0
      %p53 = por %p51, %p52
      %p54 = scmp.ne.s32.totalorder %s43, %s46
      %p55 = scmp.eq.s32.totalorder %s38, 1
      %p56 = por %p54, %p55
      %p57 = scmp.ne.s32.totalorder %s46, %s47
      %p58 = scmp.eq.s32.totalorder %s38, 0
      %p59 = por %p57, %p58
      %p60 = scmp.ne.s32.totalorder %s46, %s47
      %p61 = scmp.eq.s32.totalorder %s39, 1
      %p62 = por %p60, %p61
      %p64 = scmp.ne.s32.totalorder %s47, %s63
      %p65 = scmp.eq.s32.totalorder %s39, 0
      %p66 = por %p64, %p65
      %s67 = ssub.s32 %s33, %s40
      %p68 = scmp.eq.s32.totalorder %s67, 0
      %s70 = sadd.s32 %s69, 1
      %s71 = scalar_select %p68, %s69, %s70
      %p74 = pneg %p68
      %p75 = scmp.eq.s32.totalorder %s33, 1
      %p76 = por %p74, %p75
      %p77 = scmp.ne.s32.totalorder %s69, %s72
      %p78 = scmp.eq.s32.totalorder %s33, 0
      %p79 = por %p77, %p78
      %p80 = scmp.ne.s32.totalorder %s69, %s72
      %p81 = scmp.eq.s32.totalorder %s38, 1
      %p82 = por %p80, %p81
      %p83 = scmp.ne.s32.totalorder %s72, %s73
      %p84 = scmp.eq.s32.totalorder %s38, 0
      %p85 = por %p83, %p84
      %p86 = scmp.ne.s32.totalorder %s72, %s73
      %p87 = scmp.eq.s32.totalorder %s39, 1
      %p88 = por %p86, %p87
      %p90 = scmp.ne.s32.totalorder %s73, %s89
      %p91 = scmp.eq.s32.totalorder %s39, 0
      %p92 = por %p90, %p91
      %s94 = sadd.s32 %s93, 1
      %p97 = scmp.eq.s32.totalorder %s33, 1
      %p98 = scmp.ne.s32.totalorder %s93, %s95
      %p99 = scmp.eq.s32.totalorder %s33, 0
      %p100 = por %p98, %p99
      %p101 = scmp.ne.s32.totalorder %s93, %s95
      %p102 = scmp.eq.s32.totalorder %s38, 1
      %p103 = por %p101, %p102
      %p104 = scmp.ne.s32.totalorder %s95, %s96
      %p105 = scmp.eq.s32.totalorder %s38, 0
      %p106 = por %p104, %p105
      %p107 = scmp.ne.s32.totalorder %s95, %s96
      %p108 = scmp.eq.s32.totalorder %s39, 1
      %p109 = por %p107, %p108
      %p111 = scmp.ne.s32.totalorder %s96, %s110
      %p112 = scmp.eq.s32.totalorder %s39, 0
      %p113 = por %p111, %p112
      %s115 = sadd.s32 %s114, 1
      %p118 = scmp.eq.s32.totalorder %s33, 1
      %p119 = scmp.ne.s32.totalorder %s114, %s116
      %p120 = scmp.eq.s32.totalorder %s33, 0
      %p121 = por %p119, %p120
      %p122 = scmp.ne.s32.totalorder %s114, %s116
      %p123 = scmp.eq.s32.totalorder %s38, 1
      %p124 = por %p122, %p123
      %p125 = scmp.ne.s32.totalorder %s116, %s117
      %p126 = scmp.eq.s32.totalorder %s38, 0
      %p127 = por %p125, %p126
      %p128 = scmp.ne.s32.totalorder %s116, %s117
      %p129 = scmp.eq.s32.totalorder %s39, 1
      %p130 = por %p128, %p129
      %p132 = scmp.ne.s32.totalorder %s117, %s131
      %p133 = scmp.eq.s32.totalorder %s39, 0
      %p134 = por %p132, %p133
      %s136 = sadd.s32 %s135, 1
      %p139 = scmp.eq.s32.totalorder %s33, 1
      %p140 = scmp.ne.s32.totalorder %s135, %s137
      %p141 = scmp.eq.s32.totalorder %s33, 0
      %p142 = por %p140, %p141
      %p143 = scmp.ne.s32.totalorder %s135, %s137
      %p144 = scmp.eq.s32.totalorder %s38, 1
      %p145 = por %p143, %p144
      %p146 = scmp.ne.s32.totalorder %s137, %s138
      %p147 = scmp.eq.s32.totalorder %s38, 0
      %p148 = por %p146, %p147
      %p149 = scmp.ne.s32.totalorder %s137, %s138
      %p150 = scmp.eq.s32.totalorder %s39, 1
      %p151 = por %p149, %p150
      %p153 = scmp.ne.s32.totalorder %s138, %s152
      %p154 = scmp.eq.s32.totalorder %s39, 0
      %p155 = por %p153, %p154
      %s157 = sadd.s32 %s156, 1
      %p160 = scmp.eq.s32.totalorder %s33, 1
      %p161 = scmp.ne.s32.totalorder %s156, %s158
      %p162 = scmp.eq.s32.totalorder %s33, 0
      %p163 = por %p161, %p162
      %p164 = scmp.ne.s32.totalorder %s156, %s158
      %p165 = scmp.eq.s32.totalorder %s38, 1
      %p166 = por %p164, %p165
      %p167 = scmp.ne.s32.totalorder %s158, %s159
      %p168 = scmp.eq.s32.totalorder %s38, 0
      %p169 = por %p167, %p168
      %p170 = scmp.ne.s32.totalorder %s158, %s159
      %p171 = scmp.eq.s32.totalorder %s39, 1
      %p172 = por %p170, %p171
      %p174 = scmp.ne.s32.totalorder %s159, %s173
      %p175 = scmp.eq.s32.totalorder %s39, 0
      %p176 = por %p174, %p175
      %s178 = sadd.s32 %s177, 1
      %p181 = scmp.eq.s32.totalorder %s33, 1
      %p182 = scmp.ne.s32.totalorder %s177, %s179
      %p183 = scmp.eq.s32.totalorder %s33, 0
      %p184 = por %p182, %p183
      %p185 = scmp.ne.s32.totalorder %s177, %s179
      %p186 = scmp.eq.s32.totalorder %s38, 1
      %p187 = por %p185, %p186
      %p188 = scmp.ne.s32.totalorder %s179, %s180
      %p189 = scmp.eq.s32.totalorder %s38, 0
      %p190 = por %p188, %p189
      %p191 = scmp.ne.s32.totalorder %s179, %s180
      %p192 = scmp.eq.s32.totalorder %s39, 1
      %p193 = por %p191, %p192
      %p195 = scmp.ne.s32.totalorder %s180, %s194
      %p196 = scmp.eq.s32.totalorder %s39, 0
      %p197 = por %p195, %p196
      %s199 = sadd.s32 %s198, 1
      %p202 = scmp.eq.s32.totalorder %s33, 1
      %p203 = scmp.ne.s32.totalorder %s198, %s200
      %p204 = scmp.eq.s32.totalorder %s33, 0
      %p205 = por %p203, %p204
      %p206 = scmp.ne.s32.totalorder %s198, %s200
      %p207 = scmp.eq.s32.totalorder %s38, 1
      %p208 = por %p206, %p207
      %p209 = scmp.ne.s32.totalorder %s200, %s201
      %p210 = scmp.eq.s32.totalorder %s38, 0
      %p211 = por %p209, %p210
      %p212 = scmp.ne.s32.totalorder %s200, %s201
      %p213 = scmp.eq.s32.totalorder %s39, 1
      %p214 = por %p212, %p213
      %p216 = scmp.ne.s32.totalorder %s201, %s215
      %p217 = scmp.eq.s32.totalorder %s39, 0
      %p218 = por %p216, %p217
      %s220 = sadd.s32 %s219, 1
      %p223 = scmp.eq.s32.totalorder %s33, 1
      %p224 = scmp.ne.s32.totalorder %s219, %s221
      %p225 = scmp.eq.s32.totalorder %s33, 0
      %p226 = por %p224, %p225
      %p227 = scmp.ne.s32.totalorder %s219, %s221
      %p228 = scmp.eq.s32.totalorder %s38, 1
      %p229 = por %p227, %p228
      %p230 = scmp.ne.s32.totalorder %s221, %s222
      %p231 = scmp.eq.s32.totalorder %s38, 0
      %p232 = por %p230, %p231
      %p233 = scmp.ne.s32.totalorder %s221, %s222
      %p234 = scmp.eq.s32.totalorder %s39, 1
      %p235 = por %p233, %p234
      %p237 = scmp.ne.s32.totalorder %s222, %s236
      %p238 = scmp.eq.s32.totalorder %s39, 0
      %p239 = por %p237, %p238
      %s241 = sadd.s32 %s240, 1
      %p244 = scmp.eq.s32.totalorder %s33, 1
      %p245 = scmp.ne.s32.totalorder %s240, %s242
      %p246 = scmp.eq.s32.totalorder %s33, 0
      %p247 = por %p245, %p246
      %p248 = scmp.ne.s32.totalorder %s240, %s242
      %p249 = scmp.eq.s32.totalorder %s38, 1
      %p250 = por %p248, %p249
      %p251 = scmp.ne.s32.totalorder %s242, %s243
      %p252 = scmp.eq.s32.totalorder %s38, 0
      %p253 = por %p251, %p252
      %p254 = scmp.ne.s32.totalorder %s242, %s243
      %p255 = scmp.eq.s32.totalorder %s39, 1
      %p256 = por %p254, %p255
      %p258 = scmp.ne.s32.totalorder %s243, %s257
      %p259 = scmp.eq.s32.totalorder %s39, 0
      %p260 = por %p258, %p259
      %s262 = sadd.s32 %s261, 1
      %p265 = scmp.eq.s32.totalorder %s33, 1
      %p266 = scmp.ne.s32.totalorder %s261, %s263
      %p267 = scmp.eq.s32.totalorder %s33, 0
      %p268 = por %p266, %p267
      %p269 = scmp.ne.s32.totalorder %s261, %s263
      %p270 = scmp.eq.s32.totalorder %s38, 1
      %p271 = por %p269, %p270
      %p272 = scmp.ne.s32.totalorder %s263, %s264
      %p273 = scmp.eq.s32.totalorder %s38, 0
      %p274 = por %p272, %p273
      %p275 = scmp.ne.s32.totalorder %s263, %s264
      %p276 = scmp.eq.s32.totalorder %s39, 1
      %p277 = por %p275, %p276
      %p279 = scmp.ne.s32.totalorder %s264, %s278
      %p280 = scmp.eq.s32.totalorder %s39, 0
      %p281 = por %p279, %p280
      %s283 = sadd.s32 %s282, 1
      %p286 = scmp.eq.s32.totalorder %s33, 1
      %p287 = scmp.ne.s32.totalorder %s282, %s284
      %p288 = scmp.eq.s32.totalorder %s33, 0
      %p289 = por %p287, %p288
      %p290 = scmp.ne.s32.totalorder %s282, %s284
      %p291 = scmp.eq.s32.totalorder %s38, 1
      %p292 = por %p290, %p291
      %p293 = scmp.ne.s32.totalorder %s284, %s285
      %p294 = scmp.eq.s32.totalorder %s38, 0
      %p295 = por %p293, %p294
      %p296 = scmp.ne.s32.totalorder %s284, %s285
      %p297 = scmp.eq.s32.totalorder %s39, 1
      %p298 = por %p296, %p297
      %p300 = scmp.ne.s32.totalorder %s285, %s299
      %p301 = scmp.eq.s32.totalorder %s39, 0
      %p302 = por %p300, %p301
      %s304 = sadd.s32 %s303, 1
      %p307 = scmp.eq.s32.totalorder %s33, 1
      %p308 = scmp.ne.s32.totalorder %s303, %s305
      %p309 = scmp.eq.s32.totalorder %s33, 0
      %p310 = por %p308, %p309
      %p311 = scmp.ne.s32.totalorder %s303, %s305
      %p312 = scmp.eq.s32.totalorder %s38, 1
      %p313 = por %p311, %p312
      %p314 = scmp.ne.s32.totalorder %s305, %s306
      %p315 = scmp.eq.s32.totalorder %s38, 0
      %p316 = por %p314, %p315
      %p317 = scmp.ne.s32.totalorder %s305, %s306
      %p318 = scmp.eq.s32.totalorder %s39, 1
      %p319 = por %p317, %p318
      %p321 = scmp.ne.s32.totalorder %s306, %s320
      %p322 = scmp.eq.s32.totalorder %s39, 0
      %p323 = por %p321, %p322
      %s325 = sadd.s32 %s324, 1
      %p328 = scmp.eq.s32.totalorder %s33, 1
      %p329 = scmp.ne.s32.totalorder %s324, %s326
      %p330 = scmp.eq.s32.totalorder %s33, 0
      %p331 = por %p329, %p330
      %p332 = scmp.ne.s32.totalorder %s324, %s326
      %p333 = scmp.eq.s32.totalorder %s38, 1
      %p334 = por %p332, %p333
      %p335 = scmp.ne.s32.totalorder %s326, %s327
      %p336 = scmp.eq.s32.totalorder %s38, 0
      %p337 = por %p335, %p336
      %p338 = scmp.ne.s32.totalorder %s326, %s327
      %p339 = scmp.eq.s32.totalorder %s39, 1
      %p340 = por %p338, %p339
      %p342 = scmp.ne.s32.totalorder %s327, %s341
      %p343 = scmp.eq.s32.totalorder %s39, 0
      %p344 = por %p342, %p343
      %s346 = sadd.s32 %s345, 1
      %p349 = scmp.eq.s32.totalorder %s33, 1
      %p350 = scmp.ne.s32.totalorder %s345, %s347
      %p351 = scmp.eq.s32.totalorder %s33, 0
      %p352 = por %p350, %p351
      %p353 = scmp.ne.s32.totalorder %s345, %s347
      %p354 = scmp.eq.s32.totalorder %s38, 1
      %p355 = por %p353, %p354
      %p356 = scmp.ne.s32.totalorder %s347, %s348
      %p357 = scmp.eq.s32.totalorder %s38, 0
      %p358 = por %p356, %p357
      %p359 = scmp.ne.s32.totalorder %s347, %s348
      %p360 = scmp.eq.s32.totalorder %s39, 1
      %p361 = por %p359, %p360
      %p363 = scmp.ne.s32.totalorder %s348, %s362
      %p364 = scmp.eq.s32.totalorder %s39, 0
      %p365 = por %p363, %p364
      %s367 = sadd.s32 %s366, 1
      %p370 = scmp.eq.s32.totalorder %s33, 1
      %p371 = scmp.ne.s32.totalorder %s366, %s368
      %p372 = scmp.eq.s32.totalorder %s33, 0
      %p373 = por %p371, %p372
      %p374 = scmp.ne.s32.totalorder %s366, %s368
      %p375 = scmp.eq.s32.totalorder %s38, 1
      %p376 = por %p374, %p375
      %p377 = scmp.ne.s32.totalorder %s368, %s369
      %p378 = scmp.eq.s32.totalorder %s38, 0
      %p379 = por %p377, %p378
      %p380 = scmp.ne.s32.totalorder %s368, %s369
      %p381 = scmp.eq.s32.totalorder %s39, 1
      %p382 = por %p380, %p381
      %p384 = scmp.ne.s32.totalorder %s369, %s383
      %p385 = scmp.eq.s32.totalorder %s39, 0
      %p386 = por %p384, %p385
      %s387 = ssub.s32 %s33, %s40
      %p388 = scmp.eq.s32.totalorder %s387, 0
      %s390 = sadd.s32 %s389, 1
      %s391 = scalar_select %p388, %s389, %s390
      %p394 = pneg %p388
      %p395 = scmp.eq.s32.totalorder %s33, 1
      %p396 = por %p394, %p395
      %p397 = scmp.ne.s32.totalorder %s389, %s392
      %p398 = scmp.eq.s32.totalorder %s33, 0
      %p399 = por %p397, %p398
      %p400 = scmp.ne.s32.totalorder %s389, %s392
      %p401 = scmp.eq.s32.totalorder %s38, 1
      %p402 = por %p400, %p401
      %p403 = scmp.ne.s32.totalorder %s392, %s393
      %p404 = scmp.eq.s32.totalorder %s38, 0
      %p405 = por %p403, %p404
      %p406 = scmp.ne.s32.totalorder %s392, %s393
      %p407 = scmp.eq.s32.totalorder %s39, 1
      %p408 = por %p406, %p407
      %p410 = scmp.ne.s32.totalorder %s393, %s409
      %p411 = scmp.eq.s32.totalorder %s39, 0
      %p412 = por %p410, %p411
      %p413 = scmp.le.s32.totalorder 1, %s33
      %p414 = scmp.lt.s32.totalorder %s33, 3
      %p415 = pnand %p413, %p414
      %p416 = pneg %p415
      // Predicated region
      $region9: #{tpu_custom_call.1} parent=5 // pred_check
        _
      $region10: #{tpu_custom_call.1} parent=5 // pred_check_branch
        %418 = sbr.rel (%p415) target = $region12
      $region11: #{tpu_custom_call.1} parent=5 // pred_region
        %s419 = ssub.s32 %s33, 1
        // Predicated region
        $region13: #{tpu_custom_call.1} parent=11 // pred_check
          %p420 = pneg %p106
        $region14: #{tpu_custom_call.1} parent=11 // pred_check_branch
          %422 = sbr.rel (%p420) target = $region16
        $region15: #{tpu_custom_call.1} parent=11 // pred_region
          %s424 = ssub.s32 2048, 2048
          %425 = vsyncadd [#allocation7], %s424
          %s426 = sshll.u32 [#allocation8], 4
          %s427 = int_to_ptr.vmem [resolvable:$true] %s426
          %432 = dma.hbm_to_vmem [thread:$0]  %s2, 2048, %s427, [#allocation7], 64, 64, 4
        $region16: #{tpu_custom_call.1} parent=11 // pred_fallthru
          _
        // Predicated region
        $region17: #{tpu_custom_call.1} parent=11 // pred_check
          %p433 = pneg %p127
        $region18: #{tpu_custom_call.1} parent=11 // pred_check_branch
          %435 = sbr.rel (%p433) target = $region20
        $region19: #{tpu_custom_call.1} parent=11 // pred_region
          _
        $region20: #{tpu_custom_call.1} parent=11 // pred_fallthru
          _
        // Predicated region
        $region21: #{tpu_custom_call.1} parent=11 // pred_check
          %p436 = pneg %p148
        $region22: #{tpu_custom_call.1} parent=11 // pred_check_branch
          %438 = sbr.rel (%p436) target = $region24
        $region23: #{tpu_custom_call.1} parent=11 // pred_region
          %s440 = ssub.s32 4096, 4096
          %441 = vsyncadd [#allocation10], %s440
          %s442 = sshll.u32 [#allocation9], 4
          %s443 = int_to_ptr.vmem [resolvable:$true] %s442
          %448 = dma.hbm_to_vmem [thread:$0]  %s4, 4096, %s443, [#allocation10], 128, 128, 8
        $region24: #{tpu_custom_call.1} parent=11 // pred_fallthru
          _
        // Predicated region
        $region25: #{tpu_custom_call.1} parent=11 // pred_check
          %p449 = pneg %p169
        $region26: #{tpu_custom_call.1} parent=11 // pred_check_branch
          %451 = sbr.rel (%p449) target = $region28
        $region27: #{tpu_custom_call.1} parent=11 // pred_region
          _
        $region28: #{tpu_custom_call.1} parent=11 // pred_fallthru
          _
        // Predicated region
        $region29: #{tpu_custom_call.1} parent=11 // pred_check
          %p452 = pneg %p190
        $region30: #{tpu_custom_call.1} parent=11 // pred_check_branch
          %454 = sbr.rel (%p452) target = $region32
        $region31: #{tpu_custom_call.1} parent=11 // pred_region
          %s456 = ssub.s32 2048, 2048
          %457 = vsyncadd [#allocation10], %s456
          %s458 = sshll.u32 [#allocation11], 4
          %s459 = int_to_ptr.vmem [resolvable:$true] %s458
          %464 = dma.hbm_to_vmem [thread:$0]  %s6, 2048, %s459, [#allocation10], 64, 64, 4
        $region32: #{tpu_custom_call.1} parent=11 // pred_fallthru
          _
        // Predicated region
        $region33: #{tpu_custom_call.1} parent=11 // pred_check
          %p465 = pneg %p211
        $region34: #{tpu_custom_call.1} parent=11 // pred_check_branch
          %467 = sbr.rel (%p465) target = $region36
        $region35: #{tpu_custom_call.1} parent=11 // pred_region
          _
        $region36: #{tpu_custom_call.1} parent=11 // pred_fallthru
          _
        // Predicated region
        $region37: #{tpu_custom_call.1} parent=11 // pred_check
          %p468 = pneg %p232
        $region38: #{tpu_custom_call.1} parent=11 // pred_check_branch
          %470 = sbr.rel (%p468) target = $region40
        $region39: #{tpu_custom_call.1} parent=11 // pred_region
          _
        $region40: #{tpu_custom_call.1} parent=11 // pred_fallthru
          _
        // Predicated region
        $region41: #{tpu_custom_call.1} parent=11 // pred_check
          %p471 = pneg %p253
        $region42: #{tpu_custom_call.1} parent=11 // pred_check_branch
          %473 = sbr.rel (%p471) target = $region44
        $region43: #{tpu_custom_call.1} parent=11 // pred_region
          _
        $region44: #{tpu_custom_call.1} parent=11 // pred_fallthru
          _
        // Predicated region
        $region45: #{tpu_custom_call.1} parent=11 // pred_check
          %p474 = pneg %p274
        $region46: #{tpu_custom_call.1} parent=11 // pred_check_branch
          %476 = sbr.rel (%p474) target = $region48
        $region47: #{tpu_custom_call.1} parent=11 // pred_region
          %s478 = ssub.s32 4096, 4096
          %479 = vsyncadd [#allocation13], %s478
          %s480 = sshll.u32 [#allocation12], 4
          %s481 = int_to_ptr.vmem [resolvable:$true] %s480
          %486 = dma.hbm_to_vmem [thread:$0]  %s10, 4096, %s481, [#allocation13], 128, 128, 8
        $region48: #{tpu_custom_call.1} parent=11 // pred_fallthru
          _
        // Predicated region
        $region49: #{tpu_custom_call.1} parent=11 // pred_check
          %p487 = pneg %p295
        $region50: #{tpu_custom_call.1} parent=11 // pred_check_branch
          %489 = sbr.rel (%p487) target = $region52
        $region51: #{tpu_custom_call.1} parent=11 // pred_region
          _
        $region52: #{tpu_custom_call.1} parent=11 // pred_fallthru
          _
        // Predicated region
        $region53: #{tpu_custom_call.1} parent=11 // pred_check
          %p490 = pneg %p316
        $region54: #{tpu_custom_call.1} parent=11 // pred_check_branch
          %492 = sbr.rel (%p490) target = $region56
        $region55: #{tpu_custom_call.1} parent=11 // pred_region
          %s494 = ssub.s32 4096, 4096
          %495 = vsyncadd [#allocation13], %s494
          %s496 = sshll.u32 [#allocation14], 4
          %s497 = int_to_ptr.vmem [resolvable:$true] %s496
          %502 = dma.hbm_to_vmem [thread:$0]  %s12, 4096, %s497, [#allocation13], 64, 64, 4
        $region56: #{tpu_custom_call.1} parent=11 // pred_fallthru
          _
        // Predicated region
        $region57: #{tpu_custom_call.1} parent=11 // pred_check
          %p503 = pneg %p337
        $region58: #{tpu_custom_call.1} parent=11 // pred_check_branch
          %505 = sbr.rel (%p503) target = $region60
        $region59: #{tpu_custom_call.1} parent=11 // pred_region
          _
        $region60: #{tpu_custom_call.1} parent=11 // pred_fallthru
          _
        // Predicated region
        $region61: #{tpu_custom_call.1} parent=11 // pred_check
          %p506 = pneg %p358
        $region62: #{tpu_custom_call.1} parent=11 // pred_check_branch
          %508 = sbr.rel (%p506) target = $region64
        $region63: #{tpu_custom_call.1} parent=11 // pred_region
          _
        $region64: #{tpu_custom_call.1} parent=11 // pred_fallthru
          _
        // Predicated region
        $region65: #{tpu_custom_call.1} parent=11 // pred_check
          %p509 = pneg %p379
        $region66: #{tpu_custom_call.1} parent=11 // pred_check_branch
          %511 = sbr.rel (%p509) target = $region68
        $region67: #{tpu_custom_call.1} parent=11 // pred_region
          _
        $region68: #{tpu_custom_call.1} parent=11 // pred_fallthru
          _
      $region12: #{tpu_custom_call.1} parent=5 // pred_fallthru
        _
      %p512 = scmp.lt.s32.totalorder %s33, 2
      // Predicated region
      $region69: #{tpu_custom_call.1} parent=5 // pred_check
        %p513 = pneg %p512
      $region70: #{tpu_custom_call.1} parent=5 // pred_check_branch
        %515 = sbr.rel (%p513) target = $region72
      $region71: #{tpu_custom_call.1} parent=5 // pred_region
        // Predicated region
        $region73: #{tpu_custom_call.1} parent=71 // pred_check
          %p516 = pneg %p53
        $region74: #{tpu_custom_call.1} parent=71 // pred_check_branch
          %518 = sbr.rel (%p516) target = $region76
        $region75: #{tpu_custom_call.1} parent=71 // pred_region
          %s519 = sand.u32 %s43, 1
          %s520 = scalar_lea.sflag [#allocation4], %s519
          %s521 = sand.u32 %s43, 1
          %s522 = smul.addr %s521, 8
          %s523 = scalar_lea.vmem [#allocation3], %s522
          %s525 = ssub.s32 128, 128
          %526 = vsyncadd %s520, %s525
          %s527 = smul.addr %s33, 128
          %s528 = scalar_lea.hbm %s0, %s527
          %s530 = sshll.u32 %s523, 4
          %s531 = int_to_ptr.vmem [resolvable:$true] %s530
          %533 = dma.hbm_to_vmem [thread:$0]  %s528, 128, %s531, %s520
        $region76: #{tpu_custom_call.1} parent=71 // pred_fallthru
          _
        // Predicated region
        $region77: #{tpu_custom_call.1} parent=71 // pred_check
          %p534 = pneg %p79
        $region78: #{tpu_custom_call.1} parent=71 // pred_check_branch
          %536 = sbr.rel (%p534) target = $region80
        $region79: #{tpu_custom_call.1} parent=71 // pred_region
          %s537 = sand.u32 %s33, 1
          %s538 = scalar_lea.sflag [#allocation7], %s537
          %s539 = sand.u32 %s69, 1
          %s540 = smul.addr %s539, 8
          %s541 = scalar_lea.vmem [#allocation6], %s540
          %s543 = ssub.s32 128, 128
          %544 = vsyncadd %s538, %s543
          %s545 = smul.addr %s33, 128
          %s546 = scalar_lea.hbm %s1, %s545
          %s548 = sshll.u32 %s541, 4
          %s549 = int_to_ptr.vmem [resolvable:$true] %s548
          %551 = dma.hbm_to_vmem [thread:$0]  %s546, 128, %s549, %s538
        $region80: #{tpu_custom_call.1} parent=71 // pred_fallthru
          _
      $region72: #{tpu_custom_call.1} parent=5 // pred_fallthru
        _
      %p552 = scmp.le.s32.totalorder 1, %s33
      %p553 = scmp.lt.s32.totalorder %s33, 3
      %p554 = pnand %p552, %p553
      %p555 = pneg %p554
      // Predicated region
      $region81: #{tpu_custom_call.1} parent=5 // pred_check
        _
      $region82: #{tpu_custom_call.1} parent=5 // pred_check_branch
        %557 = sbr.rel (%p554) target = $region84
      $region83: #{tpu_custom_call.1} parent=5 // pred_region
        %s558 = ssub.s32 %s33, 1
        %s559 = sand.u32 %s46, 1
        %s560 = scalar_lea.sflag [#allocation4], %s559
        %s561 = sand.u32 %s46, 1
        %s562 = smul.addr %s561, 8
        %s563 = scalar_lea.vmem [#allocation3], %s562
        // Predicated region
        $region85: #{tpu_custom_call.1} parent=83 // pred_check
          %p564 = pneg %p59
        $region86: #{tpu_custom_call.1} parent=83 // pred_check_branch
          %566 = sbr.rel (%p564) target = $region88
        $region87: #{tpu_custom_call.1} parent=83 // pred_region
          %567 = dma.done %s560, 128
        $region88: #{tpu_custom_call.1} parent=83 // pred_fallthru
          _
        %s568 = sand.u32 %s38, 1
        %s569 = scalar_lea.sflag [#allocation7], %s568
        %s570 = sand.u32 %s72, 1
        %s571 = smul.addr %s570, 8
        %s572 = scalar_lea.vmem [#allocation6], %s571
        // Predicated region
        $region89: #{tpu_custom_call.1} parent=83 // pred_check
          %p573 = pneg %p85
        $region90: #{tpu_custom_call.1} parent=83 // pred_check_branch
          %575 = sbr.rel (%p573) target = $region92
        $region91: #{tpu_custom_call.1} parent=83 // pred_region
          %576 = dma.done %s569, 128
        $region92: #{tpu_custom_call.1} parent=83 // pred_fallthru
          _
        // Predicated region
        $region93: #{tpu_custom_call.1} parent=83 // pred_check
          %p577 = pneg %p106
        $region94: #{tpu_custom_call.1} parent=83 // pred_check_branch
          %579 = sbr.rel (%p577) target = $region96
        $region95: #{tpu_custom_call.1} parent=83 // pred_region
          %580 = dma.done [#allocation7], 2048
        $region96: #{tpu_custom_call.1} parent=83 // pred_fallthru
          _
        // Predicated region
        $region97: #{tpu_custom_call.1} parent=83 // pred_check
          %p581 = pneg %p148
        $region98: #{tpu_custom_call.1} parent=83 // pred_check_branch
          %583 = sbr.rel (%p581) target = $region100
        $region99: #{tpu_custom_call.1} parent=83 // pred_region
          %584 = dma.done [#allocation10], 4096
        $region100: #{tpu_custom_call.1} parent=83 // pred_fallthru
          _
        // Predicated region
        $region101: #{tpu_custom_call.1} parent=83 // pred_check
          %p585 = pneg %p190
        $region102: #{tpu_custom_call.1} parent=83 // pred_check_branch
          %587 = sbr.rel (%p585) target = $region104
        $region103: #{tpu_custom_call.1} parent=83 // pred_region
          %588 = dma.done [#allocation10], 2048
        $region104: #{tpu_custom_call.1} parent=83 // pred_fallthru
          _
        // Predicated region
        $region105: #{tpu_custom_call.1} parent=83 // pred_check
          %p589 = pneg %p274
        $region106: #{tpu_custom_call.1} parent=83 // pred_check_branch
          %591 = sbr.rel (%p589) target = $region108
        $region107: #{tpu_custom_call.1} parent=83 // pred_region
          %592 = dma.done [#allocation13], 4096
        $region108: #{tpu_custom_call.1} parent=83 // pred_fallthru
          _
        // Predicated region
        $region109: #{tpu_custom_call.1} parent=83 // pred_check
          %p593 = pneg %p316
        $region110: #{tpu_custom_call.1} parent=83 // pred_check_branch
          %595 = sbr.rel (%p593) target = $region112
        $region111: #{tpu_custom_call.1} parent=83 // pred_region
          %596 = dma.done [#allocation13], 4096
        $region112: #{tpu_custom_call.1} parent=83 // pred_fallthru
          _
        %s597 = sand.u32 %s46, 1
        %s598 = scalar_lea.sflag [#allocation4], %s597
        %s599 = sand.u32 %s46, 1
        %s600 = smul.addr %s599, 8
        %s601 = scalar_lea.vmem [#allocation3], %s600
        %p602 = pneg %p59
        %p603 = pneg %p56
        %s604 = sand.u32 %s38, 1
        %s605 = scalar_lea.sflag [#allocation7], %s604
        %s606 = sand.u32 %s72, 1
        %s607 = smul.addr %s606, 8
        %s608 = scalar_lea.vmem [#allocation6], %s607
        %p609 = pneg %p85
        %p610 = pneg %p82
        %p611 = pneg %p106
        %p612 = pneg %p103
        %p613 = pneg %p127
        %p614 = pneg %p124
        %p615 = pneg %p148
        %p616 = pneg %p145
        %p617 = pneg %p169
        %p618 = pneg %p166
        %p619 = pneg %p190
        %p620 = pneg %p187
        %p621 = pneg %p211
        %p622 = pneg %p208
        %p623 = pneg %p232
        %p624 = pneg %p229
        %p625 = pneg %p253
        %p626 = pneg %p250
        %p627 = pneg %p274
        %p628 = pneg %p271
        %p629 = pneg %p295
        %p630 = pneg %p292
        %p631 = pneg %p316
        %p632 = pneg %p313
        %p633 = pneg %p337
        %p634 = pneg %p334
        %p635 = pneg %p358
        %p636 = pneg %p355
        %p637 = pneg %p379
        %p638 = pneg %p376
        %p639 = pneg %p405
        %p640 = pneg %p402
        %s641 = sand.u32 %s392, 1
        %s642 = scalar_lea.sflag [#allocation5], %s641
        %s643 = sand.u32 %s392, 1
        %s644 = smul.addr %s643, 8
        %s645 = scalar_lea.vmem [#allocation15], %s644
        %v647 = vld [vmem:[%s563] sm:$0xff]
        %v648 = vld [vmem:[%s572] sm:$0xff]
        %v649 = vpack.c.bf16 %v648, %v648
        %v650 = vpack.c.bf16 %v647, %v647
        %v651 = vld [vmem:[#allocation8] sm:$0xf]
        %v652 = vld [vmem:[#allocation8 + $0x4] sm:$0xf]
        %v653 = vld [vmem:[#allocation8 + $0x8] sm:$0xf]
        %v654 = vld [vmem:[#allocation8 + $0xc] sm:$0xf]
        %v655 = vld [vmem:[#allocation8 + $0x10] sm:$0xf]
        %v656 = vld [vmem:[#allocation8 + $0x14] sm:$0xf]
        %v657 = vld [vmem:[#allocation8 + $0x18] sm:$0xf]
        %v658 = vld [vmem:[#allocation8 + $0x1c] sm:$0xf]
        %v659 = vld [vmem:[#allocation8 + $0x20] sm:$0xf]
        %v660 = vld [vmem:[#allocation8 + $0x24] sm:$0xf]
        %v661 = vld [vmem:[#allocation8 + $0x28] sm:$0xf]
        %v662 = vld [vmem:[#allocation8 + $0x2c] sm:$0xf]
        %v663 = vld [vmem:[#allocation8 + $0x30] sm:$0xf]
        %v664 = vld [vmem:[#allocation8 + $0x34] sm:$0xf]
        %v665 = vld [vmem:[#allocation8 + $0x38] sm:$0xf]
        %v666 = vld [vmem:[#allocation8 + $0x3c] sm:$0xf]
        %v667 = vld [vmem:[%s3] sm:$0x1]
        %v669 = vlaneseq
        %v670 = vshrl.u32 %v669, 7
        %v671 = vsub.s32 0, %v670
        %v672 = vrot.slane %v667, %v671
        %v690 = vunpack.c.l.b16 %v651
        %v691 = vunpack.c.l.b16 %v652
        %v692 = vunpack.c.l.b16 %v653
        %v693 = vunpack.c.l.b16 %v654
        %v694 = vunpack.c.l.b16 %v655
        %v695 = vunpack.c.l.b16 %v656
        %v696 = vunpack.c.l.b16 %v657
        %v697 = vunpack.c.l.b16 %v658
        %v698 = vunpack.c.l.b16 %v659
        %v699 = vunpack.c.l.b16 %v660
        %v700 = vunpack.c.l.b16 %v661
        %v701 = vunpack.c.l.b16 %v662
        %v702 = vunpack.c.l.b16 %v663
        %v703 = vunpack.c.l.b16 %v664
        %v704 = vunpack.c.l.b16 %v665
        %v705 = vunpack.c.l.b16 %v666
        %v706 = vpack.c.b16 %v691, %v690
        %v707 = vpack.c.b16 %v693, %v692
        %v708 = vpack.c.b16 %v695, %v694
        %v709 = vpack.c.b16 %v697, %v696
        %v710 = vpack.c.b16 %v699, %v698
        %v711 = vpack.c.b16 %v701, %v700
        %v712 = vpack.c.b16 %v703, %v702
        %v713 = vpack.c.b16 %v705, %v704
        %722 = vmatprep.subr.bf16.mxu0 0
        %723 = vmatpush1.bf16.msra.mxu0 %v706
        %724 = vmatprep.subr.bf16.mxu0 0
        %725 = vmatpush1.bf16.msra.mxu0 %v707
        %726 = vmatprep.subr.bf16.mxu0 0
        %727 = vmatpush1.bf16.msra.mxu0 %v708
        %728 = vmatprep.subr.bf16.mxu0 0
        %729 = vmatpush1.bf16.msra.mxu0 %v709
        %730 = vmatprep.subr.bf16.mxu0 0
        %731 = vmatpush1.bf16.msra.mxu0 %v710
        %732 = vmatprep.subr.bf16.mxu0 0
        %733 = vmatpush1.bf16.msra.mxu0 %v711
        %734 = vmatprep.subr.bf16.mxu0 0
        %735 = vmatpush1.bf16.msra.mxu0 %v712
        %736 = vmatprep.subr.bf16.mxu0 0
        %737 = vmatpush1.bf16.msra.mxu0 %v713
        %738 = vmatprep.subr.bf16.mxu0 0
        %739 = vmatpush1.bf16.msra.mxu0 0
        %740 = vmatprep.subr.bf16.mxu0 0
        %741 = vmatpush1.bf16.msra.mxu0 0
        %742 = vmatprep.subr.bf16.mxu0 0
        %743 = vmatpush1.bf16.msra.mxu0 0
        %744 = vmatprep.subr.bf16.mxu0 0
        %745 = vmatpush1.bf16.msra.mxu0 0
        %746 = vmatprep.subr.bf16.mxu0 0
        %747 = vmatpush1.bf16.msra.mxu0 0
        %748 = vmatprep.subr.bf16.mxu0 0
        %749 = vmatpush1.bf16.msra.mxu0 0
        %750 = vmatprep.subr.bf16.mxu0 0
        %751 = vmatpush1.bf16.msra.mxu0 0
        %752 = vmatprep.subr.bf16.mxu0 0
        %753 = vmatpush1.bf16.msra.mxu0 0
        %754 = vmatprep.mubr.bf16.mxu0 0
        %755 = vmatmul.mubr.bf16.gmra.mrb[0].mxu0 %v650
        %v756 = vpop.f32.mrb[0].mxu0
        %v757 = vadd.f32 %v672, %v756
        %v758 = vpop.f32.mrb[0].mxu0
        %v759 = vpop.f32.mrb[0].mxu0
        %v760 = vpop.f32.mrb[0].mxu0
        %761 = vdwg.mxu0
        %v762 = vld [vmem:[#allocation9] sm:$0xff]
        %v763 = vld [vmem:[#allocation9 + $0x8] sm:$0xff]
        %v764 = vld [vmem:[#allocation9 + $0x10] sm:$0xff]
        %v765 = vld [vmem:[#allocation9 + $0x18] sm:$0xff]
        %v766 = vld [vmem:[#allocation9 + $0x20] sm:$0xff]
        %v767 = vld [vmem:[#allocation9 + $0x28] sm:$0xff]
        %v768 = vld [vmem:[#allocation9 + $0x30] sm:$0xff]
        %v769 = vld [vmem:[#allocation9 + $0x38] sm:$0xff]
        %v770 = vld [vmem:[#allocation9 + $0x40] sm:$0xff]
        %v771 = vld [vmem:[#allocation9 + $0x48] sm:$0xff]
        %v772 = vld [vmem:[#allocation9 + $0x50] sm:$0xff]
        %v773 = vld [vmem:[#allocation9 + $0x58] sm:$0xff]
        %v774 = vld [vmem:[#allocation9 + $0x60] sm:$0xff]
        %v775 = vld [vmem:[#allocation9 + $0x68] sm:$0xff]
        %v776 = vld [vmem:[#allocation9 + $0x70] sm:$0xff]
        %v777 = vld [vmem:[#allocation9 + $0x78] sm:$0xff]
        %v778 = vld [vmem:[%s5] sm:$0x3]
        %v780 = vlaneseq
        %v781 = vshrl.u32 %v780, 7
        %v782 = vsub.s32 0, %v781
        %v783 = vrot.slane %v778, %v782
        %v784 = vlaneseq
        %v785 = vshrl.u32 %v784, 7
        %v786 = vsub.s32 1, %v785
        %v787 = vrot.slane %v778, %v786
        %v806 = vunpack.c.l.b16 %v762
        %v807 = vunpack.c.h.b16 %v762
        %v808 = vunpack.c.l.b16 %v763
        %v809 = vunpack.c.h.b16 %v763
        %v810 = vunpack.c.l.b16 %v764
        %v811 = vunpack.c.h.b16 %v764
        %v812 = vunpack.c.l.b16 %v765
        %v813 = vunpack.c.h.b16 %v765
        %v814 = vunpack.c.l.b16 %v766
        %v815 = vunpack.c.h.b16 %v766
        %v816 = vunpack.c.l.b16 %v767
        %v817 = vunpack.c.h.b16 %v767
        %v818 = vunpack.c.l.b16 %v768
        %v819 = vunpack.c.h.b16 %v768
        %v820 = vunpack.c.l.b16 %v769
        %v821 = vunpack.c.h.b16 %v769
        %v822 = vunpack.c.l.b16 %v770
        %v823 = vunpack.c.h.b16 %v770
        %v824 = vunpack.c.l.b16 %v771
        %v825 = vunpack.c.h.b16 %v771
        %v826 = vunpack.c.l.b16 %v772
        %v827 = vunpack.c.h.b16 %v772
        %v828 = vunpack.c.l.b16 %v773
        %v829 = vunpack.c.h.b16 %v773
        %v830 = vunpack.c.l.b16 %v774
        %v831 = vunpack.c.h.b16 %v774
        %v832 = vunpack.c.l.b16 %v775
        %v833 = vunpack.c.h.b16 %v775
        %v834 = vunpack.c.l.b16 %v776
        %v835 = vunpack.c.h.b16 %v776
        %v836 = vunpack.c.l.b16 %v777
        %v837 = vunpack.c.h.b16 %v777
        %v838 = vpack.c.b16 %v808, %v806
        %v839 = vpack.c.b16 %v809, %v807
        %v840 = vpack.c.b16 %v812, %v810
        %v841 = vpack.c.b16 %v813, %v811
        %v842 = vpack.c.b16 %v816, %v814
        %v843 = vpack.c.b16 %v817, %v815
        %v844 = vpack.c.b16 %v820, %v818
        %v845 = vpack.c.b16 %v821, %v819
        %v846 = vpack.c.b16 %v824, %v822
        %v847 = vpack.c.b16 %v825, %v823
        %v848 = vpack.c.b16 %v828, %v826
        %v849 = vpack.c.b16 %v829, %v827
        %v850 = vpack.c.b16 %v832, %v830
        %v851 = vpack.c.b16 %v833, %v831
        %v852 = vpack.c.b16 %v836, %v834
        %v853 = vpack.c.b16 %v837, %v835
        %870 = vmatprep.subr.bf16.mxu0 %v839
        %871 = vmatpush1.bf16.msra.mxu0 %v838
        %872 = vmatprep.subr.bf16.mxu0 %v841
        %873 = vmatpush1.bf16.msra.mxu0 %v840
        %874 = vmatprep.subr.bf16.mxu0 %v843
        %875 = vmatpush1.bf16.msra.mxu0 %v842
        %876 = vmatprep.subr.bf16.mxu0 %v845
        %877 = vmatpush1.bf16.msra.mxu0 %v844
        %878 = vmatprep.subr.bf16.mxu0 %v847
        %879 = vmatpush1.bf16.msra.mxu0 %v846
        %880 = vmatprep.subr.bf16.mxu0 %v849
        %881 = vmatpush1.bf16.msra.mxu0 %v848
        %882 = vmatprep.subr.bf16.mxu0 %v851
        %883 = vmatpush1.bf16.msra.mxu0 %v850
        %884 = vmatprep.subr.bf16.mxu0 %v853
        %885 = vmatpush1.bf16.msra.mxu0 %v852
        %886 = vmatprep.subr.bf16.mxu0 0
        %887 = vmatpush1.bf16.msra.mxu0 0
        %888 = vmatprep.subr.bf16.mxu0 0
        %889 = vmatpush1.bf16.msra.mxu0 0
        %890 = vmatprep.subr.bf16.mxu0 0
        %891 = vmatpush1.bf16.msra.mxu0 0
        %892 = vmatprep.subr.bf16.mxu0 0
        %893 = vmatpush1.bf16.msra.mxu0 0
        %894 = vmatprep.subr.bf16.mxu0 0
        %895 = vmatpush1.bf16.msra.mxu0 0
        %896 = vmatprep.subr.bf16.mxu0 0
        %897 = vmatpush1.bf16.msra.mxu0 0
        %898 = vmatprep.subr.bf16.mxu0 0
        %899 = vmatpush1.bf16.msra.mxu0 0
        %900 = vmatprep.subr.bf16.mxu0 0
        %901 = vmatpush1.bf16.msra.mxu0 0
        %902 = vmatprep.mubr.bf16.mxu0 0
        %903 = vmatmul.mubr.bf16.gmra.mrb[0].mxu0 %v649
        %v904 = vpop.f32.mrb[0].mxu0
        %v905 = vadd.f32 %v783, %v904
        %v906 = vpop.f32.mrb[0].mxu0
        %v907 = vadd.f32 %v787, %v906
        %v908 = vpop.f32.mrb[0].mxu0
        %v909 = vpop.f32.mrb[0].mxu0
        %910 = vdwg.mxu0
        %v911 = vpack.c.bf16 %v757, %v757
        %v912 = vpack.c.bf16 %v905, %v905
        %v913 = vpack.c.bf16 %v907, %v907
        %vm914 = vcmask 261120
        %v916 = vsel %vm914, %v911, 0
        %v919 = vsel %vm914, %v912, 0
        %921 = vmatprep.subr.bf16.mxu0 0
        %922 = vmatpush1.bf16.xpose.msra.mxu0 %v919
        %923 = vmatprep.subr.bf16.mxu0 0
        %924 = vmatpush1.bf16.xpose.msra.mxu0 0
        %925 = vmatprep.subr.bf16.mxu0 0
        %926 = vmatpush1.bf16.xpose.msra.mxu0 0
        %927 = vmatprep.subr.bf16.mxu0 0
        %928 = vmatpush1.bf16.xpose.msra.mxu0 0
        %929 = vmatprep.subr.bf16.mxu0 0
        %930 = vmatpush1.bf16.xpose.msra.mxu0 0
        %931 = vmatprep.subr.bf16.mxu0 0
        %932 = vmatpush1.bf16.xpose.msra.mxu0 0
        %933 = vmatprep.subr.bf16.mxu0 0
        %934 = vmatpush1.bf16.xpose.msra.mxu0 0
        %935 = vmatprep.subr.bf16.mxu0 0
        %936 = vmatpush1.bf16.xpose.msra.mxu0 0
        %937 = vmatprep.subr.bf16.mxu0 0
        %938 = vmatpush1.bf16.xpose.msra.mxu0 0
        %939 = vmatprep.subr.bf16.mxu0 0
        %940 = vmatpush1.bf16.xpose.msra.mxu0 0
        %941 = vmatprep.subr.bf16.mxu0 0
        %942 = vmatpush1.bf16.xpose.msra.mxu0 0
        %943 = vmatprep.subr.bf16.mxu0 0
        %944 = vmatpush1.bf16.xpose.msra.mxu0 0
        %945 = vmatprep.subr.bf16.mxu0 0
        %946 = vmatpush1.bf16.xpose.msra.mxu0 0
        %947 = vmatprep.subr.bf16.mxu0 0
        %948 = vmatpush1.bf16.xpose.msra.mxu0 0
        %949 = vmatprep.subr.bf16.mxu0 0
        %950 = vmatpush1.bf16.xpose.msra.mxu0 0
        %951 = vmatprep.subr.bf16.mxu0 0
        %952 = vmatpush1.bf16.xpose.msra.mxu0 0
        %953 = vmatprep.mubr.bf16.mxu0 0
        %954 = vmatmul.mubr.bf16.gmra.mrb[0].mxu0 %v916
        %v955 = vpop.f32.mrb[0].mxu0
        %v956 = vadd.f32 0.0, %v955
        %v957 = vpop.f32.mrb[0].mxu0
        %v958 = vpop.f32.mrb[0].mxu0
        %v959 = vpop.f32.mrb[0].mxu0
        %960 = vdwg.mxu0
        %vm961 = vcmask 64512
        %v962 = vsel %vm961, %v956, -inf
        %963 = vmax.xlane.f32.xlu0 %v962
        %v964 = vpop.xlane.xlu0 %963
        %v965 = vsub.f32 %v956, %v964
        %v966 = vmul.f32 %v965, 1.442695
        %v967 = vpow.pop %v966
        %v968 = vsel %vm961, %v967, 0.0
        %969 = vadd.xlane.f32.xlu0 %v968
        %v970 = vpop.xlane.xlu0 %969
        %v971 = vrcp.pop %v970
        %v972 = vmul.f32 %v967, %v971
        %v973 = vpack.c.bf16 %v972, %v972
        %v975 = vsel %vm961, %v973, 0
        %vm977 = vcmask 1043456
        %v979 = vsel %vm977, %v913, 0
        %981 = vmatprep.subr.bf16.mxu0 0
        %982 = vmatpush1.bf16.msra.mxu0 %v979
        %983 = vmatprep.subr.bf16.mxu0 0
        %984 = vmatpush1.bf16.msra.mxu0 0
        %985 = vmatprep.subr.bf16.mxu0 0
        %986 = vmatpush1.bf16.msra.mxu0 0
        %987 = vmatprep.subr.bf16.mxu0 0
        %988 = vmatpush1.bf16.msra.mxu0 0
        %989 = vmatprep.subr.bf16.mxu0 0
        %990 = vmatpush1.bf16.msra.mxu0 0
        %991 = vmatprep.subr.bf16.mxu0 0
        %992 = vmatpush1.bf16.msra.mxu0 0
        %993 = vmatprep.subr.bf16.mxu0 0
        %994 = vmatpush1.bf16.msra.mxu0 0
        %995 = vmatprep.subr.bf16.mxu0 0
        %996 = vmatpush1.bf16.msra.mxu0 0
        %997 = vmatprep.subr.bf16.mxu0 0
        %998 = vmatpush1.bf16.msra.mxu0 0
        %999 = vmatprep.subr.bf16.mxu0 0
        %1000 = vmatpush1.bf16.msra.mxu0 0
        %1001 = vmatprep.subr.bf16.mxu0 0
        %1002 = vmatpush1.bf16.msra.mxu0 0
        %1003 = vmatprep.subr.bf16.mxu0 0
        %1004 = vmatpush1.bf16.msra.mxu0 0
        %1005 = vmatprep.subr.bf16.mxu0 0
        %1006 = vmatpush1.bf16.msra.mxu0 0
        %1007 = vmatprep.subr.bf16.mxu0 0
        %1008 = vmatpush1.bf16.msra.mxu0 0
        %1009 = vmatprep.subr.bf16.mxu0 0
        %1010 = vmatpush1.bf16.msra.mxu0 0
        %1011 = vmatprep.subr.bf16.mxu0 0
        %1012 = vmatpush1.bf16.msra.mxu0 0
        %1013 = vmatprep.mubr.bf16.mxu0 0
        %1014 = vmatmul.mubr.bf16.gmra.mrb[0].mxu0 %v975
        %v1015 = vpop.f32.mrb[0].mxu0
        %v1016 = vadd.f32 0.0, %v1015
        %v1017 = vpop.f32.mrb[0].mxu0
        %v1018 = vpop.f32.mrb[0].mxu0
        %v1019 = vpop.f32.mrb[0].mxu0
        %1020 = vdwg.mxu0
        %v1021 = vpack.c.bf16 %v1016, %v1016
        %vm1022 = vcmask 257024
        %1023 = vst.msk [vmem:[#allocation2] sm:$0xf] %vm1022, %v1021
        %1025 = vrot.lane.b32.xlu0 %v911, 96
        %v1026 = vpop.permute.xlu0 %1025
        %1028 = vrot.lane.b32.xlu0 %v912, 96
        %v1029 = vpop.permute.xlu0 %1028
        %v1031 = vsel %vm914, %v1026, 0
        %v1034 = vsel %vm914, %v1029, 0
        %1036 = vmatprep.subr.bf16.mxu0 0
        %1037 = vmatpush1.bf16.xpose.msra.mxu0 %v1034
        %1038 = vmatprep.subr.bf16.mxu0 0
        %1039 = vmatpush1.bf16.xpose.msra.mxu0 0
        %1040 = vmatprep.subr.bf16.mxu0 0
        %1041 = vmatpush1.bf16.xpose.msra.mxu0 0
        %1042 = vmatprep.subr.bf16.mxu0 0
        %1043 = vmatpush1.bf16.xpose.msra.mxu0 0
        %1044 = vmatprep.subr.bf16.mxu0 0
        %1045 = vmatpush1.bf16.xpose.msra.mxu0 0
        %1046 = vmatprep.subr.bf16.mxu0 0
        %1047 = vmatpush1.bf16.xpose.msra.mxu0 0
        %1048 = vmatprep.subr.bf16.mxu0 0
        %1049 = vmatpush1.bf16.xpose.msra.mxu0 0
        %1050 = vmatprep.subr.bf16.mxu0 0
        %1051 = vmatpush1.bf16.xpose.msra.mxu0 0
        %1052 = vmatprep.subr.bf16.mxu0 0
        %1053 = vmatpush1.bf16.xpose.msra.mxu0 0
        %1054 = vmatprep.subr.bf16.mxu0 0
        %1055 = vmatpush1.bf16.xpose.msra.mxu0 0
        %1056 = vmatprep.subr.bf16.mxu0 0
        %1057 = vmatpush1.bf16.xpose.msra.mxu0 0
        %1058 = vmatprep.subr.bf16.mxu0 0
        %1059 = vmatpush1.bf16.xpose.msra.mxu0 0
        %1060 = vmatprep.subr.bf16.mxu0 0
        %1061 = vmatpush1.bf16.xpose.msra.mxu0 0
        %1062 = vmatprep.subr.bf16.mxu0 0
        %1063 = vmatpush1.bf16.xpose.msra.mxu0 0
        %1064 = vmatprep.subr.bf16.mxu0 0
        %1065 = vmatpush1.bf16.xpose.msra.mxu0 0
        %1066 = vmatprep.subr.bf16.mxu0 0
        %1067 = vmatpush1.bf16.xpose.msra.mxu0 0
        %1068 = vmatprep.mubr.bf16.mxu0 0
        %1069 = vmatmul.mubr.bf16.gmra.mrb[0].mxu0 %v1031
        %v1070 = vpop.f32.mrb[0].mxu0
        %v1071 = vadd.f32 0.0, %v1070
        %v1072 = vpop.f32.mrb[0].mxu0
        %v1073 = vpop.f32.mrb[0].mxu0
        %v1074 = vpop.f32.mrb[0].mxu0
        %1075 = vdwg.mxu0
        %v1076 = vsel %vm961, %v1071, -inf
        %1077 = vmax.xlane.f32.xlu0 %v1076
        %v1078 = vpop.xlane.xlu0 %1077
        %v1079 = vsub.f32 %v1071, %v1078
        %v1080 = vmul.f32 %v1079, 1.442695
        %v1081 = vpow.pop %v1080
        %v1082 = vsel %vm961, %v1081, 0.0
        %1083 = vadd.xlane.f32.xlu0 %v1082
        %v1084 = vpop.xlane.xlu0 %1083
        %v1085 = vrcp.pop %v1084
        %v1086 = vmul.f32 %v1081, %v1085
        %v1087 = vpack.c.bf16 %v1086, %v1086
        %1089 = vrot.lane.b32.xlu0 %v913, 96
        %v1090 = vpop.permute.xlu0 %1089
        %v1092 = vsel %vm961, %v1087, 0
        %v1095 = vsel %vm977, %v1090, 0
        %1097 = vmatprep.subr.bf16.mxu0 0
        %1098 = vmatpush1.bf16.msra.mxu0 %v1095
        %1099 = vmatprep.subr.bf16.mxu0 0
        %1100 = vmatpush1.bf16.msra.mxu0 0
        %1101 = vmatprep.subr.bf16.mxu0 0
        %1102 = vmatpush1.bf16.msra.mxu0 0
        %1103 = vmatprep.subr.bf16.mxu0 0
        %1104 = vmatpush1.bf16.msra.mxu0 0
        %1105 = vmatprep.subr.bf16.mxu0 0
        %1106 = vmatpush1.bf16.msra.mxu0 0
        %1107 = vmatprep.subr.bf16.mxu0 0
        %1108 = vmatpush1.bf16.msra.mxu0 0
        %1109 = vmatprep.subr.bf16.mxu0 0
        %1110 = vmatpush1.bf16.msra.mxu0 0
        %1111 = vmatprep.subr.bf16.mxu0 0
        %1112 = vmatpush1.bf16.msra.mxu0 0
        %1113 = vmatprep.subr.bf16.mxu0 0
        %1114 = vmatpush1.bf16.msra.mxu0 0
        %1115 = vmatprep.subr.bf16.mxu0 0
        %1116 = vmatpush1.bf16.msra.mxu0 0
        %1117 = vmatprep.subr.bf16.mxu0 0
        %1118 = vmatpush1.bf16.msra.mxu0 0
        %1119 = vmatprep.subr.bf16.mxu0 0
        %1120 = vmatpush1.bf16.msra.mxu0 0
        %1121 = vmatprep.subr.bf16.mxu0 0
        %1122 = vmatpush1.bf16.msra.mxu0 0
        %1123 = vmatprep.subr.bf16.mxu0 0
        %1124 = vmatpush1.bf16.msra.mxu0 0
        %1125 = vmatprep.subr.bf16.mxu0 0
        %1126 = vmatpush1.bf16.msra.mxu0 0
        %1127 = vmatprep.subr.bf16.mxu0 0
        %1128 = vmatpush1.bf16.msra.mxu0 0
        %1129 = vmatprep.mubr.bf16.mxu0 0
        %1130 = vmatmul.mubr.bf16.gmra.mrb[0].mxu0 %v1092
        %v1131 = vpop.f32.mrb[0].mxu0
        %v1132 = vadd.f32 0.0, %v1131
        %v1133 = vpop.f32.mrb[0].mxu0
        %v1134 = vpop.f32.mrb[0].mxu0
        %v1135 = vpop.f32.mrb[0].mxu0
        %1136 = vdwg.mxu0
        %v1137 = vpack.c.bf16 %v1132, %v1132
        %v1139 = vunpack.c.l.b16 %v1137
        %v1140 = vpack.c.b16 %v1139, %v1139
        %1141 = vrot.lane.b32.xlu0 %v1140, 32
        %v1142 = vpop.permute.xlu0 %1141
        %vm1144 = vcmask 519424
        %1145 = vst.msk [vmem:[#allocation2] sm:$0xf] %vm1144, %v1142
        %1146 = vrot.lane.b32.xlu0 %v911, 64
        %v1147 = vpop.permute.xlu0 %1146
        %1148 = vrot.lane.b32.xlu0 %v912, 64
        %v1149 = vpop.permute.xlu0 %1148
        %v1151 = vsel %vm914, %v1147, 0
        %v1154 = vsel %vm914, %v1149, 0
        %1156 = vmatprep.subr.bf16.mxu0 0
        %1157 = vmatpush1.bf16.xpose.msra.mxu0 %v1154
        %1158 = vmatprep.subr.bf16.mxu0 0
        %1159 = vmatpush1.bf16.xpose.msra.mxu0 0
        %1160 = vmatprep.subr.bf16.mxu0 0
        %1161 = vmatpush1.bf16.xpose.msra.mxu0 0
        %1162 = vmatprep.subr.bf16.mxu0 0
        %1163 = vmatpush1.bf16.xpose.msra.mxu0 0
        %1164 = vmatprep.subr.bf16.mxu0 0
        %1165 = vmatpush1.bf16.xpose.msra.mxu0 0
        %1166 = vmatprep.subr.bf16.mxu0 0
        %1167 = vmatpush1.bf16.xpose.msra.mxu0 0
        %1168 = vmatprep.subr.bf16.mxu0 0
        %1169 = vmatpush1.bf16.xpose.msra.mxu0 0
        %1170 = vmatprep.subr.bf16.mxu0 0
        %1171 = vmatpush1.bf16.xpose.msra.mxu0 0
        %1172 = vmatprep.subr.bf16.mxu0 0
        %1173 = vmatpush1.bf16.xpose.msra.mxu0 0
        %1174 = vmatprep.subr.bf16.mxu0 0
        %1175 = vmatpush1.bf16.xpose.msra.mxu0 0
        %1176 = vmatprep.subr.bf16.mxu0 0
        %1177 = vmatpush1.bf16.xpose.msra.mxu0 0
        %1178 = vmatprep.subr.bf16.mxu0 0
        %1179 = vmatpush1.bf16.xpose.msra.mxu0 0
        %1180 = vmatprep.subr.bf16.mxu0 0
        %1181 = vmatpush1.bf16.xpose.msra.mxu0 0
        %1182 = vmatprep.subr.bf16.mxu0 0
        %1183 = vmatpush1.bf16.xpose.msra.mxu0 0
        %1184 = vmatprep.subr.bf16.mxu0 0
        %1185 = vmatpush1.bf16.xpose.msra.mxu0 0
        %1186 = vmatprep.subr.bf16.mxu0 0
        %1187 = vmatpush1.bf16.xpose.msra.mxu0 0
        %1188 = vmatprep.mubr.bf16.mxu0 0
        %1189 = vmatmul.mubr.bf16.gmra.mrb[0].mxu0 %v1151
        %v1190 = vpop.f32.mrb[0].mxu0
        %v1191 = vadd.f32 0.0, %v1190
        %v1192 = vpop.f32.mrb[0].mxu0
        %v1193 = vpop.f32.mrb[0].mxu0
        %v1194 = vpop.f32.mrb[0].mxu0
        %1195 = vdwg.mxu0
        %v1196 = vsel %vm961, %v1191, -inf
        %1197 = vmax.xlane.f32.xlu0 %v1196
        %v1198 = vpop.xlane.xlu0 %1197
        %v1199 = vsub.f32 %v1191, %v1198
        %v1200 = vmul.f32 %v1199, 1.442695
        %v1201 = vpow.pop %v1200
        %v1202 = vsel %vm961, %v1201, 0.0
        %1203 = vadd.xlane.f32.xlu0 %v1202
        %v1204 = vpop.xlane.xlu0 %1203
        %v1205 = vrcp.pop %v1204
        %v1206 = vmul.f32 %v1201, %v1205
        %v1207 = vpack.c.bf16 %v1206, %v1206
        %1208 = vrot.lane.b32.xlu0 %v913, 64
        %v1209 = vpop.permute.xlu0 %1208
        %v1211 = vsel %vm961, %v1207, 0
        %v1214 = vsel %vm977, %v1209, 0
        %1216 = vmatprep.subr.bf16.mxu0 0
        %1217 = vmatpush1.bf16.msra.mxu0 %v1214
        %1218 = vmatprep.subr.bf16.mxu0 0
        %1219 = vmatpush1.bf16.msra.mxu0 0
        %1220 = vmatprep.subr.bf16.mxu0 0
        %1221 = vmatpush1.bf16.msra.mxu0 0
        %1222 = vmatprep.subr.bf16.mxu0 0
        %1223 = vmatpush1.bf16.msra.mxu0 0
        %1224 = vmatprep.subr.bf16.mxu0 0
        %1225 = vmatpush1.bf16.msra.mxu0 0
        %1226 = vmatprep.subr.bf16.mxu0 0
        %1227 = vmatpush1.bf16.msra.mxu0 0
        %1228 = vmatprep.subr.bf16.mxu0 0
        %1229 = vmatpush1.bf16.msra.mxu0 0
        %1230 = vmatprep.subr.bf16.mxu0 0
        %1231 = vmatpush1.bf16.msra.mxu0 0
        %1232 = vmatprep.subr.bf16.mxu0 0
        %1233 = vmatpush1.bf16.msra.mxu0 0
        %1234 = vmatprep.subr.bf16.mxu0 0
        %1235 = vmatpush1.bf16.msra.mxu0 0
        %1236 = vmatprep.subr.bf16.mxu0 0
        %1237 = vmatpush1.bf16.msra.mxu0 0
        %1238 = vmatprep.subr.bf16.mxu0 0
        %1239 = vmatpush1.bf16.msra.mxu0 0
        %1240 = vmatprep.subr.bf16.mxu0 0
        %1241 = vmatpush1.bf16.msra.mxu0 0
        %1242 = vmatprep.subr.bf16.mxu0 0
        %1243 = vmatpush1.bf16.msra.mxu0 0
        %1244 = vmatprep.subr.bf16.mxu0 0
        %1245 = vmatpush1.bf16.msra.mxu0 0
        %1246 = vmatprep.subr.bf16.mxu0 0
        %1247 = vmatpush1.bf16.msra.mxu0 0
        %1248 = vmatprep.mubr.bf16.mxu0 0
        %1249 = vmatmul.mubr.bf16.gmra.mrb[0].mxu0 %v1211
        %v1250 = vpop.f32.mrb[0].mxu0
        %v1251 = vadd.f32 0.0, %v1250
        %v1252 = vpop.f32.mrb[0].mxu0
        %v1253 = vpop.f32.mrb[0].mxu0
        %v1254 = vpop.f32.mrb[0].mxu0
        %1255 = vdwg.mxu0
        %v1256 = vpack.c.bf16 %v1251, %v1251
        %v1258 = vunpack.c.l.b16 %v1256
        %v1259 = vpack.c.b16 %v1258, %v1258
        %1260 = vrot.lane.b32.xlu0 %v1259, 64
        %v1261 = vpop.permute.xlu0 %1260
        %vm1263 = vcmask 781824
        %1264 = vst.msk [vmem:[#allocation2] sm:$0xf] %vm1263, %v1261
        %1265 = vrot.lane.b32.xlu0 %v911, 32
        %v1266 = vpop.permute.xlu0 %1265
        %1267 = vrot.lane.b32.xlu0 %v912, 32
        %v1268 = vpop.permute.xlu0 %1267
        %v1270 = vsel %vm914, %v1266, 0
        %v1273 = vsel %vm914, %v1268, 0
        %1275 = vmatprep.subr.bf16.mxu0 0
        %1276 = vmatpush1.bf16.xpose.msra.mxu0 %v1273
        %1277 = vmatprep.subr.bf16.mxu0 0
        %1278 = vmatpush1.bf16.xpose.msra.mxu0 0
        %1279 = vmatprep.subr.bf16.mxu0 0
        %1280 = vmatpush1.bf16.xpose.msra.mxu0 0
        %1281 = vmatprep.subr.bf16.mxu0 0
        %1282 = vmatpush1.bf16.xpose.msra.mxu0 0
        %1283 = vmatprep.subr.bf16.mxu0 0
        %1284 = vmatpush1.bf16.xpose.msra.mxu0 0
        %1285 = vmatprep.subr.bf16.mxu0 0
        %1286 = vmatpush1.bf16.xpose.msra.mxu0 0
        %1287 = vmatprep.subr.bf16.mxu0 0
        %1288 = vmatpush1.bf16.xpose.msra.mxu0 0
        %1289 = vmatprep.subr.bf16.mxu0 0
        %1290 = vmatpush1.bf16.xpose.msra.mxu0 0
        %1291 = vmatprep.subr.bf16.mxu0 0
        %1292 = vmatpush1.bf16.xpose.msra.mxu0 0
        %1293 = vmatprep.subr.bf16.mxu0 0
        %1294 = vmatpush1.bf16.xpose.msra.mxu0 0
        %1295 = vmatprep.subr.bf16.mxu0 0
        %1296 = vmatpush1.bf16.xpose.msra.mxu0 0
        %1297 = vmatprep.subr.bf16.mxu0 0
        %1298 = vmatpush1.bf16.xpose.msra.mxu0 0
        %1299 = vmatprep.subr.bf16.mxu0 0
        %1300 = vmatpush1.bf16.xpose.msra.mxu0 0
        %1301 = vmatprep.subr.bf16.mxu0 0
        %1302 = vmatpush1.bf16.xpose.msra.mxu0 0
        %1303 = vmatprep.subr.bf16.mxu0 0
        %1304 = vmatpush1.bf16.xpose.msra.mxu0 0
        %1305 = vmatprep.subr.bf16.mxu0 0
        %1306 = vmatpush1.bf16.xpose.msra.mxu0 0
        %1307 = vmatprep.mubr.bf16.mxu0 0
        %1308 = vmatmul.mubr.bf16.gmra.mrb[0].mxu0 %v1270
        %v1309 = vpop.f32.mrb[0].mxu0
        %v1310 = vadd.f32 0.0, %v1309
        %v1311 = vpop.f32.mrb[0].mxu0
        %v1312 = vpop.f32.mrb[0].mxu0
        %v1313 = vpop.f32.mrb[0].mxu0
        %1314 = vdwg.mxu0
        %v1315 = vsel %vm961, %v1310, -inf
        %1316 = vmax.xlane.f32.xlu0 %v1315
        %v1317 = vpop.xlane.xlu0 %1316
        %v1318 = vsub.f32 %v1310, %v1317
        %v1319 = vmul.f32 %v1318, 1.442695
        %v1320 = vpow.pop %v1319
        %v1321 = vsel %vm961, %v1320, 0.0
        %1322 = vadd.xlane.f32.xlu0 %v1321
        %v1323 = vpop.xlane.xlu0 %1322
        %v1324 = vrcp.pop %v1323
        %v1325 = vmul.f32 %v1320, %v1324
        %v1326 = vpack.c.bf16 %v1325, %v1325
        %1327 = vrot.lane.b32.xlu0 %v913, 32
        %v1328 = vpop.permute.xlu0 %1327
        %v1330 = vsel %vm961, %v1326, 0
        %v1333 = vsel %vm977, %v1328, 0
        %1335 = vmatprep.subr.bf16.mxu0 0
        %1336 = vmatpush1.bf16.msra.mxu0 %v1333
        %1337 = vmatprep.subr.bf16.mxu0 0
        %1338 = vmatpush1.bf16.msra.mxu0 0
        %1339 = vmatprep.subr.bf16.mxu0 0
        %1340 = vmatpush1.bf16.msra.mxu0 0
        %1341 = vmatprep.subr.bf16.mxu0 0
        %1342 = vmatpush1.bf16.msra.mxu0 0
        %1343 = vmatprep.subr.bf16.mxu0 0
        %1344 = vmatpush1.bf16.msra.mxu0 0
        %1345 = vmatprep.subr.bf16.mxu0 0
        %1346 = vmatpush1.bf16.msra.mxu0 0
        %1347 = vmatprep.subr.bf16.mxu0 0
        %1348 = vmatpush1.bf16.msra.mxu0 0
        %1349 = vmatprep.subr.bf16.mxu0 0
        %1350 = vmatpush1.bf16.msra.mxu0 0
        %1351 = vmatprep.subr.bf16.mxu0 0
        %1352 = vmatpush1.bf16.msra.mxu0 0
        %1353 = vmatprep.subr.bf16.mxu0 0
        %1354 = vmatpush1.bf16.msra.mxu0 0
        %1355 = vmatprep.subr.bf16.mxu0 0
        %1356 = vmatpush1.bf16.msra.mxu0 0
        %1357 = vmatprep.subr.bf16.mxu0 0
        %1358 = vmatpush1.bf16.msra.mxu0 0
        %1359 = vmatprep.subr.bf16.mxu0 0
        %1360 = vmatpush1.bf16.msra.mxu0 0
        %1361 = vmatprep.subr.bf16.mxu0 0
        %1362 = vmatpush1.bf16.msra.mxu0 0
        %1363 = vmatprep.subr.bf16.mxu0 0
        %1364 = vmatpush1.bf16.msra.mxu0 0
        %1365 = vmatprep.subr.bf16.mxu0 0
        %1366 = vmatpush1.bf16.msra.mxu0 0
        %1367 = vmatprep.mubr.bf16.mxu0 0
        %1368 = vmatmul.mubr.bf16.gmra.mrb[0].mxu0 %v1330
        %v1369 = vpop.f32.mrb[0].mxu0
        %v1370 = vadd.f32 0.0, %v1369
        %v1371 = vpop.f32.mrb[0].mxu0
        %v1372 = vpop.f32.mrb[0].mxu0
        %v1373 = vpop.f32.mrb[0].mxu0
        %1374 = vdwg.mxu0
        %v1375 = vpack.c.bf16 %v1370, %v1370
        %v1377 = vunpack.c.l.b16 %v1375
        %v1378 = vpack.c.b16 %v1377, %v1377
        %1379 = vrot.lane.b32.xlu0 %v1378, 96
        %v1380 = vpop.permute.xlu0 %1379
        %vm1382 = vcmask 1044224
        %1383 = vst.msk [vmem:[#allocation2] sm:$0xf] %vm1382, %v1380
        %v1384 = vld [vmem:[#allocation2] sm:$0xf]
        %v1385 = vld [vmem:[#allocation11] sm:$0xf]
        %v1386 = vld [vmem:[#allocation11 + $0x4] sm:$0xf]
        %v1387 = vld [vmem:[#allocation11 + $0x8] sm:$0xf]
        %v1388 = vld [vmem:[#allocation11 + $0xc] sm:$0xf]
        %v1389 = vld [vmem:[#allocation11 + $0x10] sm:$0xf]
        %v1390 = vld [vmem:[#allocation11 + $0x14] sm:$0xf]
        %v1391 = vld [vmem:[#allocation11 + $0x18] sm:$0xf]
        %v1392 = vld [vmem:[#allocation11 + $0x1c] sm:$0xf]
        %v1393 = vld [vmem:[#allocation11 + $0x20] sm:$0xf]
        %v1394 = vld [vmem:[#allocation11 + $0x24] sm:$0xf]
        %v1395 = vld [vmem:[#allocation11 + $0x28] sm:$0xf]
        %v1396 = vld [vmem:[#allocation11 + $0x2c] sm:$0xf]
        %v1397 = vld [vmem:[#allocation11 + $0x30] sm:$0xf]
        %v1398 = vld [vmem:[#allocation11 + $0x34] sm:$0xf]
        %v1399 = vld [vmem:[#allocation11 + $0x38] sm:$0xf]
        %v1400 = vld [vmem:[#allocation11 + $0x3c] sm:$0xf]
        %v1401 = vld [vmem:[%s7] sm:$0x1]
        %v1403 = vlaneseq
        %v1404 = vshrl.u32 %v1403, 7
        %v1405 = vsub.s32 0, %v1404
        %v1406 = vrot.slane %v1401, %v1405
        %v1424 = vunpack.c.l.b16 %v1385
        %v1425 = vunpack.c.l.b16 %v1386
        %v1426 = vunpack.c.l.b16 %v1387
        %v1427 = vunpack.c.l.b16 %v1388
        %v1428 = vunpack.c.l.b16 %v1389
        %v1429 = vunpack.c.l.b16 %v1390
        %v1430 = vunpack.c.l.b16 %v1391
        %v1431 = vunpack.c.l.b16 %v1392
        %v1432 = vunpack.c.l.b16 %v1393
        %v1433 = vunpack.c.l.b16 %v1394
        %v1434 = vunpack.c.l.b16 %v1395
        %v1435 = vunpack.c.l.b16 %v1396
        %v1436 = vunpack.c.l.b16 %v1397
        %v1437 = vunpack.c.l.b16 %v1398
        %v1438 = vunpack.c.l.b16 %v1399
        %v1439 = vunpack.c.l.b16 %v1400
        %v1440 = vpack.c.b16 %v1425, %v1424
        %v1441 = vpack.c.b16 %v1427, %v1426
        %v1442 = vpack.c.b16 %v1429, %v1428
        %v1443 = vpack.c.b16 %v1431, %v1430
        %v1444 = vpack.c.b16 %v1433, %v1432
        %v1445 = vpack.c.b16 %v1435, %v1434
        %v1446 = vpack.c.b16 %v1437, %v1436
        %v1447 = vpack.c.b16 %v1439, %v1438
        %1456 = vmatprep.subr.bf16.mxu0 0
        %1457 = vmatpush1.bf16.msra.mxu0 %v1440
        %1458 = vmatprep.subr.bf16.mxu0 0
        %1459 = vmatpush1.bf16.msra.mxu0 %v1441
        %1460 = vmatprep.subr.bf16.mxu0 0
        %1461 = vmatpush1.bf16.msra.mxu0 %v1442
        %1462 = vmatprep.subr.bf16.mxu0 0
        %1463 = vmatpush1.bf16.msra.mxu0 %v1443
        %1464 = vmatprep.subr.bf16.mxu0 0
        %1465 = vmatpush1.bf16.msra.mxu0 %v1444
        %1466 = vmatprep.subr.bf16.mxu0 0
        %1467 = vmatpush1.bf16.msra.mxu0 %v1445
        %1468 = vmatprep.subr.bf16.mxu0 0
        %1469 = vmatpush1.bf16.msra.mxu0 %v1446
        %1470 = vmatprep.subr.bf16.mxu0 0
        %1471 = vmatpush1.bf16.msra.mxu0 %v1447
        %1472 = vmatprep.subr.bf16.mxu0 0
        %1473 = vmatpush1.bf16.msra.mxu0 0
        %1474 = vmatprep.subr.bf16.mxu0 0
        %1475 = vmatpush1.bf16.msra.mxu0 0
        %1476 = vmatprep.subr.bf16.mxu0 0
        %1477 = vmatpush1.bf16.msra.mxu0 0
        %1478 = vmatprep.subr.bf16.mxu0 0
        %1479 = vmatpush1.bf16.msra.mxu0 0
        %1480 = vmatprep.subr.bf16.mxu0 0
        %1481 = vmatpush1.bf16.msra.mxu0 0
        %1482 = vmatprep.subr.bf16.mxu0 0
        %1483 = vmatpush1.bf16.msra.mxu0 0
        %1484 = vmatprep.subr.bf16.mxu0 0
        %1485 = vmatpush1.bf16.msra.mxu0 0
        %1486 = vmatprep.subr.bf16.mxu0 0
        %1487 = vmatpush1.bf16.msra.mxu0 0
        %1488 = vmatprep.mubr.bf16.mxu0 0
        %1489 = vmatmul.mubr.bf16.gmra.mrb[0].mxu0 %v1384
        %v1490 = vpop.f32.mrb[0].mxu0
        %v1491 = vadd.f32 %v1406, %v1490
        %v1492 = vpop.f32.mrb[0].mxu0
        %v1493 = vpop.f32.mrb[0].mxu0
        %v1494 = vpop.f32.mrb[0].mxu0
        %1495 = vdwg.mxu0
        %v1496 = vadd.f32 %v647, %v1491
        %v1497 = vld [vmem:[%s8] sm:$0x1]
        %v1498 = vld [vmem:[%s9] sm:$0x1]
        %1499 = vadd.xlane.f32.xlu0 %v1496
        %v1500 = vpop.xlane.xlu0 %1499
        %v1501 = vrcp.pop 128.0
        %v1502 = vmul.f32 %v1500, %v1501
        %v1503 = vsub.f32 %v1496, %v1502
        %v1504 = vmul.f32 %v1503, %v1503
        %1505 = vadd.xlane.f32.xlu0 %v1504
        %v1506 = vpop.xlane.xlu0 %1505
        %v1507 = vmul.f32 %v1506, %v1501
        %v1508 = vadd.f32 %v1507, 1e-05
        %v1509 = vrsqrt.pop %v1508
        %v1510 = vmul.f32 %v1503, %v1509
        %v1512 = vlaneseq
        %v1513 = vshrl.u32 %v1512, 7
        %v1514 = vsub.s32 0, %v1513
        %v1515 = vrot.slane %v1497, %v1514
        %v1517 = vmul.f32 %v1510, %v1515
        %v1519 = vlaneseq
        %v1520 = vshrl.u32 %v1519, 7
        %v1521 = vsub.s32 0, %v1520
        %v1522 = vrot.slane %v1498, %v1521
        %v1524 = vadd.f32 %v1517, %v1522
        %v1525 = vpack.c.bf16 %v1524, %v1524
        %v1526 = vld [vmem:[#allocation12] sm:$0xff]
        %v1527 = vld [vmem:[#allocation12 + $0x8] sm:$0xff]
        %v1528 = vld [vmem:[#allocation12 + $0x10] sm:$0xff]
        %v1529 = vld [vmem:[#allocation12 + $0x18] sm:$0xff]
        %v1530 = vld [vmem:[#allocation12 + $0x20] sm:$0xff]
        %v1531 = vld [vmem:[#allocation12 + $0x28] sm:$0xff]
        %v1532 = vld [vmem:[#allocation12 + $0x30] sm:$0xff]
        %v1533 = vld [vmem:[#allocation12 + $0x38] sm:$0xff]
        %v1534 = vld [vmem:[#allocation12 + $0x40] sm:$0xff]
        %v1535 = vld [vmem:[#allocation12 + $0x48] sm:$0xff]
        %v1536 = vld [vmem:[#allocation12 + $0x50] sm:$0xff]
        %v1537 = vld [vmem:[#allocation12 + $0x58] sm:$0xff]
        %v1538 = vld [vmem:[#allocation12 + $0x60] sm:$0xff]
        %v1539 = vld [vmem:[#allocation12 + $0x68] sm:$0xff]
        %v1540 = vld [vmem:[#allocation12 + $0x70] sm:$0xff]
        %v1541 = vld [vmem:[#allocation12 + $0x78] sm:$0xff]
        %v1542 = vld [vmem:[%s11] sm:$0x3]
        %v1544 = vlaneseq
        %v1545 = vshrl.u32 %v1544, 7
        %v1546 = vsub.s32 0, %v1545
        %v1547 = vrot.slane %v1542, %v1546
        %v1548 = vlaneseq
        %v1549 = vshrl.u32 %v1548, 7
        %v1550 = vsub.s32 1, %v1549
        %v1551 = vrot.slane %v1542, %v1550
        %v1570 = vunpack.c.l.b16 %v1526
        %v1571 = vunpack.c.h.b16 %v1526
        %v1572 = vunpack.c.l.b16 %v1527
        %v1573 = vunpack.c.h.b16 %v1527
        %v1574 = vunpack.c.l.b16 %v1528
        %v1575 = vunpack.c.h.b16 %v1528
        %v1576 = vunpack.c.l.b16 %v1529
        %v1577 = vunpack.c.h.b16 %v1529
        %v1578 = vunpack.c.l.b16 %v1530
        %v1579 = vunpack.c.h.b16 %v1530
        %v1580 = vunpack.c.l.b16 %v1531
        %v1581 = vunpack.c.h.b16 %v1531
        %v1582 = vunpack.c.l.b16 %v1532
        %v1583 = vunpack.c.h.b16 %v1532
        %v1584 = vunpack.c.l.b16 %v1533
        %v1585 = vunpack.c.h.b16 %v1533
        %v1586 = vunpack.c.l.b16 %v1534
        %v1587 = vunpack.c.h.b16 %v1534
        %v1588 = vunpack.c.l.b16 %v1535
        %v1589 = vunpack.c.h.b16 %v1535
        %v1590 = vunpack.c.l.b16 %v1536
        %v1591 = vunpack.c.h.b16 %v1536
        %v1592 = vunpack.c.l.b16 %v1537
        %v1593 = vunpack.c.h.b16 %v1537
        %v1594 = vunpack.c.l.b16 %v1538
        %v1595 = vunpack.c.h.b16 %v1538
        %v1596 = vunpack.c.l.b16 %v1539
        %v1597 = vunpack.c.h.b16 %v1539
        %v1598 = vunpack.c.l.b16 %v1540
        %v1599 = vunpack.c.h.b16 %v1540
        %v1600 = vunpack.c.l.b16 %v1541
        %v1601 = vunpack.c.h.b16 %v1541
        %v1602 = vpack.c.b16 %v1572, %v1570
        %v1603 = vpack.c.b16 %v1573, %v1571
        %v1604 = vpack.c.b16 %v1576, %v1574
        %v1605 = vpack.c.b16 %v1577, %v1575
        %v1606 = vpack.c.b16 %v1580, %v1578
        %v1607 = vpack.c.b16 %v1581, %v1579
        %v1608 = vpack.c.b16 %v1584, %v1582
        %v1609 = vpack.c.b16 %v1585, %v1583
        %v1610 = vpack.c.b16 %v1588, %v1586
        %v1611 = vpack.c.b16 %v1589, %v1587
        %v1612 = vpack.c.b16 %v1592, %v1590
        %v1613 = vpack.c.b16 %v1593, %v1591
        %v1614 = vpack.c.b16 %v1596, %v1594
        %v1615 = vpack.c.b16 %v1597, %v1595
        %v1616 = vpack.c.b16 %v1600, %v1598
        %v1617 = vpack.c.b16 %v1601, %v1599
        %1634 = vmatprep.subr.bf16.mxu0 %v1603
        %1635 = vmatpush1.bf16.msra.mxu0 %v1602
        %1636 = vmatprep.subr.bf16.mxu0 %v1605
        %1637 = vmatpush1.bf16.msra.mxu0 %v1604
        %1638 = vmatprep.subr.bf16.mxu0 %v1607
        %1639 = vmatpush1.bf16.msra.mxu0 %v1606
        %1640 = vmatprep.subr.bf16.mxu0 %v1609
        %1641 = vmatpush1.bf16.msra.mxu0 %v1608
        %1642 = vmatprep.subr.bf16.mxu0 %v1611
        %1643 = vmatpush1.bf16.msra.mxu0 %v1610
        %1644 = vmatprep.subr.bf16.mxu0 %v1613
        %1645 = vmatpush1.bf16.msra.mxu0 %v1612
        %1646 = vmatprep.subr.bf16.mxu0 %v1615
        %1647 = vmatpush1.bf16.msra.mxu0 %v1614
        %1648 = vmatprep.subr.bf16.mxu0 %v1617
        %1649 = vmatpush1.bf16.msra.mxu0 %v1616
        %1650 = vmatprep.subr.bf16.mxu0 0
        %1651 = vmatpush1.bf16.msra.mxu0 0
        %1652 = vmatprep.subr.bf16.mxu0 0
        %1653 = vmatpush1.bf16.msra.mxu0 0
        %1654 = vmatprep.subr.bf16.mxu0 0
        %1655 = vmatpush1.bf16.msra.mxu0 0
        %1656 = vmatprep.subr.bf16.mxu0 0
        %1657 = vmatpush1.bf16.msra.mxu0 0
        %1658 = vmatprep.subr.bf16.mxu0 0
        %1659 = vmatpush1.bf16.msra.mxu0 0
        %1660 = vmatprep.subr.bf16.mxu0 0
        %1661 = vmatpush1.bf16.msra.mxu0 0
        %1662 = vmatprep.subr.bf16.mxu0 0
        %1663 = vmatpush1.bf16.msra.mxu0 0
        %1664 = vmatprep.subr.bf16.mxu0 0
        %1665 = vmatpush1.bf16.msra.mxu0 0
        %1666 = vmatprep.mubr.bf16.mxu0 0
        %1667 = vmatmul.mubr.bf16.gmra.mrb[0].mxu0 %v1525
        %v1668 = vpop.f32.mrb[0].mxu0
        %v1669 = vadd.f32 %v1547, %v1668
        %v1670 = vpop.f32.mrb[0].mxu0
        %v1671 = vadd.f32 %v1551, %v1670
        %v1672 = vpop.f32.mrb[0].mxu0
        %v1673 = vpop.f32.mrb[0].mxu0
        %1674 = vdwg.mxu0
        %v1675 = vmax.f32 %v1669, 0.0
        %v1676 = vmax.f32 %v1671, 0.0
        %v1677 = vpack.c.bf16 %v1675, %v1675
        %v1678 = vpack.c.bf16 %v1676, %v1676
        %v1679 = vld [vmem:[#allocation14] sm:$0xf]
        %v1680 = vld [vmem:[#allocation14 + $0x4] sm:$0xf]
        %v1681 = vld [vmem:[#allocation14 + $0x8] sm:$0xf]
        %v1682 = vld [vmem:[#allocation14 + $0xc] sm:$0xf]
        %v1683 = vld [vmem:[#allocation14 + $0x10] sm:$0xf]
        %v1684 = vld [vmem:[#allocation14 + $0x14] sm:$0xf]
        %v1685 = vld [vmem:[#allocation14 + $0x18] sm:$0xf]
        %v1686 = vld [vmem:[#allocation14 + $0x1c] sm:$0xf]
        %v1687 = vld [vmem:[#allocation14 + $0x20] sm:$0xf]
        %v1688 = vld [vmem:[#allocation14 + $0x24] sm:$0xf]
        %v1689 = vld [vmem:[#allocation14 + $0x28] sm:$0xf]
        %v1690 = vld [vmem:[#allocation14 + $0x2c] sm:$0xf]
        %v1691 = vld [vmem:[#allocation14 + $0x30] sm:$0xf]
        %v1692 = vld [vmem:[#allocation14 + $0x34] sm:$0xf]
        %v1693 = vld [vmem:[#allocation14 + $0x38] sm:$0xf]
        %v1694 = vld [vmem:[#allocation14 + $0x3c] sm:$0xf]
        %v1695 = vld [vmem:[#allocation14 + $0x40] sm:$0xf]
        %v1696 = vld [vmem:[#allocation14 + $0x44] sm:$0xf]
        %v1697 = vld [vmem:[#allocation14 + $0x48] sm:$0xf]
        %v1698 = vld [vmem:[#allocation14 + $0x4c] sm:$0xf]
        %v1699 = vld [vmem:[#allocation14 + $0x50] sm:$0xf]
        %v1700 = vld [vmem:[#allocation14 + $0x54] sm:$0xf]
        %v1701 = vld [vmem:[#allocation14 + $0x58] sm:$0xf]
        %v1702 = vld [vmem:[#allocation14 + $0x5c] sm:$0xf]
        %v1703 = vld [vmem:[#allocation14 + $0x60] sm:$0xf]
        %v1704 = vld [vmem:[#allocation14 + $0x64] sm:$0xf]
        %v1705 = vld [vmem:[#allocation14 + $0x68] sm:$0xf]
        %v1706 = vld [vmem:[#allocation14 + $0x6c] sm:$0xf]
        %v1707 = vld [vmem:[#allocation14 + $0x70] sm:$0xf]
        %v1708 = vld [vmem:[#allocation14 + $0x74] sm:$0xf]
        %v1709 = vld [vmem:[#allocation14 + $0x78] sm:$0xf]
        %v1710 = vld [vmem:[#allocation14 + $0x7c] sm:$0xf]
        %v1711 = vld [vmem:[%s13] sm:$0x1]
        %v1713 = vlaneseq
        %v1714 = vshrl.u32 %v1713, 7
        %v1715 = vsub.s32 0, %v1714
        %v1716 = vrot.slane %v1711, %v1715
        %v1750 = vunpack.c.l.b16 %v1679
        %v1751 = vunpack.c.l.b16 %v1680
        %v1752 = vunpack.c.l.b16 %v1681
        %v1753 = vunpack.c.l.b16 %v1682
        %v1754 = vunpack.c.l.b16 %v1683
        %v1755 = vunpack.c.l.b16 %v1684
        %v1756 = vunpack.c.l.b16 %v1685
        %v1757 = vunpack.c.l.b16 %v1686
        %v1758 = vunpack.c.l.b16 %v1687
        %v1759 = vunpack.c.l.b16 %v1688
        %v1760 = vunpack.c.l.b16 %v1689
        %v1761 = vunpack.c.l.b16 %v1690
        %v1762 = vunpack.c.l.b16 %v1691
        %v1763 = vunpack.c.l.b16 %v1692
        %v1764 = vunpack.c.l.b16 %v1693
        %v1765 = vunpack.c.l.b16 %v1694
        %v1766 = vunpack.c.l.b16 %v1695
        %v1767 = vunpack.c.l.b16 %v1696
        %v1768 = vunpack.c.l.b16 %v1697
        %v1769 = vunpack.c.l.b16 %v1698
        %v1770 = vunpack.c.l.b16 %v1699
        %v1771 = vunpack.c.l.b16 %v1700
        %v1772 = vunpack.c.l.b16 %v1701
        %v1773 = vunpack.c.l.b16 %v1702
        %v1774 = vunpack.c.l.b16 %v1703
        %v1775 = vunpack.c.l.b16 %v1704
        %v1776 = vunpack.c.l.b16 %v1705
        %v1777 = vunpack.c.l.b16 %v1706
        %v1778 = vunpack.c.l.b16 %v1707
        %v1779 = vunpack.c.l.b16 %v1708
        %v1780 = vunpack.c.l.b16 %v1709
        %v1781 = vunpack.c.l.b16 %v1710
        %v1782 = vpack.c.b16 %v1751, %v1750
        %v1783 = vpack.c.b16 %v1753, %v1752
        %v1784 = vpack.c.b16 %v1755, %v1754
        %v1785 = vpack.c.b16 %v1757, %v1756
        %v1786 = vpack.c.b16 %v1759, %v1758
        %v1787 = vpack.c.b16 %v1761, %v1760
        %v1788 = vpack.c.b16 %v1763, %v1762
        %v1789 = vpack.c.b16 %v1765, %v1764
        %v1790 = vpack.c.b16 %v1767, %v1766
        %v1791 = vpack.c.b16 %v1769, %v1768
        %v1792 = vpack.c.b16 %v1771, %v1770
        %v1793 = vpack.c.b16 %v1773, %v1772
        %v1794 = vpack.c.b16 %v1775, %v1774
        %v1795 = vpack.c.b16 %v1777, %v1776
        %v1796 = vpack.c.b16 %v1779, %v1778
        %v1797 = vpack.c.b16 %v1781, %v1780
        %1814 = vmatprep.subr.bf16.mxu0 0
        %1815 = vmatpush1.bf16.msra.mxu0 %v1782
        %1816 = vmatprep.subr.bf16.mxu0 0
        %1817 = vmatpush1.bf16.msra.mxu0 %v1783
        %1818 = vmatprep.subr.bf16.mxu0 0
        %1819 = vmatpush1.bf16.msra.mxu0 %v1784
        %1820 = vmatprep.subr.bf16.mxu0 0
        %1821 = vmatpush1.bf16.msra.mxu0 %v1785
        %1822 = vmatprep.subr.bf16.mxu0 0
        %1823 = vmatpush1.bf16.msra.mxu0 %v1786
        %1824 = vmatprep.subr.bf16.mxu0 0
        %1825 = vmatpush1.bf16.msra.mxu0 %v1787
        %1826 = vmatprep.subr.bf16.mxu0 0
        %1827 = vmatpush1.bf16.msra.mxu0 %v1788
        %1828 = vmatprep.subr.bf16.mxu0 0
        %1829 = vmatpush1.bf16.msra.mxu0 %v1789
        %1830 = vmatprep.subr.bf16.mxu0 0
        %1831 = vmatpush1.bf16.msra.mxu0 %v1790
        %1832 = vmatprep.subr.bf16.mxu0 0
        %1833 = vmatpush1.bf16.msra.mxu0 %v1791
        %1834 = vmatprep.subr.bf16.mxu0 0
        %1835 = vmatpush1.bf16.msra.mxu0 %v1792
        %1836 = vmatprep.subr.bf16.mxu0 0
        %1837 = vmatpush1.bf16.msra.mxu0 %v1793
        %1838 = vmatprep.subr.bf16.mxu0 0
        %1839 = vmatpush1.bf16.msra.mxu0 %v1794
        %1840 = vmatprep.subr.bf16.mxu0 0
        %1841 = vmatpush1.bf16.msra.mxu0 %v1795
        %1842 = vmatprep.subr.bf16.mxu0 0
        %1843 = vmatpush1.bf16.msra.mxu0 %v1796
        %1844 = vmatprep.subr.bf16.mxu0 0
        %1845 = vmatpush1.bf16.msra.mxu0 %v1797
        %1846 = vmatprep.mubr.bf16.mxu0 %v1678
        %1847 = vmatmul.mubr.bf16.gmra.mrb[0].mxu0 %v1677
        %v1848 = vpop.f32.mrb[0].mxu0
        %v1849 = vadd.f32 %v1716, %v1848
        %v1850 = vpop.f32.mrb[0].mxu0
        %v1851 = vpop.f32.mrb[0].mxu0
        %v1852 = vpop.f32.mrb[0].mxu0
        %1853 = vdwg.mxu0
        %v1854 = vadd.f32 %v1524, %v1849
        %v1855 = vld [vmem:[%s14] sm:$0x1]
        %v1856 = vld [vmem:[%s15] sm:$0x1]
        %1857 = vadd.xlane.f32.xlu0 %v1854
        %v1858 = vpop.xlane.xlu0 %1857
        %v1859 = vmul.f32 %v1858, %v1501
        %v1860 = vsub.f32 %v1854, %v1859
        %v1861 = vmul.f32 %v1860, %v1860
        %1862 = vadd.xlane.f32.xlu0 %v1861
        %v1863 = vpop.xlane.xlu0 %1862
        %v1864 = vmul.f32 %v1863, %v1501
        %v1865 = vadd.f32 %v1864, 1e-05
        %v1866 = vrsqrt.pop %v1865
        %v1867 = vmul.f32 %v1860, %v1866
        %v1869 = vlaneseq
        %v1870 = vshrl.u32 %v1869, 7
        %v1871 = vsub.s32 0, %v1870
        %v1872 = vrot.slane %v1855, %v1871
        %v1874 = vmul.f32 %v1867, %v1872
        %v1876 = vlaneseq
        %v1877 = vshrl.u32 %v1876, 7
        %v1878 = vsub.s32 0, %v1877
        %v1879 = vrot.slane %v1856, %v1878
        %v1881 = vadd.f32 %v1874, %v1879
        %v1882 = vpack.c.bf16 %v1881, %v1881
        %s1883 = scalar_lea.vmem [#allocation8], 64
        %v1884 = vld [vmem:[%s1883] sm:$0xf]
        %v1885 = vld [vmem:[%s1883 + $0x4] sm:$0xf]
        %v1886 = vld [vmem:[%s1883 + $0x8] sm:$0xf]
        %v1887 = vld [vmem:[%s1883 + $0xc] sm:$0xf]
        %v1888 = vld [vmem:[%s1883 + $0x10] sm:$0xf]
        %v1889 = vld [vmem:[%s1883 + $0x14] sm:$0xf]
        %v1890 = vld [vmem:[%s1883 + $0x18] sm:$0xf]
        %v1891 = vld [vmem:[%s1883 + $0x1c] sm:$0xf]
        %v1892 = vld [vmem:[%s1883 + $0x20] sm:$0xf]
        %v1893 = vld [vmem:[%s1883 + $0x24] sm:$0xf]
        %v1894 = vld [vmem:[%s1883 + $0x28] sm:$0xf]
        %v1895 = vld [vmem:[%s1883 + $0x2c] sm:$0xf]
        %v1896 = vld [vmem:[%s1883 + $0x30] sm:$0xf]
        %v1897 = vld [vmem:[%s1883 + $0x34] sm:$0xf]
        %v1898 = vld [vmem:[%s1883 + $0x38] sm:$0xf]
        %v1899 = vld [vmem:[%s1883 + $0x3c] sm:$0xf]
        %s1900 = scalar_lea.vmem %s3, 1
        %v1901 = vld [vmem:[%s1900] sm:$0x1]
        %v1903 = vlaneseq
        %v1904 = vshrl.u32 %v1903, 7
        %v1905 = vsub.s32 0, %v1904
        %v1906 = vrot.slane %v1901, %v1905
        %v1924 = vunpack.c.l.b16 %v1884
        %v1925 = vunpack.c.l.b16 %v1885
        %v1926 = vunpack.c.l.b16 %v1886
        %v1927 = vunpack.c.l.b16 %v1887
        %v1928 = vunpack.c.l.b16 %v1888
        %v1929 = vunpack.c.l.b16 %v1889
        %v1930 = vunpack.c.l.b16 %v1890
        %v1931 = vunpack.c.l.b16 %v1891
        %v1932 = vunpack.c.l.b16 %v1892
        %v1933 = vunpack.c.l.b16 %v1893
        %v1934 = vunpack.c.l.b16 %v1894
        %v1935 = vunpack.c.l.b16 %v1895
        %v1936 = vunpack.c.l.b16 %v1896
        %v1937 = vunpack.c.l.b16 %v1897
        %v1938 = vunpack.c.l.b16 %v1898
        %v1939 = vunpack.c.l.b16 %v1899
        %v1940 = vpack.c.b16 %v1925, %v1924
        %v1941 = vpack.c.b16 %v1927, %v1926
        %v1942 = vpack.c.b16 %v1929, %v1928
        %v1943 = vpack.c.b16 %v1931, %v1930
        %v1944 = vpack.c.b16 %v1933, %v1932
        %v1945 = vpack.c.b16 %v1935, %v1934
        %v1946 = vpack.c.b16 %v1937, %v1936
        %v1947 = vpack.c.b16 %v1939, %v1938
        %1956 = vmatprep.subr.bf16.mxu0 0
        %1957 = vmatpush1.bf16.msra.mxu0 %v1940
        %1958 = vmatprep.subr.bf16.mxu0 0
        %1959 = vmatpush1.bf16.msra.mxu0 %v1941
        %1960 = vmatprep.subr.bf16.mxu0 0
        %1961 = vmatpush1.bf16.msra.mxu0 %v1942
        %1962 = vmatprep.subr.bf16.mxu0 0
        %1963 = vmatpush1.bf16.msra.mxu0 %v1943
        %1964 = vmatprep.subr.bf16.mxu0 0
        %1965 = vmatpush1.bf16.msra.mxu0 %v1944
        %1966 = vmatprep.subr.bf16.mxu0 0
        %1967 = vmatpush1.bf16.msra.mxu0 %v1945
        %1968 = vmatprep.subr.bf16.mxu0 0
        %1969 = vmatpush1.bf16.msra.mxu0 %v1946
        %1970 = vmatprep.subr.bf16.mxu0 0
        %1971 = vmatpush1.bf16.msra.mxu0 %v1947
        %1972 = vmatprep.subr.bf16.mxu0 0
        %1973 = vmatpush1.bf16.msra.mxu0 0
        %1974 = vmatprep.subr.bf16.mxu0 0
        %1975 = vmatpush1.bf16.msra.mxu0 0
        %1976 = vmatprep.subr.bf16.mxu0 0
        %1977 = vmatpush1.bf16.msra.mxu0 0
        %1978 = vmatprep.subr.bf16.mxu0 0
        %1979 = vmatpush1.bf16.msra.mxu0 0
        %1980 = vmatprep.subr.bf16.mxu0 0
        %1981 = vmatpush1.bf16.msra.mxu0 0
        %1982 = vmatprep.subr.bf16.mxu0 0
        %1983 = vmatpush1.bf16.msra.mxu0 0
        %1984 = vmatprep.subr.bf16.mxu0 0
        %1985 = vmatpush1.bf16.msra.mxu0 0
        %1986 = vmatprep.subr.bf16.mxu0 0
        %1987 = vmatpush1.bf16.msra.mxu0 0
        %1988 = vmatprep.mubr.bf16.mxu0 0
        %1989 = vmatmul.mubr.bf16.gmra.mrb[0].mxu0 %v1882
        %v1990 = vpop.f32.mrb[0].mxu0
        %v1991 = vadd.f32 %v1906, %v1990
        %v1992 = vpop.f32.mrb[0].mxu0
        %v1993 = vpop.f32.mrb[0].mxu0
        %v1994 = vpop.f32.mrb[0].mxu0
        %1995 = vdwg.mxu0
        %s1996 = scalar_lea.vmem [#allocation9], 128
        %v1997 = vld [vmem:[%s1996] sm:$0xff]
        %v1998 = vld [vmem:[%s1996 + $0x8] sm:$0xff]
        %v1999 = vld [vmem:[%s1996 + $0x10] sm:$0xff]
        %v2000 = vld [vmem:[%s1996 + $0x18] sm:$0xff]
        %v2001 = vld [vmem:[%s1996 + $0x20] sm:$0xff]
        %v2002 = vld [vmem:[%s1996 + $0x28] sm:$0xff]
        %v2003 = vld [vmem:[%s1996 + $0x30] sm:$0xff]
        %v2004 = vld [vmem:[%s1996 + $0x38] sm:$0xff]
        %v2005 = vld [vmem:[%s1996 + $0x40] sm:$0xff]
        %v2006 = vld [vmem:[%s1996 + $0x48] sm:$0xff]
        %v2007 = vld [vmem:[%s1996 + $0x50] sm:$0xff]
        %v2008 = vld [vmem:[%s1996 + $0x58] sm:$0xff]
        %v2009 = vld [vmem:[%s1996 + $0x60] sm:$0xff]
        %v2010 = vld [vmem:[%s1996 + $0x68] sm:$0xff]
        %v2011 = vld [vmem:[%s1996 + $0x70] sm:$0xff]
        %v2012 = vld [vmem:[%s1996 + $0x78] sm:$0xff]
        %s2013 = scalar_lea.vmem %s5, 2
        %v2014 = vld [vmem:[%s2013] sm:$0x3]
        %v2016 = vlaneseq
        %v2017 = vshrl.u32 %v2016, 7
        %v2018 = vsub.s32 0, %v2017
        %v2019 = vrot.slane %v2014, %v2018
        %v2020 = vlaneseq
        %v2021 = vshrl.u32 %v2020, 7
        %v2022 = vsub.s32 1, %v2021
        %v2023 = vrot.slane %v2014, %v2022
        %v2042 = vunpack.c.l.b16 %v1997
        %v2043 = vunpack.c.h.b16 %v1997
        %v2044 = vunpack.c.l.b16 %v1998
        %v2045 = vunpack.c.h.b16 %v1998
        %v2046 = vunpack.c.l.b16 %v1999
        %v2047 = vunpack.c.h.b16 %v1999
        %v2048 = vunpack.c.l.b16 %v2000
        %v2049 = vunpack.c.h.b16 %v2000
        %v2050 = vunpack.c.l.b16 %v2001
        %v2051 = vunpack.c.h.b16 %v2001
        %v2052 = vunpack.c.l.b16 %v2002
        %v2053 = vunpack.c.h.b16 %v2002
        %v2054 = vunpack.c.l.b16 %v2003
        %v2055 = vunpack.c.h.b16 %v2003
        %v2056 = vunpack.c.l.b16 %v2004
        %v2057 = vunpack.c.h.b16 %v2004
        %v2058 = vunpack.c.l.b16 %v2005
        %v2059 = vunpack.c.h.b16 %v2005
        %v2060 = vunpack.c.l.b16 %v2006
        %v2061 = vunpack.c.h.b16 %v2006
        %v2062 = vunpack.c.l.b16 %v2007
        %v2063 = vunpack.c.h.b16 %v2007
        %v2064 = vunpack.c.l.b16 %v2008
        %v2065 = vunpack.c.h.b16 %v2008
        %v2066 = vunpack.c.l.b16 %v2009
        %v2067 = vunpack.c.h.b16 %v2009
        %v2068 = vunpack.c.l.b16 %v2010
        %v2069 = vunpack.c.h.b16 %v2010
        %v2070 = vunpack.c.l.b16 %v2011
        %v2071 = vunpack.c.h.b16 %v2011
        %v2072 = vunpack.c.l.b16 %v2012
        %v2073 = vunpack.c.h.b16 %v2012
        %v2074 = vpack.c.b16 %v2044, %v2042
        %v2075 = vpack.c.b16 %v2045, %v2043
        %v2076 = vpack.c.b16 %v2048, %v2046
        %v2077 = vpack.c.b16 %v2049, %v2047
        %v2078 = vpack.c.b16 %v2052, %v2050
        %v2079 = vpack.c.b16 %v2053, %v2051
        %v2080 = vpack.c.b16 %v2056, %v2054
        %v2081 = vpack.c.b16 %v2057, %v2055
        %v2082 = vpack.c.b16 %v2060, %v2058
        %v2083 = vpack.c.b16 %v2061, %v2059
        %v2084 = vpack.c.b16 %v2064, %v2062
        %v2085 = vpack.c.b16 %v2065, %v2063
        %v2086 = vpack.c.b16 %v2068, %v2066
        %v2087 = vpack.c.b16 %v2069, %v2067
        %v2088 = vpack.c.b16 %v2072, %v2070
        %v2089 = vpack.c.b16 %v2073, %v2071
        %2106 = vmatprep.subr.bf16.mxu0 %v2075
        %2107 = vmatpush1.bf16.msra.mxu0 %v2074
        %2108 = vmatprep.subr.bf16.mxu0 %v2077
        %2109 = vmatpush1.bf16.msra.mxu0 %v2076
        %2110 = vmatprep.subr.bf16.mxu0 %v2079
        %2111 = vmatpush1.bf16.msra.mxu0 %v2078
        %2112 = vmatprep.subr.bf16.mxu0 %v2081
        %2113 = vmatpush1.bf16.msra.mxu0 %v2080
        %2114 = vmatprep.subr.bf16.mxu0 %v2083
        %2115 = vmatpush1.bf16.msra.mxu0 %v2082
        %2116 = vmatprep.subr.bf16.mxu0 %v2085
        %2117 = vmatpush1.bf16.msra.mxu0 %v2084
        %2118 = vmatprep.subr.bf16.mxu0 %v2087
        %2119 = vmatpush1.bf16.msra.mxu0 %v2086
        %2120 = vmatprep.subr.bf16.mxu0 %v2089
        %2121 = vmatpush1.bf16.msra.mxu0 %v2088
        %2122 = vmatprep.subr.bf16.mxu0 0
        %2123 = vmatpush1.bf16.msra.mxu0 0
        %2124 = vmatprep.subr.bf16.mxu0 0
        %2125 = vmatpush1.bf16.msra.mxu0 0
        %2126 = vmatprep.subr.bf16.mxu0 0
        %2127 = vmatpush1.bf16.msra.mxu0 0
        %2128 = vmatprep.subr.bf16.mxu0 0
        %2129 = vmatpush1.bf16.msra.mxu0 0
        %2130 = vmatprep.subr.bf16.mxu0 0
        %2131 = vmatpush1.bf16.msra.mxu0 0
        %2132 = vmatprep.subr.bf16.mxu0 0
        %2133 = vmatpush1.bf16.msra.mxu0 0
        %2134 = vmatprep.subr.bf16.mxu0 0
        %2135 = vmatpush1.bf16.msra.mxu0 0
        %2136 = vmatprep.subr.bf16.mxu0 0
        %2137 = vmatpush1.bf16.msra.mxu0 0
        %2138 = vmatprep.mubr.bf16.mxu0 0
        %2139 = vmatmul.mubr.bf16.gmra.mrb[0].mxu0 %v649
        %v2140 = vpop.f32.mrb[0].mxu0
        %v2141 = vadd.f32 %v2019, %v2140
        %v2142 = vpop.f32.mrb[0].mxu0
        %v2143 = vadd.f32 %v2023, %v2142
        %v2144 = vpop.f32.mrb[0].mxu0
        %v2145 = vpop.f32.mrb[0].mxu0
        %2146 = vdwg.mxu0
        %v2147 = vpack.c.bf16 %v1991, %v1991
        %v2148 = vpack.c.bf16 %v2141, %v2141
        %v2149 = vpack.c.bf16 %v2143, %v2143
        %v2151 = vsel %vm914, %v2147, 0
        %v2154 = vsel %vm914, %v2148, 0
        %2156 = vmatprep.subr.bf16.mxu0 0
        %2157 = vmatpush1.bf16.xpose.msra.mxu0 %v2154
        %2158 = vmatprep.subr.bf16.mxu0 0
        %2159 = vmatpush1.bf16.xpose.msra.mxu0 0
        %2160 = vmatprep.subr.bf16.mxu0 0
        %2161 = vmatpush1.bf16.xpose.msra.mxu0 0
        %2162 = vmatprep.subr.bf16.mxu0 0
        %2163 = vmatpush1.bf16.xpose.msra.mxu0 0
        %2164 = vmatprep.subr.bf16.mxu0 0
        %2165 = vmatpush1.bf16.xpose.msra.mxu0 0
        %2166 = vmatprep.subr.bf16.mxu0 0
        %2167 = vmatpush1.bf16.xpose.msra.mxu0 0
        %2168 = vmatprep.subr.bf16.mxu0 0
        %2169 = vmatpush1.bf16.xpose.msra.mxu0 0
        %2170 = vmatprep.subr.bf16.mxu0 0
        %2171 = vmatpush1.bf16.xpose.msra.mxu0 0
        %2172 = vmatprep.subr.bf16.mxu0 0
        %2173 = vmatpush1.bf16.xpose.msra.mxu0 0
        %2174 = vmatprep.subr.bf16.mxu0 0
        %2175 = vmatpush1.bf16.xpose.msra.mxu0 0
        %2176 = vmatprep.subr.bf16.mxu0 0
        %2177 = vmatpush1.bf16.xpose.msra.mxu0 0
        %2178 = vmatprep.subr.bf16.mxu0 0
        %2179 = vmatpush1.bf16.xpose.msra.mxu0 0
        %2180 = vmatprep.subr.bf16.mxu0 0
        %2181 = vmatpush1.bf16.xpose.msra.mxu0 0
        %2182 = vmatprep.subr.bf16.mxu0 0
        %2183 = vmatpush1.bf16.xpose.msra.mxu0 0
        %2184 = vmatprep.subr.bf16.mxu0 0
        %2185 = vmatpush1.bf16.xpose.msra.mxu0 0
        %2186 = vmatprep.subr.bf16.mxu0 0
        %2187 = vmatpush1.bf16.xpose.msra.mxu0 0
        %2188 = vmatprep.mubr.bf16.mxu0 0
        %2189 = vmatmul.mubr.bf16.gmra.mrb[0].mxu0 %v2151
        %v2190 = vpop.f32.mrb[0].mxu0
        %v2191 = vadd.f32 0.0, %v2190
        %v2192 = vpop.f32.mrb[0].mxu0
        %v2193 = vpop.f32.mrb[0].mxu0
        %v2194 = vpop.f32.mrb[0].mxu0
        %2195 = vdwg.mxu0
        %v2196 = vsel %vm961, %v2191, -inf
        %2197 = vmax.xlane.f32.xlu0 %v2196
        %v2198 = vpop.xlane.xlu0 %2197
        %v2199 = vsub.f32 %v2191, %v2198
        %v2200 = vmul.f32 %v2199, 1.442695
        %v2201 = vpow.pop %v2200
        %v2202 = vsel %vm961, %v2201, 0.0
        %2203 = vadd.xlane.f32.xlu0 %v2202
        %v2204 = vpop.xlane.xlu0 %2203
        %v2205 = vrcp.pop %v2204
        %v2206 = vmul.f32 %v2201, %v2205
        %v2207 = vpack.c.bf16 %v2206, %v2206
        %v2209 = vsel %vm961, %v2207, 0
        %v2212 = vsel %vm977, %v2149, 0
        %2214 = vmatprep.subr.bf16.mxu0 0
        %2215 = vmatpush1.bf16.msra.mxu0 %v2212
        %2216 = vmatprep.subr.bf16.mxu0 0
        %2217 = vmatpush1.bf16.msra.mxu0 0
        %2218 = vmatprep.subr.bf16.mxu0 0
        %2219 = vmatpush1.bf16.msra.mxu0 0
        %2220 = vmatprep.subr.bf16.mxu0 0
        %2221 = vmatpush1.bf16.msra.mxu0 0
        %2222 = vmatprep.subr.bf16.mxu0 0
        %2223 = vmatpush1.bf16.msra.mxu0 0
        %2224 = vmatprep.subr.bf16.mxu0 0
        %2225 = vmatpush1.bf16.msra.mxu0 0
        %2226 = vmatprep.subr.bf16.mxu0 0
        %2227 = vmatpush1.bf16.msra.mxu0 0
        %2228 = vmatprep.subr.bf16.mxu0 0
        %2229 = vmatpush1.bf16.msra.mxu0 0
        %2230 = vmatprep.subr.bf16.mxu0 0
        %2231 = vmatpush1.bf16.msra.mxu0 0
        %2232 = vmatprep.subr.bf16.mxu0 0
        %2233 = vmatpush1.bf16.msra.mxu0 0
        %2234 = vmatprep.subr.bf16.mxu0 0
        %2235 = vmatpush1.bf16.msra.mxu0 0
        %2236 = vmatprep.subr.bf16.mxu0 0
        %2237 = vmatpush1.bf16.msra.mxu0 0
        %2238 = vmatprep.subr.bf16.mxu0 0
        %2239 = vmatpush1.bf16.msra.mxu0 0
        %2240 = vmatprep.subr.bf16.mxu0 0
        %2241 = vmatpush1.bf16.msra.mxu0 0
        %2242 = vmatprep.subr.bf16.mxu0 0
        %2243 = vmatpush1.bf16.msra.mxu0 0
        %2244 = vmatprep.subr.bf16.mxu0 0
        %2245 = vmatpush1.bf16.msra.mxu0 0
        %2246 = vmatprep.mubr.bf16.mxu0 0
        %2247 = vmatmul.mubr.bf16.gmra.mrb[0].mxu0 %v2209
        %v2248 = vpop.f32.mrb[0].mxu0
        %v2249 = vadd.f32 0.0, %v2248
        %v2250 = vpop.f32.mrb[0].mxu0
        %v2251 = vpop.f32.mrb[0].mxu0
        %v2252 = vpop.f32.mrb[0].mxu0
        %2253 = vdwg.mxu0
        %v2254 = vpack.c.bf16 %v2249, %v2249
        %2255 = vst.msk [vmem:[#allocation2] sm:$0xf] %vm1022, %v2254
        %2257 = vrot.lane.b32.xlu0 %v2147, 96
        %v2258 = vpop.permute.xlu0 %2257
        %2260 = vrot.lane.b32.xlu0 %v2148, 96
        %v2261 = vpop.permute.xlu0 %2260
        %v2263 = vsel %vm914, %v2258, 0
        %v2266 = vsel %vm914, %v2261, 0
        %2268 = vmatprep.subr.bf16.mxu0 0
        %2269 = vmatpush1.bf16.xpose.msra.mxu0 %v2266
        %2270 = vmatprep.subr.bf16.mxu0 0
        %2271 = vmatpush1.bf16.xpose.msra.mxu0 0
        %2272 = vmatprep.subr.bf16.mxu0 0
        %2273 = vmatpush1.bf16.xpose.msra.mxu0 0
        %2274 = vmatprep.subr.bf16.mxu0 0
        %2275 = vmatpush1.bf16.xpose.msra.mxu0 0
        %2276 = vmatprep.subr.bf16.mxu0 0
        %2277 = vmatpush1.bf16.xpose.msra.mxu0 0
        %2278 = vmatprep.subr.bf16.mxu0 0
        %2279 = vmatpush1.bf16.xpose.msra.mxu0 0
        %2280 = vmatprep.subr.bf16.mxu0 0
        %2281 = vmatpush1.bf16.xpose.msra.mxu0 0
        %2282 = vmatprep.subr.bf16.mxu0 0
        %2283 = vmatpush1.bf16.xpose.msra.mxu0 0
        %2284 = vmatprep.subr.bf16.mxu0 0
        %2285 = vmatpush1.bf16.xpose.msra.mxu0 0
        %2286 = vmatprep.subr.bf16.mxu0 0
        %2287 = vmatpush1.bf16.xpose.msra.mxu0 0
        %2288 = vmatprep.subr.bf16.mxu0 0
        %2289 = vmatpush1.bf16.xpose.msra.mxu0 0
        %2290 = vmatprep.subr.bf16.mxu0 0
        %2291 = vmatpush1.bf16.xpose.msra.mxu0 0
        %2292 = vmatprep.subr.bf16.mxu0 0
        %2293 = vmatpush1.bf16.xpose.msra.mxu0 0
        %2294 = vmatprep.subr.bf16.mxu0 0
        %2295 = vmatpush1.bf16.xpose.msra.mxu0 0
        %2296 = vmatprep.subr.bf16.mxu0 0
        %2297 = vmatpush1.bf16.xpose.msra.mxu0 0
        %2298 = vmatprep.subr.bf16.mxu0 0
        %2299 = vmatpush1.bf16.xpose.msra.mxu0 0
        %2300 = vmatprep.mubr.bf16.mxu0 0
        %2301 = vmatmul.mubr.bf16.gmra.mrb[0].mxu0 %v2263
        %v2302 = vpop.f32.mrb[0].mxu0
        %v2303 = vadd.f32 0.0, %v2302
        %v2304 = vpop.f32.mrb[0].mxu0
        %v2305 = vpop.f32.mrb[0].mxu0
        %v2306 = vpop.f32.mrb[0].mxu0
        %2307 = vdwg.mxu0
        %v2308 = vsel %vm961, %v2303, -inf
        %2309 = vmax.xlane.f32.xlu0 %v2308
        %v2310 = vpop.xlane.xlu0 %2309
        %v2311 = vsub.f32 %v2303, %v2310
        %v2312 = vmul.f32 %v2311, 1.442695
        %v2313 = vpow.pop %v2312
        %v2314 = vsel %vm961, %v2313, 0.0
        %2315 = vadd.xlane.f32.xlu0 %v2314
        %v2316 = vpop.xlane.xlu0 %2315
        %v2317 = vrcp.pop %v2316
        %v2318 = vmul.f32 %v2313, %v2317
        %v2319 = vpack.c.bf16 %v2318, %v2318
        %2321 = vrot.lane.b32.xlu0 %v2149, 96
        %v2322 = vpop.permute.xlu0 %2321
        %v2324 = vsel %vm961, %v2319, 0
        %v2327 = vsel %vm977, %v2322, 0
        %2329 = vmatprep.subr.bf16.mxu0 0
        %2330 = vmatpush1.bf16.msra.mxu0 %v2327
        %2331 = vmatprep.subr.bf16.mxu0 0
        %2332 = vmatpush1.bf16.msra.mxu0 0
        %2333 = vmatprep.subr.bf16.mxu0 0
        %2334 = vmatpush1.bf16.msra.mxu0 0
        %2335 = vmatprep.subr.bf16.mxu0 0
        %2336 = vmatpush1.bf16.msra.mxu0 0
        %2337 = vmatprep.subr.bf16.mxu0 0
        %2338 = vmatpush1.bf16.msra.mxu0 0
        %2339 = vmatprep.subr.bf16.mxu0 0
        %2340 = vmatpush1.bf16.msra.mxu0 0
        %2341 = vmatprep.subr.bf16.mxu0 0
        %2342 = vmatpush1.bf16.msra.mxu0 0
        %2343 = vmatprep.subr.bf16.mxu0 0
        %2344 = vmatpush1.bf16.msra.mxu0 0
        %2345 = vmatprep.subr.bf16.mxu0 0
        %2346 = vmatpush1.bf16.msra.mxu0 0
        %2347 = vmatprep.subr.bf16.mxu0 0
        %2348 = vmatpush1.bf16.msra.mxu0 0
        %2349 = vmatprep.subr.bf16.mxu0 0
        %2350 = vmatpush1.bf16.msra.mxu0 0
        %2351 = vmatprep.subr.bf16.mxu0 0
        %2352 = vmatpush1.bf16.msra.mxu0 0
        %2353 = vmatprep.subr.bf16.mxu0 0
        %2354 = vmatpush1.bf16.msra.mxu0 0
        %2355 = vmatprep.subr.bf16.mxu0 0
        %2356 = vmatpush1.bf16.msra.mxu0 0
        %2357 = vmatprep.subr.bf16.mxu0 0
        %2358 = vmatpush1.bf16.msra.mxu0 0
        %2359 = vmatprep.subr.bf16.mxu0 0
        %2360 = vmatpush1.bf16.msra.mxu0 0
        %2361 = vmatprep.mubr.bf16.mxu0 0
        %2362 = vmatmul.mubr.bf16.gmra.mrb[0].mxu0 %v2324
        %v2363 = vpop.f32.mrb[0].mxu0
        %v2364 = vadd.f32 0.0, %v2363
        %v2365 = vpop.f32.mrb[0].mxu0
        %v2366 = vpop.f32.mrb[0].mxu0
        %v2367 = vpop.f32.mrb[0].mxu0
        %2368 = vdwg.mxu0
        %v2369 = vpack.c.bf16 %v2364, %v2364
        %v2371 = vunpack.c.l.b16 %v2369
        %v2372 = vpack.c.b16 %v2371, %v2371
        %2373 = vrot.lane.b32.xlu0 %v2372, 32
        %v2374 = vpop.permute.xlu0 %2373
        %2376 = vst.msk [vmem:[#allocation2] sm:$0xf] %vm1144, %v2374
        %2377 = vrot.lane.b32.xlu0 %v2147, 64
        %v2378 = vpop.permute.xlu0 %2377
        %2379 = vrot.lane.b32.xlu0 %v2148, 64
        %v2380 = vpop.permute.xlu0 %2379
        %v2382 = vsel %vm914, %v2378, 0
        %v2385 = vsel %vm914, %v2380, 0
        %2387 = vmatprep.subr.bf16.mxu0 0
        %2388 = vmatpush1.bf16.xpose.msra.mxu0 %v2385
        %2389 = vmatprep.subr.bf16.mxu0 0
        %2390 = vmatpush1.bf16.xpose.msra.mxu0 0
        %2391 = vmatprep.subr.bf16.mxu0 0
        %2392 = vmatpush1.bf16.xpose.msra.mxu0 0
        %2393 = vmatprep.subr.bf16.mxu0 0
        %2394 = vmatpush1.bf16.xpose.msra.mxu0 0
        %2395 = vmatprep.subr.bf16.mxu0 0
        %2396 = vmatpush1.bf16.xpose.msra.mxu0 0
        %2397 = vmatprep.subr.bf16.mxu0 0
        %2398 = vmatpush1.bf16.xpose.msra.mxu0 0
        %2399 = vmatprep.subr.bf16.mxu0 0
        %2400 = vmatpush1.bf16.xpose.msra.mxu0 0
        %2401 = vmatprep.subr.bf16.mxu0 0
        %2402 = vmatpush1.bf16.xpose.msra.mxu0 0
        %2403 = vmatprep.subr.bf16.mxu0 0
        %2404 = vmatpush1.bf16.xpose.msra.mxu0 0
        %2405 = vmatprep.subr.bf16.mxu0 0
        %2406 = vmatpush1.bf16.xpose.msra.mxu0 0
        %2407 = vmatprep.subr.bf16.mxu0 0
        %2408 = vmatpush1.bf16.xpose.msra.mxu0 0
        %2409 = vmatprep.subr.bf16.mxu0 0
        %2410 = vmatpush1.bf16.xpose.msra.mxu0 0
        %2411 = vmatprep.subr.bf16.mxu0 0
        %2412 = vmatpush1.bf16.xpose.msra.mxu0 0
        %2413 = vmatprep.subr.bf16.mxu0 0
        %2414 = vmatpush1.bf16.xpose.msra.mxu0 0
        %2415 = vmatprep.subr.bf16.mxu0 0
        %2416 = vmatpush1.bf16.xpose.msra.mxu0 0
        %2417 = vmatprep.subr.bf16.mxu0 0
        %2418 = vmatpush1.bf16.xpose.msra.mxu0 0
        %2419 = vmatprep.mubr.bf16.mxu0 0
        %2420 = vmatmul.mubr.bf16.gmra.mrb[0].mxu0 %v2382
        %v2421 = vpop.f32.mrb[0].mxu0
        %v2422 = vadd.f32 0.0, %v2421
        %v2423 = vpop.f32.mrb[0].mxu0
        %v2424 = vpop.f32.mrb[0].mxu0
        %v2425 = vpop.f32.mrb[0].mxu0
        %2426 = vdwg.mxu0
        %v2427 = vsel %vm961, %v2422, -inf
        %2428 = vmax.xlane.f32.xlu0 %v2427
        %v2429 = vpop.xlane.xlu0 %2428
        %v2430 = vsub.f32 %v2422, %v2429
        %v2431 = vmul.f32 %v2430, 1.442695
        %v2432 = vpow.pop %v2431
        %v2433 = vsel %vm961, %v2432, 0.0
        %2434 = vadd.xlane.f32.xlu0 %v2433
        %v2435 = vpop.xlane.xlu0 %2434
        %v2436 = vrcp.pop %v2435
        %v2437 = vmul.f32 %v2432, %v2436
        %v2438 = vpack.c.bf16 %v2437, %v2437
        %2439 = vrot.lane.b32.xlu0 %v2149, 64
        %v2440 = vpop.permute.xlu0 %2439
        %v2442 = vsel %vm961, %v2438, 0
        %v2445 = vsel %vm977, %v2440, 0
        %2447 = vmatprep.subr.bf16.mxu0 0
        %2448 = vmatpush1.bf16.msra.mxu0 %v2445
        %2449 = vmatprep.subr.bf16.mxu0 0
        %2450 = vmatpush1.bf16.msra.mxu0 0
        %2451 = vmatprep.subr.bf16.mxu0 0
        %2452 = vmatpush1.bf16.msra.mxu0 0
        %2453 = vmatprep.subr.bf16.mxu0 0
        %2454 = vmatpush1.bf16.msra.mxu0 0
        %2455 = vmatprep.subr.bf16.mxu0 0
        %2456 = vmatpush1.bf16.msra.mxu0 0
        %2457 = vmatprep.subr.bf16.mxu0 0
        %2458 = vmatpush1.bf16.msra.mxu0 0
        %2459 = vmatprep.subr.bf16.mxu0 0
        %2460 = vmatpush1.bf16.msra.mxu0 0
        %2461 = vmatprep.subr.bf16.mxu0 0
        %2462 = vmatpush1.bf16.msra.mxu0 0
        %2463 = vmatprep.subr.bf16.mxu0 0
        %2464 = vmatpush1.bf16.msra.mxu0 0
        %2465 = vmatprep.subr.bf16.mxu0 0
        %2466 = vmatpush1.bf16.msra.mxu0 0
        %2467 = vmatprep.subr.bf16.mxu0 0
        %2468 = vmatpush1.bf16.msra.mxu0 0
        %2469 = vmatprep.subr.bf16.mxu0 0
        %2470 = vmatpush1.bf16.msra.mxu0 0
        %2471 = vmatprep.subr.bf16.mxu0 0
        %2472 = vmatpush1.bf16.msra.mxu0 0
        %2473 = vmatprep.subr.bf16.mxu0 0
        %2474 = vmatpush1.bf16.msra.mxu0 0
        %2475 = vmatprep.subr.bf16.mxu0 0
        %2476 = vmatpush1.bf16.msra.mxu0 0
        %2477 = vmatprep.subr.bf16.mxu0 0
        %2478 = vmatpush1.bf16.msra.mxu0 0
        %2479 = vmatprep.mubr.bf16.mxu0 0
        %2480 = vmatmul.mubr.bf16.gmra.mrb[0].mxu0 %v2442
        %v2481 = vpop.f32.mrb[0].mxu0
        %v2482 = vadd.f32 0.0, %v2481
        %v2483 = vpop.f32.mrb[0].mxu0
        %v2484 = vpop.f32.mrb[0].mxu0
        %v2485 = vpop.f32.mrb[0].mxu0
        %2486 = vdwg.mxu0
        %v2487 = vpack.c.bf16 %v2482, %v2482
        %v2489 = vunpack.c.l.b16 %v2487
        %v2490 = vpack.c.b16 %v2489, %v2489
        %2491 = vrot.lane.b32.xlu0 %v2490, 64
        %v2492 = vpop.permute.xlu0 %2491
        %2494 = vst.msk [vmem:[#allocation2] sm:$0xf] %vm1263, %v2492
        %2495 = vrot.lane.b32.xlu0 %v2147, 32
        %v2496 = vpop.permute.xlu0 %2495
        %2497 = vrot.lane.b32.xlu0 %v2148, 32
        %v2498 = vpop.permute.xlu0 %2497
        %v2500 = vsel %vm914, %v2496, 0
        %v2503 = vsel %vm914, %v2498, 0
        %2505 = vmatprep.subr.bf16.mxu0 0
        %2506 = vmatpush1.bf16.xpose.msra.mxu0 %v2503
        %2507 = vmatprep.subr.bf16.mxu0 0
        %2508 = vmatpush1.bf16.xpose.msra.mxu0 0
        %2509 = vmatprep.subr.bf16.mxu0 0
        %2510 = vmatpush1.bf16.xpose.msra.mxu0 0
        %2511 = vmatprep.subr.bf16.mxu0 0
        %2512 = vmatpush1.bf16.xpose.msra.mxu0 0
        %2513 = vmatprep.subr.bf16.mxu0 0
        %2514 = vmatpush1.bf16.xpose.msra.mxu0 0
        %2515 = vmatprep.subr.bf16.mxu0 0
        %2516 = vmatpush1.bf16.xpose.msra.mxu0 0
        %2517 = vmatprep.subr.bf16.mxu0 0
        %2518 = vmatpush1.bf16.xpose.msra.mxu0 0
        %2519 = vmatprep.subr.bf16.mxu0 0
        %2520 = vmatpush1.bf16.xpose.msra.mxu0 0
        %2521 = vmatprep.subr.bf16.mxu0 0
        %2522 = vmatpush1.bf16.xpose.msra.mxu0 0
        %2523 = vmatprep.subr.bf16.mxu0 0
        %2524 = vmatpush1.bf16.xpose.msra.mxu0 0
        %2525 = vmatprep.subr.bf16.mxu0 0
        %2526 = vmatpush1.bf16.xpose.msra.mxu0 0
        %2527 = vmatprep.subr.bf16.mxu0 0
        %2528 = vmatpush1.bf16.xpose.msra.mxu0 0
        %2529 = vmatprep.subr.bf16.mxu0 0
        %2530 = vmatpush1.bf16.xpose.msra.mxu0 0
        %2531 = vmatprep.subr.bf16.mxu0 0
        %2532 = vmatpush1.bf16.xpose.msra.mxu0 0
        %2533 = vmatprep.subr.bf16.mxu0 0
        %2534 = vmatpush1.bf16.xpose.msra.mxu0 0
        %2535 = vmatprep.subr.bf16.mxu0 0
        %2536 = vmatpush1.bf16.xpose.msra.mxu0 0
        %2537 = vmatprep.mubr.bf16.mxu0 0
        %2538 = vmatmul.mubr.bf16.gmra.mrb[0].mxu0 %v2500
        %v2539 = vpop.f32.mrb[0].mxu0
        %v2540 = vadd.f32 0.0, %v2539
        %v2541 = vpop.f32.mrb[0].mxu0
        %v2542 = vpop.f32.mrb[0].mxu0
        %v2543 = vpop.f32.mrb[0].mxu0
        %2544 = vdwg.mxu0
        %v2545 = vsel %vm961, %v2540, -inf
        %2546 = vmax.xlane.f32.xlu0 %v2545
        %v2547 = vpop.xlane.xlu0 %2546
        %v2548 = vsub.f32 %v2540, %v2547
        %v2549 = vmul.f32 %v2548, 1.442695
        %v2550 = vpow.pop %v2549
        %v2551 = vsel %vm961, %v2550, 0.0
        %2552 = vadd.xlane.f32.xlu0 %v2551
        %v2553 = vpop.xlane.xlu0 %2552
        %v2554 = vrcp.pop %v2553
        %v2555 = vmul.f32 %v2550, %v2554
        %v2556 = vpack.c.bf16 %v2555, %v2555
        %2557 = vrot.lane.b32.xlu0 %v2149, 32
        %v2558 = vpop.permute.xlu0 %2557
        %v2560 = vsel %vm961, %v2556, 0
        %v2563 = vsel %vm977, %v2558, 0
        %2565 = vmatprep.subr.bf16.mxu0 0
        %2566 = vmatpush1.bf16.msra.mxu0 %v2563
        %2567 = vmatprep.subr.bf16.mxu0 0
        %2568 = vmatpush1.bf16.msra.mxu0 0
        %2569 = vmatprep.subr.bf16.mxu0 0
        %2570 = vmatpush1.bf16.msra.mxu0 0
        %2571 = vmatprep.subr.bf16.mxu0 0
        %2572 = vmatpush1.bf16.msra.mxu0 0
        %2573 = vmatprep.subr.bf16.mxu0 0
        %2574 = vmatpush1.bf16.msra.mxu0 0
        %2575 = vmatprep.subr.bf16.mxu0 0
        %2576 = vmatpush1.bf16.msra.mxu0 0
        %2577 = vmatprep.subr.bf16.mxu0 0
        %2578 = vmatpush1.bf16.msra.mxu0 0
        %2579 = vmatprep.subr.bf16.mxu0 0
        %2580 = vmatpush1.bf16.msra.mxu0 0
        %2581 = vmatprep.subr.bf16.mxu0 0
        %2582 = vmatpush1.bf16.msra.mxu0 0
        %2583 = vmatprep.subr.bf16.mxu0 0
        %2584 = vmatpush1.bf16.msra.mxu0 0
        %2585 = vmatprep.subr.bf16.mxu0 0
        %2586 = vmatpush1.bf16.msra.mxu0 0
        %2587 = vmatprep.subr.bf16.mxu0 0
        %2588 = vmatpush1.bf16.msra.mxu0 0
        %2589 = vmatprep.subr.bf16.mxu0 0
        %2590 = vmatpush1.bf16.msra.mxu0 0
        %2591 = vmatprep.subr.bf16.mxu0 0
        %2592 = vmatpush1.bf16.msra.mxu0 0
        %2593 = vmatprep.subr.bf16.mxu0 0
        %2594 = vmatpush1.bf16.msra.mxu0 0
        %2595 = vmatprep.subr.bf16.mxu0 0
        %2596 = vmatpush1.bf16.msra.mxu0 0
        %2597 = vmatprep.mubr.bf16.mxu0 0
        %2598 = vmatmul.mubr.bf16.gmra.mrb[0].mxu0 %v2560
        %v2599 = vpop.f32.mrb[0].mxu0
        %v2600 = vadd.f32 0.0, %v2599
        %v2601 = vpop.f32.mrb[0].mxu0
        %v2602 = vpop.f32.mrb[0].mxu0
        %v2603 = vpop.f32.mrb[0].mxu0
        %2604 = vdwg.mxu0
        %v2605 = vpack.c.bf16 %v2600, %v2600
        %v2607 = vunpack.c.l.b16 %v2605
        %v2608 = vpack.c.b16 %v2607, %v2607
        %2609 = vrot.lane.b32.xlu0 %v2608, 96
        %v2610 = vpop.permute.xlu0 %2609
        %2612 = vst.msk [vmem:[#allocation2] sm:$0xf] %vm1382, %v2610
        %v2613 = vld [vmem:[#allocation2] sm:$0xf]
        %s2614 = scalar_lea.vmem [#allocation11], 64
        %v2615 = vld [vmem:[%s2614] sm:$0xf]
        %v2616 = vld [vmem:[%s2614 + $0x4] sm:$0xf]
        %v2617 = vld [vmem:[%s2614 + $0x8] sm:$0xf]
        %v2618 = vld [vmem:[%s2614 + $0xc] sm:$0xf]
        %v2619 = vld [vmem:[%s2614 + $0x10] sm:$0xf]
        %v2620 = vld [vmem:[%s2614 + $0x14] sm:$0xf]
        %v2621 = vld [vmem:[%s2614 + $0x18] sm:$0xf]
        %v2622 = vld [vmem:[%s2614 + $0x1c] sm:$0xf]
        %v2623 = vld [vmem:[%s2614 + $0x20] sm:$0xf]
        %v2624 = vld [vmem:[%s2614 + $0x24] sm:$0xf]
        %v2625 = vld [vmem:[%s2614 + $0x28] sm:$0xf]
        %v2626 = vld [vmem:[%s2614 + $0x2c] sm:$0xf]
        %v2627 = vld [vmem:[%s2614 + $0x30] sm:$0xf]
        %v2628 = vld [vmem:[%s2614 + $0x34] sm:$0xf]
        %v2629 = vld [vmem:[%s2614 + $0x38] sm:$0xf]
        %v2630 = vld [vmem:[%s2614 + $0x3c] sm:$0xf]
        %s2631 = scalar_lea.vmem %s7, 1
        %v2632 = vld [vmem:[%s2631] sm:$0x1]
        %v2634 = vlaneseq
        %v2635 = vshrl.u32 %v2634, 7
        %v2636 = vsub.s32 0, %v2635
        %v2637 = vrot.slane %v2632, %v2636
        %v2655 = vunpack.c.l.b16 %v2615
        %v2656 = vunpack.c.l.b16 %v2616
        %v2657 = vunpack.c.l.b16 %v2617
        %v2658 = vunpack.c.l.b16 %v2618
        %v2659 = vunpack.c.l.b16 %v2619
        %v2660 = vunpack.c.l.b16 %v2620
        %v2661 = vunpack.c.l.b16 %v2621
        %v2662 = vunpack.c.l.b16 %v2622
        %v2663 = vunpack.c.l.b16 %v2623
        %v2664 = vunpack.c.l.b16 %v2624
        %v2665 = vunpack.c.l.b16 %v2625
        %v2666 = vunpack.c.l.b16 %v2626
        %v2667 = vunpack.c.l.b16 %v2627
        %v2668 = vunpack.c.l.b16 %v2628
        %v2669 = vunpack.c.l.b16 %v2629
        %v2670 = vunpack.c.l.b16 %v2630
        %v2671 = vpack.c.b16 %v2656, %v2655
        %v2672 = vpack.c.b16 %v2658, %v2657
        %v2673 = vpack.c.b16 %v2660, %v2659
        %v2674 = vpack.c.b16 %v2662, %v2661
        %v2675 = vpack.c.b16 %v2664, %v2663
        %v2676 = vpack.c.b16 %v2666, %v2665
        %v2677 = vpack.c.b16 %v2668, %v2667
        %v2678 = vpack.c.b16 %v2670, %v2669
        %2687 = vmatprep.subr.bf16.mxu0 0
        %2688 = vmatpush1.bf16.msra.mxu0 %v2671
        %2689 = vmatprep.subr.bf16.mxu0 0
        %2690 = vmatpush1.bf16.msra.mxu0 %v2672
        %2691 = vmatprep.subr.bf16.mxu0 0
        %2692 = vmatpush1.bf16.msra.mxu0 %v2673
        %2693 = vmatprep.subr.bf16.mxu0 0
        %2694 = vmatpush1.bf16.msra.mxu0 %v2674
        %2695 = vmatprep.subr.bf16.mxu0 0
        %2696 = vmatpush1.bf16.msra.mxu0 %v2675
        %2697 = vmatprep.subr.bf16.mxu0 0
        %2698 = vmatpush1.bf16.msra.mxu0 %v2676
        %2699 = vmatprep.subr.bf16.mxu0 0
        %2700 = vmatpush1.bf16.msra.mxu0 %v2677
        %2701 = vmatprep.subr.bf16.mxu0 0
        %2702 = vmatpush1.bf16.msra.mxu0 %v2678
        %2703 = vmatprep.subr.bf16.mxu0 0
        %2704 = vmatpush1.bf16.msra.mxu0 0
        %2705 = vmatprep.subr.bf16.mxu0 0
        %2706 = vmatpush1.bf16.msra.mxu0 0
        %2707 = vmatprep.subr.bf16.mxu0 0
        %2708 = vmatpush1.bf16.msra.mxu0 0
        %2709 = vmatprep.subr.bf16.mxu0 0
        %2710 = vmatpush1.bf16.msra.mxu0 0
        %2711 = vmatprep.subr.bf16.mxu0 0
        %2712 = vmatpush1.bf16.msra.mxu0 0
        %2713 = vmatprep.subr.bf16.mxu0 0
        %2714 = vmatpush1.bf16.msra.mxu0 0
        %2715 = vmatprep.subr.bf16.mxu0 0
        %2716 = vmatpush1.bf16.msra.mxu0 0
        %2717 = vmatprep.subr.bf16.mxu0 0
        %2718 = vmatpush1.bf16.msra.mxu0 0
        %2719 = vmatprep.mubr.bf16.mxu0 0
        %2720 = vmatmul.mubr.bf16.gmra.mrb[0].mxu0 %v2613
        %v2721 = vpop.f32.mrb[0].mxu0
        %v2722 = vadd.f32 %v2637, %v2721
        %v2723 = vpop.f32.mrb[0].mxu0
        %v2724 = vpop.f32.mrb[0].mxu0
        %v2725 = vpop.f32.mrb[0].mxu0
        %2726 = vdwg.mxu0
        %v2727 = vadd.f32 %v1881, %v2722
        %s2728 = scalar_lea.vmem %s8, 1
        %v2729 = vld [vmem:[%s2728] sm:$0x1]
        %s2730 = scalar_lea.vmem %s9, 1
        %v2731 = vld [vmem:[%s2730] sm:$0x1]
        %2732 = vadd.xlane.f32.xlu0 %v2727
        %v2733 = vpop.xlane.xlu0 %2732
        %v2734 = vmul.f32 %v2733, %v1501
        %v2735 = vsub.f32 %v2727, %v2734
        %v2736 = vmul.f32 %v2735, %v2735
        %2737 = vadd.xlane.f32.xlu0 %v2736
        %v2738 = vpop.xlane.xlu0 %2737
        %v2739 = vmul.f32 %v2738, %v1501
        %v2740 = vadd.f32 %v2739, 1e-05
        %v2741 = vrsqrt.pop %v2740
        %v2742 = vmul.f32 %v2735, %v2741
        %v2744 = vlaneseq
        %v2745 = vshrl.u32 %v2744, 7
        %v2746 = vsub.s32 0, %v2745
        %v2747 = vrot.slane %v2729, %v2746
        %v2749 = vmul.f32 %v2742, %v2747
        %v2751 = vlaneseq
        %v2752 = vshrl.u32 %v2751, 7
        %v2753 = vsub.s32 0, %v2752
        %v2754 = vrot.slane %v2731, %v2753
        %v2756 = vadd.f32 %v2749, %v2754
        %v2757 = vpack.c.bf16 %v2756, %v2756
        %s2758 = scalar_lea.vmem [#allocation12], 128
        %v2759 = vld [vmem:[%s2758] sm:$0xff]
        %v2760 = vld [vmem:[%s2758 + $0x8] sm:$0xff]
        %v2761 = vld [vmem:[%s2758 + $0x10] sm:$0xff]
        %v2762 = vld [vmem:[%s2758 + $0x18] sm:$0xff]
        %v2763 = vld [vmem:[%s2758 + $0x20] sm:$0xff]
        %v2764 = vld [vmem:[%s2758 + $0x28] sm:$0xff]
        %v2765 = vld [vmem:[%s2758 + $0x30] sm:$0xff]
        %v2766 = vld [vmem:[%s2758 + $0x38] sm:$0xff]
        %v2767 = vld [vmem:[%s2758 + $0x40] sm:$0xff]
        %v2768 = vld [vmem:[%s2758 + $0x48] sm:$0xff]
        %v2769 = vld [vmem:[%s2758 + $0x50] sm:$0xff]
        %v2770 = vld [vmem:[%s2758 + $0x58] sm:$0xff]
        %v2771 = vld [vmem:[%s2758 + $0x60] sm:$0xff]
        %v2772 = vld [vmem:[%s2758 + $0x68] sm:$0xff]
        %v2773 = vld [vmem:[%s2758 + $0x70] sm:$0xff]
        %v2774 = vld [vmem:[%s2758 + $0x78] sm:$0xff]
        %s2775 = scalar_lea.vmem %s11, 2
        %v2776 = vld [vmem:[%s2775] sm:$0x3]
        %v2778 = vlaneseq
        %v2779 = vshrl.u32 %v2778, 7
        %v2780 = vsub.s32 0, %v2779
        %v2781 = vrot.slane %v2776, %v2780
        %v2782 = vlaneseq
        %v2783 = vshrl.u32 %v2782, 7
        %v2784 = vsub.s32 1, %v2783
        %v2785 = vrot.slane %v2776, %v2784
        %v2804 = vunpack.c.l.b16 %v2759
        %v2805 = vunpack.c.h.b16 %v2759
        %v2806 = vunpack.c.l.b16 %v2760
        %v2807 = vunpack.c.h.b16 %v2760
        %v2808 = vunpack.c.l.b16 %v2761
        %v2809 = vunpack.c.h.b16 %v2761
        %v2810 = vunpack.c.l.b16 %v2762
        %v2811 = vunpack.c.h.b16 %v2762
        %v2812 = vunpack.c.l.b16 %v2763
        %v2813 = vunpack.c.h.b16 %v2763
        %v2814 = vunpack.c.l.b16 %v2764
        %v2815 = vunpack.c.h.b16 %v2764
        %v2816 = vunpack.c.l.b16 %v2765
        %v2817 = vunpack.c.h.b16 %v2765
        %v2818 = vunpack.c.l.b16 %v2766
        %v2819 = vunpack.c.h.b16 %v2766
        %v2820 = vunpack.c.l.b16 %v2767
        %v2821 = vunpack.c.h.b16 %v2767
        %v2822 = vunpack.c.l.b16 %v2768
        %v2823 = vunpack.c.h.b16 %v2768
        %v2824 = vunpack.c.l.b16 %v2769
        %v2825 = vunpack.c.h.b16 %v2769
        %v2826 = vunpack.c.l.b16 %v2770
        %v2827 = vunpack.c.h.b16 %v2770
        %v2828 = vunpack.c.l.b16 %v2771
        %v2829 = vunpack.c.h.b16 %v2771
        %v2830 = vunpack.c.l.b16 %v2772
        %v2831 = vunpack.c.h.b16 %v2772
        %v2832 = vunpack.c.l.b16 %v2773
        %v2833 = vunpack.c.h.b16 %v2773
        %v2834 = vunpack.c.l.b16 %v2774
        %v2835 = vunpack.c.h.b16 %v2774
        %v2836 = vpack.c.b16 %v2806, %v2804
        %v2837 = vpack.c.b16 %v2807, %v2805
        %v2838 = vpack.c.b16 %v2810, %v2808
        %v2839 = vpack.c.b16 %v2811, %v2809
        %v2840 = vpack.c.b16 %v2814, %v2812
        %v2841 = vpack.c.b16 %v2815, %v2813
        %v2842 = vpack.c.b16 %v2818, %v2816
        %v2843 = vpack.c.b16 %v2819, %v2817
        %v2844 = vpack.c.b16 %v2822, %v2820
        %v2845 = vpack.c.b16 %v2823, %v2821
        %v2846 = vpack.c.b16 %v2826, %v2824
        %v2847 = vpack.c.b16 %v2827, %v2825
        %v2848 = vpack.c.b16 %v2830, %v2828
        %v2849 = vpack.c.b16 %v2831, %v2829
        %v2850 = vpack.c.b16 %v2834, %v2832
        %v2851 = vpack.c.b16 %v2835, %v2833
        %2868 = vmatprep.subr.bf16.mxu0 %v2837
        %2869 = vmatpush1.bf16.msra.mxu0 %v2836
        %2870 = vmatprep.subr.bf16.mxu0 %v2839
        %2871 = vmatpush1.bf16.msra.mxu0 %v2838
        %2872 = vmatprep.subr.bf16.mxu0 %v2841
        %2873 = vmatpush1.bf16.msra.mxu0 %v2840
        %2874 = vmatprep.subr.bf16.mxu0 %v2843
        %2875 = vmatpush1.bf16.msra.mxu0 %v2842
        %2876 = vmatprep.subr.bf16.mxu0 %v2845
        %2877 = vmatpush1.bf16.msra.mxu0 %v2844
        %2878 = vmatprep.subr.bf16.mxu0 %v2847
        %2879 = vmatpush1.bf16.msra.mxu0 %v2846
        %2880 = vmatprep.subr.bf16.mxu0 %v2849
        %2881 = vmatpush1.bf16.msra.mxu0 %v2848
        %2882 = vmatprep.subr.bf16.mxu0 %v2851
        %2883 = vmatpush1.bf16.msra.mxu0 %v2850
        %2884 = vmatprep.subr.bf16.mxu0 0
        %2885 = vmatpush1.bf16.msra.mxu0 0
        %2886 = vmatprep.subr.bf16.mxu0 0
        %2887 = vmatpush1.bf16.msra.mxu0 0
        %2888 = vmatprep.subr.bf16.mxu0 0
        %2889 = vmatpush1.bf16.msra.mxu0 0
        %2890 = vmatprep.subr.bf16.mxu0 0
        %2891 = vmatpush1.bf16.msra.mxu0 0
        %2892 = vmatprep.subr.bf16.mxu0 0
        %2893 = vmatpush1.bf16.msra.mxu0 0
        %2894 = vmatprep.subr.bf16.mxu0 0
        %2895 = vmatpush1.bf16.msra.mxu0 0
        %2896 = vmatprep.subr.bf16.mxu0 0
        %2897 = vmatpush1.bf16.msra.mxu0 0
        %2898 = vmatprep.subr.bf16.mxu0 0
        %2899 = vmatpush1.bf16.msra.mxu0 0
        %2900 = vmatprep.mubr.bf16.mxu0 0
        %2901 = vmatmul.mubr.bf16.gmra.mrb[0].mxu0 %v2757
        %v2902 = vpop.f32.mrb[0].mxu0
        %v2903 = vadd.f32 %v2781, %v2902
        %v2904 = vpop.f32.mrb[0].mxu0
        %v2905 = vadd.f32 %v2785, %v2904
        %v2906 = vpop.f32.mrb[0].mxu0
        %v2907 = vpop.f32.mrb[0].mxu0
        %2908 = vdwg.mxu0
        %v2909 = vmax.f32 %v2903, 0.0
        %v2910 = vmax.f32 %v2905, 0.0
        %v2911 = vpack.c.bf16 %v2909, %v2909
        %v2912 = vpack.c.bf16 %v2910, %v2910
        %s2913 = scalar_lea.vmem [#allocation14], 128
        %v2914 = vld [vmem:[%s2913] sm:$0xf]
        %v2915 = vld [vmem:[%s2913 + $0x4] sm:$0xf]
        %v2916 = vld [vmem:[%s2913 + $0x8] sm:$0xf]
        %v2917 = vld [vmem:[%s2913 + $0xc] sm:$0xf]
        %v2918 = vld [vmem:[%s2913 + $0x10] sm:$0xf]
        %v2919 = vld [vmem:[%s2913 + $0x14] sm:$0xf]
        %v2920 = vld [vmem:[%s2913 + $0x18] sm:$0xf]
        %v2921 = vld [vmem:[%s2913 + $0x1c] sm:$0xf]
        %v2922 = vld [vmem:[%s2913 + $0x20] sm:$0xf]
        %v2923 = vld [vmem:[%s2913 + $0x24] sm:$0xf]
        %v2924 = vld [vmem:[%s2913 + $0x28] sm:$0xf]
        %v2925 = vld [vmem:[%s2913 + $0x2c] sm:$0xf]
        %v2926 = vld [vmem:[%s2913 + $0x30] sm:$0xf]
        %v2927 = vld [vmem:[%s2913 + $0x34] sm:$0xf]
        %v2928 = vld [vmem:[%s2913 + $0x38] sm:$0xf]
        %v2929 = vld [vmem:[%s2913 + $0x3c] sm:$0xf]
        %v2930 = vld [vmem:[%s2913 + $0x40] sm:$0xf]
        %v2931 = vld [vmem:[%s2913 + $0x44] sm:$0xf]
        %v2932 = vld [vmem:[%s2913 + $0x48] sm:$0xf]
        %v2933 = vld [vmem:[%s2913 + $0x4c] sm:$0xf]
        %v2934 = vld [vmem:[%s2913 + $0x50] sm:$0xf]
        %v2935 = vld [vmem:[%s2913 + $0x54] sm:$0xf]
        %v2936 = vld [vmem:[%s2913 + $0x58] sm:$0xf]
        %v2937 = vld [vmem:[%s2913 + $0x5c] sm:$0xf]
        %v2938 = vld [vmem:[%s2913 + $0x60] sm:$0xf]
        %v2939 = vld [vmem:[%s2913 + $0x64] sm:$0xf]
        %v2940 = vld [vmem:[%s2913 + $0x68] sm:$0xf]
        %v2941 = vld [vmem:[%s2913 + $0x6c] sm:$0xf]
        %v2942 = vld [vmem:[%s2913 + $0x70] sm:$0xf]
        %v2943 = vld [vmem:[%s2913 + $0x74] sm:$0xf]
        %v2944 = vld [vmem:[%s2913 + $0x78] sm:$0xf]
        %v2945 = vld [vmem:[%s2913 + $0x7c] sm:$0xf]
        %s2946 = scalar_lea.vmem %s13, 1
        %v2947 = vld [vmem:[%s2946] sm:$0x1]
        %v2949 = vlaneseq
        %v2950 = vshrl.u32 %v2949, 7
        %v2951 = vsub.s32 0, %v2950
        %v2952 = vrot.slane %v2947, %v2951
        %v2986 = vunpack.c.l.b16 %v2914
        %v2987 = vunpack.c.l.b16 %v2915
        %v2988 = vunpack.c.l.b16 %v2916
        %v2989 = vunpack.c.l.b16 %v2917
        %v2990 = vunpack.c.l.b16 %v2918
        %v2991 = vunpack.c.l.b16 %v2919
        %v2992 = vunpack.c.l.b16 %v2920
        %v2993 = vunpack.c.l.b16 %v2921
        %v2994 = vunpack.c.l.b16 %v2922
        %v2995 = vunpack.c.l.b16 %v2923
        %v2996 = vunpack.c.l.b16 %v2924
        %v2997 = vunpack.c.l.b16 %v2925
        %v2998 = vunpack.c.l.b16 %v2926
        %v2999 = vunpack.c.l.b16 %v2927
        %v3000 = vunpack.c.l.b16 %v2928
        %v3001 = vunpack.c.l.b16 %v2929
        %v3002 = vunpack.c.l.b16 %v2930
        %v3003 = vunpack.c.l.b16 %v2931
        %v3004 = vunpack.c.l.b16 %v2932
        %v3005 = vunpack.c.l.b16 %v2933
        %v3006 = vunpack.c.l.b16 %v2934
        %v3007 = vunpack.c.l.b16 %v2935
        %v3008 = vunpack.c.l.b16 %v2936
        %v3009 = vunpack.c.l.b16 %v2937
        %v3010 = vunpack.c.l.b16 %v2938
        %v3011 = vunpack.c.l.b16 %v2939
        %v3012 = vunpack.c.l.b16 %v2940
        %v3013 = vunpack.c.l.b16 %v2941
        %v3014 = vunpack.c.l.b16 %v2942
        %v3015 = vunpack.c.l.b16 %v2943
        %v3016 = vunpack.c.l.b16 %v2944
        %v3017 = vunpack.c.l.b16 %v2945
        %v3018 = vpack.c.b16 %v2987, %v2986
        %v3019 = vpack.c.b16 %v2989, %v2988
        %v3020 = vpack.c.b16 %v2991, %v2990
        %v3021 = vpack.c.b16 %v2993, %v2992
        %v3022 = vpack.c.b16 %v2995, %v2994
        %v3023 = vpack.c.b16 %v2997, %v2996
        %v3024 = vpack.c.b16 %v2999, %v2998
        %v3025 = vpack.c.b16 %v3001, %v3000
        %v3026 = vpack.c.b16 %v3003, %v3002
        %v3027 = vpack.c.b16 %v3005, %v3004
        %v3028 = vpack.c.b16 %v3007, %v3006
        %v3029 = vpack.c.b16 %v3009, %v3008
        %v3030 = vpack.c.b16 %v3011, %v3010
        %v3031 = vpack.c.b16 %v3013, %v3012
        %v3032 = vpack.c.b16 %v3015, %v3014
        %v3033 = vpack.c.b16 %v3017, %v3016
        %3050 = vmatprep.subr.bf16.mxu0 0
        %3051 = vmatpush1.bf16.msra.mxu0 %v3018
        %3052 = vmatprep.subr.bf16.mxu0 0
        %3053 = vmatpush1.bf16.msra.mxu0 %v3019
        %3054 = vmatprep.subr.bf16.mxu0 0
        %3055 = vmatpush1.bf16.msra.mxu0 %v3020
        %3056 = vmatprep.subr.bf16.mxu0 0
        %3057 = vmatpush1.bf16.msra.mxu0 %v3021
        %3058 = vmatprep.subr.bf16.mxu0 0
        %3059 = vmatpush1.bf16.msra.mxu0 %v3022
        %3060 = vmatprep.subr.bf16.mxu0 0
        %3061 = vmatpush1.bf16.msra.mxu0 %v3023
        %3062 = vmatprep.subr.bf16.mxu0 0
        %3063 = vmatpush1.bf16.msra.mxu0 %v3024
        %3064 = vmatprep.subr.bf16.mxu0 0
        %3065 = vmatpush1.bf16.msra.mxu0 %v3025
        %3066 = vmatprep.subr.bf16.mxu0 0
        %3067 = vmatpush1.bf16.msra.mxu0 %v3026
        %3068 = vmatprep.subr.bf16.mxu0 0
        %3069 = vmatpush1.bf16.msra.mxu0 %v3027
        %3070 = vmatprep.subr.bf16.mxu0 0
        %3071 = vmatpush1.bf16.msra.mxu0 %v3028
        %3072 = vmatprep.subr.bf16.mxu0 0
        %3073 = vmatpush1.bf16.msra.mxu0 %v3029
        %3074 = vmatprep.subr.bf16.mxu0 0
        %3075 = vmatpush1.bf16.msra.mxu0 %v3030
        %3076 = vmatprep.subr.bf16.mxu0 0
        %3077 = vmatpush1.bf16.msra.mxu0 %v3031
        %3078 = vmatprep.subr.bf16.mxu0 0
        %3079 = vmatpush1.bf16.msra.mxu0 %v3032
        %3080 = vmatprep.subr.bf16.mxu0 0
        %3081 = vmatpush1.bf16.msra.mxu0 %v3033
        %3082 = vmatprep.mubr.bf16.mxu0 %v2912
        %3083 = vmatmul.mubr.bf16.gmra.mrb[0].mxu0 %v2911
        %v3084 = vpop.f32.mrb[0].mxu0
        %v3085 = vadd.f32 %v2952, %v3084
        %v3086 = vpop.f32.mrb[0].mxu0
        %v3087 = vpop.f32.mrb[0].mxu0
        %v3088 = vpop.f32.mrb[0].mxu0
        %3089 = vdwg.mxu0
        %v3090 = vadd.f32 %v2756, %v3085
        %s3091 = scalar_lea.vmem %s14, 1
        %v3092 = vld [vmem:[%s3091] sm:$0x1]
        %s3093 = scalar_lea.vmem %s15, 1
        %v3094 = vld [vmem:[%s3093] sm:$0x1]
        %3095 = vadd.xlane.f32.xlu0 %v3090
        %v3096 = vpop.xlane.xlu0 %3095
        %v3097 = vmul.f32 %v3096, %v1501
        %v3098 = vsub.f32 %v3090, %v3097
        %v3099 = vmul.f32 %v3098, %v3098
        %3100 = vadd.xlane.f32.xlu0 %v3099
        %v3101 = vpop.xlane.xlu0 %3100
        %v3102 = vmul.f32 %v3101, %v1501
        %v3103 = vadd.f32 %v3102, 1e-05
        %v3104 = vrsqrt.pop %v3103
        %v3105 = vmul.f32 %v3098, %v3104
        %v3107 = vlaneseq
        %v3108 = vshrl.u32 %v3107, 7
        %v3109 = vsub.s32 0, %v3108
        %v3110 = vrot.slane %v3092, %v3109
        %v3112 = vmul.f32 %v3105, %v3110
        %v3114 = vlaneseq
        %v3115 = vshrl.u32 %v3114, 7
        %v3116 = vsub.s32 0, %v3115
        %v3117 = vrot.slane %v3094, %v3116
        %v3119 = vadd.f32 %v3112, %v3117
        %3120 = vst [vmem:[%s645] sm:$0xff] %v3119
        %s3121 = sand.u32 %s392, 1
        %s3122 = scalar_lea.sflag [#allocation5], %s3121
        %s3123 = sand.u32 %s392, 1
        %s3124 = smul.addr %s3123, 8
        %s3125 = scalar_lea.vmem [#allocation15], %s3124
        // Predicated region
        $region113: #{tpu_custom_call.1} parent=83 // pred_check
          %p3126 = pneg %p402
        $region114: #{tpu_custom_call.1} parent=83 // pred_check_branch
          %3128 = sbr.rel (%p3126) target = $region116
        $region115: #{tpu_custom_call.1} parent=83 // pred_region
          %s3130 = ssub.s32 128, 128
          %3131 = vsyncadd %s3122, %s3130
          %s3132 = smul.addr %s38, 128
          %s3133 = scalar_lea.hbm %s16, %s3132
          %s3135 = sshll.u32 %s3125, 4
          %s3136 = int_to_ptr.vmem [resolvable:$true] %s3135
          %3138 = dma.vmem_to_hbm [thread:$0]  %s3136, 128, %s3133, %s3122
        $region116: #{tpu_custom_call.1} parent=83 // pred_fallthru
          _
      $region84: #{tpu_custom_call.1} parent=5 // pred_fallthru
        _
      %p3139 = scmp.le.s32.totalorder 2, %s33
      // Predicated region
      $region117: #{tpu_custom_call.1} parent=5 // pred_check
        %p3140 = pneg %p3139
      $region118: #{tpu_custom_call.1} parent=5 // pred_check_branch
        %3142 = sbr.rel (%p3140) target = $region120
      $region119: #{tpu_custom_call.1} parent=5 // pred_region
        %s3143 = ssub.s32 %s33, 2
        // Predicated region
        $region121: #{tpu_custom_call.1} parent=119 // pred_check
          %p3144 = pneg %p408
        $region122: #{tpu_custom_call.1} parent=119 // pred_check_branch
          %3146 = sbr.rel (%p3144) target = $region124
        $region123: #{tpu_custom_call.1} parent=119 // pred_region
          %s3147 = sand.u32 %s393, 1
          %s3148 = scalar_lea.sflag [#allocation5], %s3147
          %s3149 = sand.u32 %s393, 1
          %s3150 = smul.addr %s3149, 8
          %s3151 = scalar_lea.vmem [#allocation15], %s3150
          %3152 = dma.done %s3148, 128
        $region124: #{tpu_custom_call.1} parent=119 // pred_fallthru
          _
      $region120: #{tpu_custom_call.1} parent=5 // pred_fallthru
        _
    $region6: #{tpu_custom_call.1} parent=1 // loop_footer
      %s37 = sadd.s32 1, %s33
    $region7: #{tpu_custom_call.1} parent=1 // loop_footer_branch
      %32 = sbr.rel target = $region3
    $region8: #{tpu_custom_call.1} parent=1 // loop_exit
      _
    %3153 = vsyncpa [#allocation4], 1
    %s3154 = scalar_lea.sflag [#allocation4], 1
    %3155 = vsyncpa %s3154, 1
    %3156 = vsyncpa [#allocation7], 1
    %s3157 = scalar_lea.sflag [#allocation7], 1
    %3158 = vsyncpa %s3157, 1
    %3159 = vsyncpa [#allocation10], 1
    %3160 = vsyncpa [#allocation13], 1
    %3161 = vsyncpa [#allocation5], 1
    %s3162 = scalar_lea.sflag [#allocation5], 1
    %3163 = vsyncpa %s3162, 1

</llo_original>
